<compile_context>
chip_gen: v6e
topology: v6e:2x2x1
jax: 0.10.0
libtpu: 0.0.40
codegen_flags: <defaults>
</compile_context>

<pallas_src>
import math
import functools

import jax
import jax.numpy as jnp
from jax.experimental import pallas as pl
from jax.experimental.pallas import tpu as pltpu


# ----------------------------------------------------------------------------
# Pallas kernels
# ----------------------------------------------------------------------------

def _linear_kernel(x_ref, w_ref, b_ref, o_ref):
    # x: (TM, Din) f32, w: (Din, Dout) bf16, b: (1, Dout) f32
    o_ref[...] = (
        jnp.dot(x_ref[...].astype(jnp.bfloat16), w_ref[...],
                preferred_element_type=jnp.float32)
        + b_ref[...]
    )


def linear(x2d, w, b):
    M, Din = x2d.shape
    Dout = w.shape[1]
    TM = min(M, 256)
    return pl.pallas_call(
        _linear_kernel,
        out_shape=jax.ShapeDtypeStruct((M, Dout), jnp.float32),
        grid=(pl.cdiv(M, TM),),
        in_specs=[
            pl.BlockSpec((TM, Din), lambda i: (i, 0)),
            pl.BlockSpec((Din, Dout), lambda i: (0, 0)),
            pl.BlockSpec((1, Dout), lambda i: (0, 0)),
        ],
        out_specs=pl.BlockSpec((TM, Dout), lambda i: (i, 0)),
        compiler_params=pltpu.CompilerParams(dimension_semantics=("parallel",)),
    )(x2d, w, b)


def _cross_qkv_kernel(kq_ref, vin_ref, wqk_ref, bqk_ref, wv_ref, bv_ref, o_ref):
    # Fused projections for cross-attention: Q,K from one stream, V from the other.
    qk = jnp.dot(kq_ref[...].astype(jnp.bfloat16), wqk_ref[...],
                 preferred_element_type=jnp.float32) + bqk_ref[...]
    v = jnp.dot(vin_ref[...].astype(jnp.bfloat16), wv_ref[...],
                preferred_element_type=jnp.float32) + bv_ref[...]
    o_ref[...] = jnp.concatenate([qk, v], axis=-1)           # (TM, 3E) = [q | k | v]


def cross_qkv_proj(kq2d, v2d, w_qk, b_qk, w_v, b_v):
    M, E = kq2d.shape
    TM = min(M, 256)
    return pl.pallas_call(
        _cross_qkv_kernel,
        out_shape=jax.ShapeDtypeStruct((M, 3 * E), jnp.float32),
        grid=(pl.cdiv(M, TM),),
        in_specs=[
            pl.BlockSpec((TM, E), lambda i: (i, 0)),
            pl.BlockSpec((TM, E), lambda i: (i, 0)),
            pl.BlockSpec((E, 2 * E), lambda i: (0, 0)),
            pl.BlockSpec((1, 2 * E), lambda i: (0, 0)),
            pl.BlockSpec((E, E), lambda i: (0, 0)),
            pl.BlockSpec((1, E), lambda i: (0, 0)),
        ],
        out_specs=pl.BlockSpec((TM, 3 * E), lambda i: (i, 0)),
        compiler_params=pltpu.CompilerParams(dimension_semantics=("parallel",)),
    )(kq2d, v2d, w_qk, b_qk, w_v, b_v)


def _proj_add_ln_kernel(x_ref, w_ref, b_ref, r_ref, g_ref, bb_ref, o_ref):
    # y = LayerNorm( residual + (x @ Wo + bo) ), eps = 1e-5 (nn.LayerNorm default)
    y = jnp.dot(x_ref[...].astype(jnp.bfloat16), w_ref[...],
                preferred_element_type=jnp.float32) + b_ref[...]
    y = y + r_ref[...]
    mean = jnp.mean(y, axis=-1, keepdims=True)
    var = jnp.mean((y - mean) ** 2, axis=-1, keepdims=True)
    yn = (y - mean) * jax.lax.rsqrt(var + 1e-5)
    o_ref[...] = yn * g_ref[...] + bb_ref[...]


def proj_add_ln(x2d, r2d, w, b, gamma, beta):
    M, E = x2d.shape
    TM = min(M, 256)
    return pl.pallas_call(
        _proj_add_ln_kernel,
        out_shape=jax.ShapeDtypeStruct((M, E), jnp.float32),
        grid=(pl.cdiv(M, TM),),
        in_specs=[
            pl.BlockSpec((TM, E), lambda i: (i, 0)),
            pl.BlockSpec((E, E), lambda i: (0, 0)),
            pl.BlockSpec((1, E), lambda i: (0, 0)),
            pl.BlockSpec((TM, E), lambda i: (i, 0)),
            pl.BlockSpec((1, E), lambda i: (0, 0)),
            pl.BlockSpec((1, E), lambda i: (0, 0)),
        ],
        out_specs=pl.BlockSpec((TM, E), lambda i: (i, 0)),
        compiler_params=pltpu.CompilerParams(dimension_semantics=("parallel",)),
    )(x2d, w, b, r2d, gamma, beta)


def _ffn_add_ln_kernel(x_ref, w1_ref, b1_ref, w2_ref, b2_ref, g_ref, bb_ref, o_ref):
    # y = LayerNorm( x + W2 @ relu(W1 @ x + b1) + b2 )
    x = x_ref[...]
    h = jnp.dot(x.astype(jnp.bfloat16), w1_ref[...],
                preferred_element_type=jnp.float32) + b1_ref[...]
    h = jnp.maximum(h, 0.0)
    f = jnp.dot(h.astype(jnp.bfloat16), w2_ref[...],
                preferred_element_type=jnp.float32) + b2_ref[...]
    y = x + f
    mean = jnp.mean(y, axis=-1, keepdims=True)
    var = jnp.mean((y - mean) ** 2, axis=-1, keepdims=True)
    yn = (y - mean) * jax.lax.rsqrt(var + 1e-5)
    o_ref[...] = yn * g_ref[...] + bb_ref[...]


def ffn_add_ln(x2d, w1, b1, w2, b2, gamma, beta):
    M, E = x2d.shape
    Fp = w1.shape[1]
    TM = min(M, 256)
    return pl.pallas_call(
        _ffn_add_ln_kernel,
        out_shape=jax.ShapeDtypeStruct((M, E), jnp.float32),
        grid=(pl.cdiv(M, TM),),
        in_specs=[
            pl.BlockSpec((TM, E), lambda i: (i, 0)),
            pl.BlockSpec((E, Fp), lambda i: (0, 0)),
            pl.BlockSpec((1, Fp), lambda i: (0, 0)),
            pl.BlockSpec((Fp, E), lambda i: (0, 0)),
            pl.BlockSpec((1, E), lambda i: (0, 0)),
            pl.BlockSpec((1, E), lambda i: (0, 0)),
            pl.BlockSpec((1, E), lambda i: (0, 0)),
        ],
        out_specs=pl.BlockSpec((TM, E), lambda i: (i, 0)),
        compiler_params=pltpu.CompilerParams(dimension_semantics=("parallel",)),
    )(x2d, w1, b1, w2, b2, gamma, beta)


def _attn_kernel(q_ref, k_ref, v_ref, km_ref, o_ref, *, scale, causal):
    # Per batch: q/k/v blocks are (1, H, S, Dh); key mask block is (1, 1, Sk).
    q = q_ref[0].astype(jnp.bfloat16)          # (H, Sq, Dh)
    k = k_ref[0].astype(jnp.bfloat16)          # (H, Sk, Dh)
    v = v_ref[0].astype(jnp.bfloat16)          # (H, Sk, Dh)
    H, Sq, Dh = q.shape
    Sk = k.shape[1]

    # energy: contract on the last axis of both operands (no explicit transpose).
    energy = jnp.einsum('hqd,hkd->hqk', q, k,
                        preferred_element_type=jnp.float32)     # (H, Sq, Sk) f32

    valid = km_ref[...] != 0.0                                  # (1, 1, Sk)
    if causal:
        row = jax.lax.broadcasted_iota(jnp.int32, (1, Sq, Sk), 1)
        col = jax.lax.broadcasted_iota(jnp.int32, (1, Sq, Sk), 2)
        valid = jnp.logical_and(valid, row >= col)              # (1, Sq, Sk)

    # masked_fill BEFORE the 1/sqrt(d) scaling, exactly like the PyTorch module.
    energy = jnp.where(valid, energy, jnp.float32(-1e20))
    energy = energy * scale
    energy = energy - jnp.max(energy, axis=-1, keepdims=True)
    p = jnp.exp(energy)
    p = p * pl.reciprocal(jnp.sum(p, axis=-1, keepdims=True), approx=True)

    ctx = jnp.einsum('hqk,hkd->hqd', p.astype(jnp.bfloat16), v,
                     preferred_element_type=jnp.float32)        # (H, Sq, Dh)

    # Lane-dense output (Sq, H*Dh): out[q, h*Dh + d] = ctx[h, q, d]
    o_ref[0] = jnp.concatenate([ctx[h] for h in range(H)], axis=-1)


def attention_core(q, k, v, key_valid, head_dim, causal):
    # q/k/v: (N, H, S, Dh); key_valid: (N, 1, Sk) float (1.0 valid / 0.0 masked)
    N, H, Sq, Dh = q.shape
    Sk = k.shape[2]
    Sv = v.shape[2]
    assert Sv == Sk  # required by the reference einsum('nhql,nlhd->nqhd')
    kernel = functools.partial(_attn_kernel, scale=1.0 / math.sqrt(head_dim),
                               causal=causal)
    return pl.pallas_call(
        kernel,
        out_shape=jax.ShapeDtypeStruct((N, Sq, H * Dh), jnp.float32),
        grid=(N,),
        in_specs=[
            pl.BlockSpec((1, H, Sq, Dh), lambda n: (n, 0, 0, 0)),
            pl.BlockSpec((1, H, Sk, Dh), lambda n: (n, 0, 0, 0)),
            pl.BlockSpec((1, H, Sv, Dh), lambda n: (n, 0, 0, 0)),
            pl.BlockSpec((1, 1, Sk), lambda n: (n, 0, 0)),
        ],
        out_specs=pl.BlockSpec((1, Sq, H * Dh), lambda n: (n, 0, 0)),
        compiler_params=pltpu.CompilerParams(dimension_semantics=("parallel",)),
    )(q, k, v, key_valid)


# ----------------------------------------------------------------------------
# Model glue (reshapes, parameter plumbing) in plain JAX
# ----------------------------------------------------------------------------

def mha_self(x, key_valid, causal, p, heads):
    # MultiHeadAttention.forward(values=x, keys=x, queries=x, mask) - fc_out
    # (fc_out + residual + LayerNorm is applied by the caller via proj_add_ln)
    N, S, E = x.shape
    Dh = E // heads
    qkv = linear(x.reshape(-1, E), p["w_qkv"], p["b_qkv"])         # (N*S, 3E)
    qkv = qkv.reshape(N, S, 3, heads, Dh)
    q = qkv[:, :, 0].transpose(0, 2, 1, 3)                          # (N, H, S, Dh)
    k = qkv[:, :, 1].transpose(0, 2, 1, 3)
    v = qkv[:, :, 2].transpose(0, 2, 1, 3)
    return attention_core(q, k, v, key_valid, Dh, causal)           # (N, S, E)


def mha_cross(values_in, kq_in, key_valid, p, heads):
    # NOTE: reproduces the original module exactly:
    #   encoder_attention(values=x, keys=encoder_out, queries=encoder_out, src_mask)
    N, Sv, E = values_in.shape
    Skq = kq_in.shape[1]
    assert Sv == Skq  # required by the reference attention@values contraction
    Dh = E // heads
    qkv = cross_qkv_proj(kq_in.reshape(-1, E), values_in.reshape(-1, E),
                         p["w_qk"], p["b_qk"], p["w_v"], p["b_v"])  # (M, 3E)
    qkv = qkv.reshape(N, Skq, 3, heads, Dh)
    q = qkv[:, :, 0].transpose(0, 2, 1, 3)
    k = qkv[:, :, 1].transpose(0, 2, 1, 3)
    v = qkv[:, :, 2].transpose(0, 2, 1, 3)
    return attention_core(q, k, v, key_valid, Dh, causal=False)     # (N, Skq, E)


def encoder_block(x, src_valid, p, heads):
    N, S, E = x.shape
    ctx = mha_self(x, src_valid, False, p["attn"], heads)
    x1 = proj_add_ln(ctx.reshape(-1, E), x.reshape(-1, E),
                     p["attn"]["w_o"], p["attn"]["b_o"],
                     p["ln1_g"], p["ln1_b"]).reshape(N, S, E)
    out = ffn_add_ln(x1.reshape(-1, E), p["ff_w1"], p["ff_b1"],
                     p["ff_w2"], p["ff_b2"],
                     p["ln2_g"], p["ln2_b"]).reshape(N, S, E)
    return out


def decoder_block(x, enc_out, src_valid, trg_valid, p, heads):
    N, S, E = x.shape
    # masked self-attention (causal mask generated in-kernel)
    ctx = mha_self(x, trg_valid, True, p["attn"], heads)
    x1 = proj_add_ln(ctx.reshape(-1, E), x.reshape(-1, E),
                     p["attn"]["w_o"], p["attn"]["b_o"],
                     p["ln1_g"], p["ln1_b"]).reshape(N, S, E)
    # cross attention (values=x1, keys=queries=enc_out) — residual is x1
    ctx2 = mha_cross(x1, enc_out, src_valid, p["enc_attn"], heads)
    x2 = proj_add_ln(ctx2.reshape(-1, E), x1.reshape(-1, E),
                     p["enc_attn"]["w_o"], p["enc_attn"]["b_o"],
                     p["ln2_g"], p["ln2_b"]).reshape(N, S, E)
    out = ffn_add_ln(x2.reshape(-1, E), p["ff_w1"], p["ff_b1"],
                     p["ff_w2"], p["ff_b2"],
                     p["ln3_g"], p["ln3_b"]).reshape(N, S, E)
    return out


def make_positional_encoding(max_len, embed_size):
    position = jnp.arange(max_len, dtype=jnp.float32)[:, None]
    div_term = jnp.exp(
        jnp.arange(0, embed_size, 2, dtype=jnp.float32)
        * (-(math.log(10000.0) / embed_size))
    )
    pe = jnp.zeros((max_len, embed_size), jnp.float32)
    pe = pe.at[:, 0::2].set(jnp.sin(position * div_term))
    pe = pe.at[:, 1::2].set(jnp.cos(position * div_term))
    return pe


def transformer_forward(params, src, trg, *, heads):
    N, S_src = src.shape
    _, S_trg = trg.shape
    E = params["enc_emb"].shape[1]

    # compact per-batch key-validity masks (no per-head materialization)
    src_valid = (src != 0).astype(jnp.float32).reshape(N, 1, S_src)
    trg_valid = jnp.ones((N, 1, S_trg), jnp.float32)   # trg mask is purely causal

    pe = params["pe"]

    # TODO(synk): embedding gather + positional-encoding add are plain-JAX glue.
    # ---- encoder ----
    x = jnp.take(params["enc_emb"], src, axis=0) + pe[:S_src][None]     # (N,S,E)
    for p in params["enc_layers"]:
        x = encoder_block(x, src_valid, p, heads)
    enc_out = x

    # ---- decoder ----
    y = jnp.take(params["dec_emb"], trg, axis=0) + pe[:S_trg][None]
    for p in params["dec_layers"]:
        y = decoder_block(y, enc_out, src_valid, trg_valid, p, heads)

    logits = linear(y.reshape(-1, E), params["fc_out_w"], params["fc_out_b"])
    return logits.reshape(N, S_trg, -1)


# ----------------------------------------------------------------------------
# Deterministic parameter initialization (matmul weights stored in bf16)
# ----------------------------------------------------------------------------

def _init_self_mha(key, E):
    kq, kk, kv, ko = jax.random.split(key, 4)
    s = 0.02
    wq = s * jax.random.normal(kq, (E, E), jnp.float32)
    wk = s * jax.random.normal(kk, (E, E), jnp.float32)
    wv = s * jax.random.normal(kv, (E, E), jnp.float32)
    wo = s * jax.random.normal(ko, (E, E), jnp.float32)
    return {
        "w_qkv": jnp.concatenate([wq, wk, wv], axis=1).astype(jnp.bfloat16),
        "b_qkv": jnp.zeros((1, 3 * E), jnp.float32),
        "w_o": wo.astype(jnp.bfloat16),
        "b_o": jnp.zeros((1, E), jnp.float32),
    }


def _init_cross_mha(key, E):
    kq, kk, kv, ko = jax.random.split(key, 4)
    s = 0.02
    wq = s * jax.random.normal(kq, (E, E), jnp.float32)
    wk = s * jax.random.normal(kk, (E, E), jnp.float32)
    wv = s * jax.random.normal(kv, (E, E), jnp.float32)
    wo = s * jax.random.normal(ko, (E, E), jnp.float32)
    return {
        "w_qk": jnp.concatenate([wq, wk], axis=1).astype(jnp.bfloat16),
        "b_qk": jnp.zeros((1, 2 * E), jnp.float32),
        "w_v": wv.astype(jnp.bfloat16),
        "b_v": jnp.zeros((1, E), jnp.float32),
        "w_o": wo.astype(jnp.bfloat16),
        "b_o": jnp.zeros((1, E), jnp.float32),
    }


def _init_ffn(key, E, F, Fp):
    # Hidden dim zero-padded to a multiple of 128: exact (relu(0)=0, zero rows of w2).
    k1, k2 = jax.random.split(key, 2)
    w1 = 0.02 * jax.random.normal(k1, (E, F), jnp.float32)
    w2 = 0.02 * jax.random.normal(k2, (F, E), jnp.float32)
    w1 = jnp.pad(w1, ((0, 0), (0, Fp - F)))
    w2 = jnp.pad(w2, ((0, Fp - F), (0, 0)))
    return {
        "ff_w1": w1.astype(jnp.bfloat16), "ff_b1": jnp.zeros((1, Fp), jnp.float32),
        "ff_w2": w2.astype(jnp.bfloat16), "ff_b2": jnp.zeros((1, E), jnp.float32),
    }


def _init_enc_block(key, E, F, Fp):
    k1, k2 = jax.random.split(key, 2)
    p = {"attn": _init_self_mha(k1, E),
         "ln1_g": jnp.ones((1, E), jnp.float32), "ln1_b": jnp.zeros((1, E), jnp.float32),
         "ln2_g": jnp.ones((1, E), jnp.float32), "ln2_b": jnp.zeros((1, E), jnp.float32)}
    p.update(_init_ffn(k2, E, F, Fp))
    return p


def _init_dec_block(key, E, F, Fp):
    k1, k2, k3 = jax.random.split(key, 3)
    p = {"attn": _init_self_mha(k1, E),
         "enc_attn": _init_cross_mha(k2, E),
         "ln1_g": jnp.ones((1, E), jnp.float32), "ln1_b": jnp.zeros((1, E), jnp.float32),
         "ln2_g": jnp.ones((1, E), jnp.float32), "ln2_b": jnp.zeros((1, E), jnp.float32),
         "ln3_g": jnp.ones((1, E), jnp.float32), "ln3_b": jnp.zeros((1, E), jnp.float32)}
    p.update(_init_ffn(k3, E, F, Fp))
    return p


def init_params(key, *, E, F, num_layers, src_vocab, trg_vocab, max_len):
    Fp = ((F + 127) // 128) * 128
    keys = jax.random.split(key, 3 + 2 * num_layers)
    return {
        "enc_emb": 0.02 * jax.random.normal(keys[0], (src_vocab, E), jnp.float32),
        "dec_emb": 0.02 * jax.random.normal(keys[1], (trg_vocab, E), jnp.float32),
        "fc_out_w": (0.02 * jax.random.normal(keys[2], (E, trg_vocab), jnp.float32)
                     ).astype(jnp.bfloat16),
        "fc_out_b": jnp.zeros((1, trg_vocab), jnp.float32),
        "pe": make_positional_encoding(max_len, E),
        "enc_layers": [_init_enc_block(keys[3 + i], E, F, Fp)
                       for i in range(num_layers)],
        "dec_layers": [_init_dec_block(keys[3 + num_layers + i], E, F, Fp)
                       for i in range(num_layers)],
    }


# ----------------------------------------------------------------------------
# Main
# ----------------------------------------------------------------------------

if __name__ == "__main__":
    # Small, TPU-aligned shapes consistent with the module (embed % heads == 0, ...)
    EMBED = 128
    HEADS = 8          # head_dim = 16
    FF_HIDDEN = 64     # padded to 128 internally (exact zero padding)
    NUM_LAYERS = 2
    SRC_VOCAB = 256
    TRG_VOCAB = 256
    MAX_LEN = 100
    BATCH = 2
    SEQ = 8

    key = jax.random.PRNGKey(0)
    k_src, k_trg, k_param = jax.random.split(key, 3)

    src = jax.random.randint(k_src, (BATCH, SEQ), 0, SRC_VOCAB, dtype=jnp.int32)
    trg = jax.random.randint(k_trg, (BATCH, SEQ), 0, TRG_VOCAB, dtype=jnp.int32)

    params = init_params(
        k_param, E=EMBED, F=FF_HIDDEN, num_layers=NUM_LAYERS,
        src_vocab=SRC_VOCAB, trg_vocab=TRG_VOCAB, max_len=MAX_LEN,
    )

    fwd = jax.jit(functools.partial(transformer_forward, heads=HEADS))
    out = fwd(params, src, trg)
    out = jax.block_until_ready(out)

    assert out.shape == (BATCH, SEQ, TRG_VOCAB), out.shape
    assert out.dtype == jnp.float32
    assert bool(jnp.all(jnp.isfinite(out)))
    print("KERNEL_OK")
</pallas_src>

<mosaic_0001>
module attributes {stable_mosaic.version = 11 : i64} {
  func.func @_linear_kernel(%arg0: i32, %arg1: memref<16x128xf32, #tpu.memory_space<vmem>>, %arg2: memref<128x384xbf16, #tpu.memory_space<vmem>>, %arg3: memref<1x384xf32, #tpu.memory_space<vmem>>, %arg4: memref<16x384xf32, #tpu.memory_space<vmem>>) attributes {dimension_semantics = [#tpu.dimension_semantics<parallel>], iteration_bounds = array<i64: 1>, scalar_prefetch = 0 : i64, scratch_operands = 0 : i64, tpu.core_type = #tpu.core_type<tc>, window_params = [{transform_indices = @transform_0, window_bounds = array<i64: 16, 128>}, {pipeline_mode = #tpu.pipeline_mode<synchronous>, transform_indices = @transform_1, window_bounds = array<i64: 128, 384>}, {pipeline_mode = #tpu.pipeline_mode<synchronous>, transform_indices = @transform_2, window_bounds = array<i64: 1, 384>}, {transform_indices = @transform_3, window_bounds = array<i64: 16, 384>}]} {
    %c0 = arith.constant 0 : index
    %c0_0 = arith.constant 0 : index
    %0 = vector.load %arg1[%c0, %c0_0] : memref<16x128xf32, #tpu.memory_space<vmem>>, vector<16x128xf32>
    %1 = arith.truncf %0 : vector<16x128xf32> to vector<16x128xbf16>
    %c0_1 = arith.constant 0 : index
    %c0_2 = arith.constant 0 : index
    %2 = vector.load %arg2[%c0_1, %c0_2] : memref<128x384xbf16, #tpu.memory_space<vmem>>, vector<128x384xbf16>
    %cst = arith.constant dense<0.000000e+00> : vector<16x384xf32>
    %3 = tpu.matmul %1, %2, %cst {dimension_numbers = #tpu.dot_dimension_numbers<[1], [0], [0], [1], [0, 0, 1, 1], [], []>} : vector<16x128xbf16>, vector<128x384xbf16>, vector<16x384xf32> -> vector<16x384xf32>
    %c0_3 = arith.constant 0 : index
    %c0_4 = arith.constant 0 : index
    %4 = vector.load %arg3[%c0_3, %c0_4] : memref<1x384xf32, #tpu.memory_space<vmem>>, vector<1x384xf32>
    %5 = vector.broadcast %4 : vector<1x384xf32> to vector<16x384xf32>
    %6 = arith.addf %3, %5 : vector<16x384xf32>
    %c0_5 = arith.constant 0 : index
    %c0_6 = arith.constant 0 : index
    %7 = vector.load %arg4[%c0_5, %c0_6] : memref<16x384xf32, #tpu.memory_space<vmem>>, vector<16x384xf32>
    tpu.vector_store %arg4[%c0_5, %c0_6], %6 {strides = array<i32>} : memref<16x384xf32, #tpu.memory_space<vmem>>, vector<16x384xf32>,
    return
  }
  func.func @transform_0(%arg0: i32) -> (i32, i32) {
    %c0_i32 = arith.constant 0 : i32
    %c0_i32_0 = arith.constant 0 : i32
    return %arg0, %c0_i32 : i32, i32
  }
  func.func @transform_1(%arg0: i32) -> (i32, i32) {
    %c0_i32 = arith.constant 0 : i32
    %c0_i32_0 = arith.constant 0 : i32
    %c0_i32_1 = arith.constant 0 : i32
    return %c0_i32, %c0_i32_0 : i32, i32
  }
  func.func @transform_2(%arg0: i32) -> (i32, i32) {
    %c0_i32 = arith.constant 0 : i32
    %c0_i32_0 = arith.constant 0 : i32
    %c0_i32_1 = arith.constant 0 : i32
    return %c0_i32, %c0_i32_0 : i32, i32
  }
  func.func @transform_3(%arg0: i32) -> (i32, i32) {
    %c0_i32 = arith.constant 0 : i32
    %c0_i32_0 = arith.constant 0 : i32
    return %arg0, %c0_i32 : i32, i32
  }
}

module attributes {stable_mosaic.version = 11 : i64} {
  func.func @_proj_add_ln_kernel(%arg0: i32, %arg1: memref<16x128xf32, #tpu.memory_space<vmem>>, %arg2: memref<128x128xbf16, #tpu.memory_space<vmem>>, %arg3: memref<1x128xf32, #tpu.memory_space<vmem>>, %arg4: memref<16x128xf32, #tpu.memory_space<vmem>>, %arg5: memref<1x128xf32, #tpu.memory_space<vmem>>, %arg6: memref<1x128xf32, #tpu.memory_space<vmem>>, %arg7: memref<16x128xf32, #tpu.memory_space<vmem>>) attributes {dimension_semantics = [#tpu.dimension_semantics<parallel>], iteration_bounds = array<i64: 1>, scalar_prefetch = 0 : i64, scratch_operands = 0 : i64, tpu.core_type = #tpu.core_type<tc>, window_params = [{transform_indices = @transform_0, window_bounds = array<i64: 16, 128>}, {pipeline_mode = #tpu.pipeline_mode<synchronous>, transform_indices = @transform_1, window_bounds = array<i64: 128, 128>}, {pipeline_mode = #tpu.pipeline_mode<synchronous>, transform_indices = @transform_2, window_bounds = array<i64: 1, 128>}, {transform_indices = @transform_3, window_bounds = array<i64: 16, 128>}, {pipeline_mode = #tpu.pipeline_mode<synchronous>, transform_indices = @transform_4, window_bounds = array<i64: 1, 128>}, {pipeline_mode = #tpu.pipeline_mode<synchronous>, transform_indices = @transform_5, window_bounds = array<i64: 1, 128>}, {transform_indices = @transform_6, window_bounds = array<i64: 16, 128>}]} {
    %c0 = arith.constant 0 : index
    %c0_0 = arith.constant 0 : index
    %0 = vector.load %arg1[%c0, %c0_0] : memref<16x128xf32, #tpu.memory_space<vmem>>, vector<16x128xf32>
    %1 = arith.truncf %0 : vector<16x128xf32> to vector<16x128xbf16>
    %c0_1 = arith.constant 0 : index
    %c0_2 = arith.constant 0 : index
    %2 = vector.load %arg2[%c0_1, %c0_2] : memref<128x128xbf16, #tpu.memory_space<vmem>>, vector<128x128xbf16>
    %cst = arith.constant dense<0.000000e+00> : vector<16x128xf32>
    %3 = tpu.matmul %1, %2, %cst {dimension_numbers = #tpu.dot_dimension_numbers<[1], [0], [0], [1], [0, 0, 1, 1], [], []>} : vector<16x128xbf16>, vector<128x128xbf16>, vector<16x128xf32> -> vector<16x128xf32>
    %c0_3 = arith.constant 0 : index
    %c0_4 = arith.constant 0 : index
    %4 = vector.load %arg3[%c0_3, %c0_4] : memref<1x128xf32, #tpu.memory_space<vmem>>, vector<1x128xf32>
    %5 = vector.broadcast %4 : vector<1x128xf32> to vector<16x128xf32>
    %6 = arith.addf %3, %5 : vector<16x128xf32>
    %c0_5 = arith.constant 0 : index
    %c0_6 = arith.constant 0 : index
    %7 = vector.load %arg4[%c0_5, %c0_6] : memref<16x128xf32, #tpu.memory_space<vmem>>, vector<16x128xf32>
    %8 = arith.addf %6, %7 : vector<16x128xf32>
    %cst_7 = arith.constant dense<0.000000e+00> : vector<16xf32>
    %9 = vector.multi_reduction <add>, %8, %cst_7 [1] : vector<16x128xf32> to vector<16xf32>
    %10 = vector.shape_cast %9 : vector<16xf32> to vector<16x1xf32>
    %cst_8 = arith.constant 1.280000e+02 : f32
    %11 = vector.broadcast %cst_8 : f32 to vector<16x1xf32>
    %12 = arith.divf %10, %11 : vector<16x1xf32>
    %13 = vector.broadcast %12 : vector<16x1xf32> to vector<16x128xf32>
    %14 = arith.subf %8, %13 : vector<16x128xf32>
    %15 = arith.mulf %14, %14 : vector<16x128xf32>
    %cst_9 = arith.constant dense<0.000000e+00> : vector<16xf32>
    %16 = vector.multi_reduction <add>, %15, %cst_9 [1] : vector<16x128xf32> to vector<16xf32>
    %17 = vector.shape_cast %16 : vector<16xf32> to vector<16x1xf32>
    %cst_10 = arith.constant 1.280000e+02 : f32
    %18 = vector.broadcast %cst_10 : f32 to vector<16x1xf32>
    %19 = arith.divf %17, %18 : vector<16x1xf32>
    %20 = vector.broadcast %12 : vector<16x1xf32> to vector<16x128xf32>
    %21 = arith.subf %8, %20 : vector<16x128xf32>
    %cst_11 = arith.constant 9.99999974E-6 : f32
    %22 = vector.broadcast %cst_11 : f32 to vector<16x1xf32>
    %23 = arith.addf %19, %22 : vector<16x1xf32>
    %24 = math.rsqrt %23 : vector<16x1xf32>
    %25 = vector.broadcast %24 : vector<16x1xf32> to vector<16x128xf32>
    %26 = arith.mulf %21, %25 : vector<16x128xf32>
    %c0_12 = arith.constant 0 : index
    %c0_13 = arith.constant 0 : index
    %27 = vector.load %arg5[%c0_12, %c0_13] : memref<1x128xf32, #tpu.memory_space<vmem>>, vector<1x128xf32>
    %28 = vector.broadcast %27 : vector<1x128xf32> to vector<16x128xf32>
    %29 = arith.mulf %26, %28 : vector<16x128xf32>
    %c0_14 = arith.constant 0 : index
    %c0_15 = arith.constant 0 : index
    %30 = vector.load %arg6[%c0_14, %c0_15] : memref<1x128xf32, #tpu.memory_space<vmem>>, vector<1x128xf32>
    %31 = vector.broadcast %30 : vector<1x128xf32> to vector<16x128xf32>
    %32 = arith.addf %29, %31 : vector<16x128xf32>
    %c0_16 = arith.constant 0 : index
    %c0_17 = arith.constant 0 : index
    %33 = vector.load %arg7[%c0_16, %c0_17] : memref<16x128xf32, #tpu.memory_space<vmem>>, vector<16x128xf32>
    tpu.vector_store %arg7[%c0_16, %c0_17], %32 {strides = array<i32>} : memref<16x128xf32, #tpu.memory_space<vmem>>, vector<16x128xf32>,
    return
  }
  func.func @transform_0(%arg0: i32) -> (i32, i32) {
    %c0_i32 = arith.constant 0 : i32
    %c0_i32_0 = arith.constant 0 : i32
    return %arg0, %c0_i32 : i32, i32
  }
  func.func @transform_1(%arg0: i32) -> (i32, i32) {
    %c0_i32 = arith.constant 0 : i32
    %c0_i32_0 = arith.constant 0 : i32
    %c0_i32_1 = arith.constant 0 : i32
    return %c0_i32, %c0_i32_0 : i32, i32
  }
  func.func @transform_2(%arg0: i32) -> (i32, i32) {
    %c0_i32 = arith.constant 0 : i32
    %c0_i32_0 = arith.constant 0 : i32
    %c0_i32_1 = arith.constant 0 : i32
    return %c0_i32, %c0_i32_0 : i32, i32
  }
  func.func @transform_3(%arg0: i32) -> (i32, i32) {
    %c0_i32 = arith.constant 0 : i32
    %c0_i32_0 = arith.constant 0 : i32
    return %arg0, %c0_i32 : i32, i32
  }
  func.func @transform_4(%arg0: i32) -> (i32, i32) {
    %c0_i32 = arith.constant 0 : i32
    %c0_i32_0 = arith.constant 0 : i32
    %c0_i32_1 = arith.constant 0 : i32
    return %c0_i32, %c0_i32_0 : i32, i32
  }
  func.func @transform_5(%arg0: i32) -> (i32, i32) {
    %c0_i32 = arith.constant 0 : i32
    %c0_i32_0 = arith.constant 0 : i32
    %c0_i32_1 = arith.constant 0 : i32
    return %c0_i32, %c0_i32_0 : i32, i32
  }
  func.func @transform_6(%arg0: i32) -> (i32, i32) {
    %c0_i32 = arith.constant 0 : i32
    %c0_i32_0 = arith.constant 0 : i32
    return %arg0, %c0_i32 : i32, i32
  }
}

module attributes {stable_mosaic.version = 11 : i64} {
  func.func @_ffn_add_ln_kernel(%arg0: i32, %arg1: memref<16x128xf32, #tpu.memory_space<vmem>>, %arg2: memref<128x128xbf16, #tpu.memory_space<vmem>>, %arg3: memref<1x128xf32, #tpu.memory_space<vmem>>, %arg4: memref<128x128xbf16, #tpu.memory_space<vmem>>, %arg5: memref<1x128xf32, #tpu.memory_space<vmem>>, %arg6: memref<1x128xf32, #tpu.memory_space<vmem>>, %arg7: memref<1x128xf32, #tpu.memory_space<vmem>>, %arg8: memref<16x128xf32, #tpu.memory_space<vmem>>) attributes {dimension_semantics = [#tpu.dimension_semantics<parallel>], iteration_bounds = array<i64: 1>, scalar_prefetch = 0 : i64, scratch_operands = 0 : i64, tpu.core_type = #tpu.core_type<tc>, window_params = [{transform_indices = @transform_0, window_bounds = array<i64: 16, 128>}, {pipeline_mode = #tpu.pipeline_mode<synchronous>, transform_indices = @transform_1, window_bounds = array<i64: 128, 128>}, {pipeline_mode = #tpu.pipeline_mode<synchronous>, transform_indices = @transform_2, window_bounds = array<i64: 1, 128>}, {pipeline_mode = #tpu.pipeline_mode<synchronous>, transform_indices = @transform_3, window_bounds = array<i64: 128, 128>}, {pipeline_mode = #tpu.pipeline_mode<synchronous>, transform_indices = @transform_4, window_bounds = array<i64: 1, 128>}, {pipeline_mode = #tpu.pipeline_mode<synchronous>, transform_indices = @transform_5, window_bounds = array<i64: 1, 128>}, {pipeline_mode = #tpu.pipeline_mode<synchronous>, transform_indices = @transform_6, window_bounds = array<i64: 1, 128>}, {transform_indices = @transform_7, window_bounds = array<i64: 16, 128>}]} {
    %c0 = arith.constant 0 : index
    %c0_0 = arith.constant 0 : index
    %0 = vector.load %arg1[%c0, %c0_0] : memref<16x128xf32, #tpu.memory_space<vmem>>, vector<16x128xf32>
    %1 = arith.truncf %0 : vector<16x128xf32> to vector<16x128xbf16>
    %c0_1 = arith.constant 0 : index
    %c0_2 = arith.constant 0 : index
    %2 = vector.load %arg2[%c0_1, %c0_2] : memref<128x128xbf16, #tpu.memory_space<vmem>>, vector<128x128xbf16>
    %cst = arith.constant dense<0.000000e+00> : vector<16x128xf32>
    %3 = tpu.matmul %1, %2, %cst {dimension_numbers = #tpu.dot_dimension_numbers<[1], [0], [0], [1], [0, 0, 1, 1], [], []>} : vector<16x128xbf16>, vector<128x128xbf16>, vector<16x128xf32> -> vector<16x128xf32>
    %c0_3 = arith.constant 0 : index
    %c0_4 = arith.constant 0 : index
    %4 = vector.load %arg3[%c0_3, %c0_4] : memref<1x128xf32, #tpu.memory_space<vmem>>, vector<1x128xf32>
    %5 = vector.broadcast %4 : vector<1x128xf32> to vector<16x128xf32>
    %6 = arith.addf %3, %5 : vector<16x128xf32>
    %cst_5 = arith.constant 0.000000e+00 : f32
    %7 = vector.broadcast %cst_5 : f32 to vector<16x128xf32>
    %8 = arith.maximumf %6, %7 : vector<16x128xf32>
    %9 = arith.truncf %8 : vector<16x128xf32> to vector<16x128xbf16>
    %c0_6 = arith.constant 0 : index
    %c0_7 = arith.constant 0 : index
    %10 = vector.load %arg4[%c0_6, %c0_7] : memref<128x128xbf16, #tpu.memory_space<vmem>>, vector<128x128xbf16>
    %cst_8 = arith.constant dense<0.000000e+00> : vector<16x128xf32>
    %11 = tpu.matmul %9, %10, %cst_8 {dimension_numbers = #tpu.dot_dimension_numbers<[1], [0], [0], [1], [0, 0, 1, 1], [], []>} : vector<16x128xbf16>, vector<128x128xbf16>, vector<16x128xf32> -> vector<16x128xf32>
    %c0_9 = arith.constant 0 : index
    %c0_10 = arith.constant 0 : index
    %12 = vector.load %arg5[%c0_9, %c0_10] : memref<1x128xf32, #tpu.memory_space<vmem>>, vector<1x128xf32>
    %13 = vector.broadcast %12 : vector<1x128xf32> to vector<16x128xf32>
    %14 = arith.addf %11, %13 : vector<16x128xf32>
    %15 = arith.addf %0, %14 : vector<16x128xf32>
    %cst_11 = arith.constant dense<0.000000e+00> : vector<16xf32>
    %16 = vector.multi_reduction <add>, %15, %cst_11 [1] : vector<16x128xf32> to vector<16xf32>
    %17 = vector.shape_cast %16 : vector<16xf32> to vector<16x1xf32>
    %cst_12 = arith.constant 1.280000e+02 : f32
    %18 = vector.broadcast %cst_12 : f32 to vector<16x1xf32>
    %19 = arith.divf %17, %18 : vector<16x1xf32>
    %20 = vector.broadcast %19 : vector<16x1xf32> to vector<16x128xf32>
    %21 = arith.subf %15, %20 : vector<16x128xf32>
    %22 = arith.mulf %21, %21 : vector<16x128xf32>
    %cst_13 = arith.constant dense<0.000000e+00> : vector<16xf32>
    %23 = vector.multi_reduction <add>, %22, %cst_13 [1] : vector<16x128xf32> to vector<16xf32>
    %24 = vector.shape_cast %23 : vector<16xf32> to vector<16x1xf32>
    %cst_14 = arith.constant 1.280000e+02 : f32
    %25 = vector.broadcast %cst_14 : f32 to vector<16x1xf32>
    %26 = arith.divf %24, %25 : vector<16x1xf32>
    %27 = vector.broadcast %19 : vector<16x1xf32> to vector<16x128xf32>
    %28 = arith.subf %15, %27 : vector<16x128xf32>
    %cst_15 = arith.constant 9.99999974E-6 : f32
    %29 = vector.broadcast %cst_15 : f32 to vector<16x1xf32>
    %30 = arith.addf %26, %29 : vector<16x1xf32>
    %31 = math.rsqrt %30 : vector<16x1xf32>
    %32 = vector.broadcast %31 : vector<16x1xf32> to vector<16x128xf32>
    %33 = arith.mulf %28, %32 : vector<16x128xf32>
    %c0_16 = arith.constant 0 : index
    %c0_17 = arith.constant 0 : index
    %34 = vector.load %arg6[%c0_16, %c0_17] : memref<1x128xf32, #tpu.memory_space<vmem>>, vector<1x128xf32>
    %35 = vector.broadcast %34 : vector<1x128xf32> to vector<16x128xf32>
    %36 = arith.mulf %33, %35 : vector<16x128xf32>
    %c0_18 = arith.constant 0 : index
    %c0_19 = arith.constant 0 : index
    %37 = vector.load %arg7[%c0_18, %c0_19] : memref<1x128xf32, #tpu.memory_space<vmem>>, vector<1x128xf32>
    %38 = vector.broadcast %37 : vector<1x128xf32> to vector<16x128xf32>
    %39 = arith.addf %36, %38 : vector<16x128xf32>
    %c0_20 = arith.constant 0 : index
    %c0_21 = arith.constant 0 : index
    %40 = vector.load %arg8[%c0_20, %c0_21] : memref<16x128xf32, #tpu.memory_space<vmem>>, vector<16x128xf32>
    tpu.vector_store %arg8[%c0_20, %c0_21], %39 {strides = array<i32>} : memref<16x128xf32, #tpu.memory_space<vmem>>, vector<16x128xf32>,
    return
  }
  func.func @transform_0(%arg0: i32) -> (i32, i32) {
    %c0_i32 = arith.constant 0 : i32
    %c0_i32_0 = arith.constant 0 : i32
    return %arg0, %c0_i32 : i32, i32
  }
  func.func @transform_1(%arg0: i32) -> (i32, i32) {
    %c0_i32 = arith.constant 0 : i32
    %c0_i32_0 = arith.constant 0 : i32
    %c0_i32_1 = arith.constant 0 : i32
    return %c0_i32, %c0_i32_0 : i32, i32
  }
  func.func @transform_2(%arg0: i32) -> (i32, i32) {
    %c0_i32 = arith.constant 0 : i32
    %c0_i32_0 = arith.constant 0 : i32
    %c0_i32_1 = arith.constant 0 : i32
    return %c0_i32, %c0_i32_0 : i32, i32
  }
  func.func @transform_3(%arg0: i32) -> (i32, i32) {
    %c0_i32 = arith.constant 0 : i32
    %c0_i32_0 = arith.constant 0 : i32
    %c0_i32_1 = arith.constant 0 : i32
    return %c0_i32, %c0_i32_0 : i32, i32
  }
  func.func @transform_4(%arg0: i32) -> (i32, i32) {
    %c0_i32 = arith.constant 0 : i32
    %c0_i32_0 = arith.constant 0 : i32
    %c0_i32_1 = arith.constant 0 : i32
    return %c0_i32, %c0_i32_0 : i32, i32
  }
  func.func @transform_5(%arg0: i32) -> (i32, i32) {
    %c0_i32 = arith.constant 0 : i32
    %c0_i32_0 = arith.constant 0 : i32
    %c0_i32_1 = arith.constant 0 : i32
    return %c0_i32, %c0_i32_0 : i32, i32
  }
  func.func @transform_6(%arg0: i32) -> (i32, i32) {
    %c0_i32 = arith.constant 0 : i32
    %c0_i32_0 = arith.constant 0 : i32
    %c0_i32_1 = arith.constant 0 : i32
    return %c0_i32, %c0_i32_0 : i32, i32
  }
  func.func @transform_7(%arg0: i32) -> (i32, i32) {
    %c0_i32 = arith.constant 0 : i32
    %c0_i32_0 = arith.constant 0 : i32
    return %arg0, %c0_i32 : i32, i32
  }
}

module attributes {stable_mosaic.version = 11 : i64} {
  func.func @_attn_kernel(%arg0: i32, %arg1: memref<1x8x8x16xf32, #tpu.memory_space<vmem>>, %arg2: memref<1x8x8x16xf32, #tpu.memory_space<vmem>>, %arg3: memref<1x8x8x16xf32, #tpu.memory_space<vmem>>, %arg4: memref<1x1x8xf32, #tpu.memory_space<vmem>>, %arg5: memref<1x8x128xf32, #tpu.memory_space<vmem>>) attributes {dimension_semantics = [#tpu.dimension_semantics<parallel>], iteration_bounds = array<i64: 2>, scalar_prefetch = 0 : i64, scratch_operands = 0 : i64, tpu.core_type = #tpu.core_type<tc>, window_params = [{transform_indices = @transform_0, window_bounds = array<i64: 1, 8, 8, 16>}, {transform_indices = @transform_1, window_bounds = array<i64: 1, 8, 8, 16>}, {transform_indices = @transform_2, window_bounds = array<i64: 1, 8, 8, 16>}, {transform_indices = @transform_3, window_bounds = array<i64: 1, 1, 8>}, {transform_indices = @transform_4, window_bounds = array<i64: 1, 8, 128>}]} {
    %c0 = arith.constant 0 : index
    %c0_0 = arith.constant 0 : index
    %c0_1 = arith.constant 0 : index
    %c0_2 = arith.constant 0 : index
    %0 = vector.load %arg1[%c0, %c0_0, %c0_1, %c0_2] : memref<1x8x8x16xf32, #tpu.memory_space<vmem>>, vector<1x8x8x16xf32>
    %1 = vector.shape_cast %0 : vector<1x8x8x16xf32> to vector<8x8x16xf32>
    %2 = arith.truncf %1 : vector<8x8x16xf32> to vector<8x8x16xbf16>
    %c0_3 = arith.constant 0 : index
    %c0_4 = arith.constant 0 : index
    %c0_5 = arith.constant 0 : index
    %c0_6 = arith.constant 0 : index
    %3 = vector.load %arg2[%c0_3, %c0_4, %c0_5, %c0_6] : memref<1x8x8x16xf32, #tpu.memory_space<vmem>>, vector<1x8x8x16xf32>
    %4 = vector.shape_cast %3 : vector<1x8x8x16xf32> to vector<8x8x16xf32>
    %5 = arith.truncf %4 : vector<8x8x16xf32> to vector<8x8x16xbf16>
    %c0_7 = arith.constant 0 : index
    %c0_8 = arith.constant 0 : index
    %c0_9 = arith.constant 0 : index
    %c0_10 = arith.constant 0 : index
    %6 = vector.load %arg3[%c0_7, %c0_8, %c0_9, %c0_10] : memref<1x8x8x16xf32, #tpu.memory_space<vmem>>, vector<1x8x8x16xf32>
    %7 = vector.shape_cast %6 : vector<1x8x8x16xf32> to vector<8x8x16xf32>
    %8 = arith.truncf %7 : vector<8x8x16xf32> to vector<8x8x16xbf16>
    "tpu.trace_start"() <{level = 10 : i32, message = "hqd,hkd->hqk"}> : () -> ()
    %cst = arith.constant dense<0.000000e+00> : vector<8x8x8xf32>
    %9 = tpu.matmul %2, %5, %cst {dimension_numbers = #tpu.dot_dimension_numbers<[2], [2], [1], [1], [0, 0, 0, 1, 1, 1], [0], [0]>} : vector<8x8x16xbf16>, vector<8x8x16xbf16>, vector<8x8x8xf32> -> vector<8x8x8xf32>
    "tpu.trace_stop"() : () -> ()
    %c0_11 = arith.constant 0 : index
    %c0_12 = arith.constant 0 : index
    %c0_13 = arith.constant 0 : index
    %10 = vector.load %arg4[%c0_11, %c0_12, %c0_13] : memref<1x1x8xf32, #tpu.memory_space<vmem>>, vector<1x1x8xf32>
    %cst_14 = arith.constant 0.000000e+00 : f32
    %11 = vector.broadcast %cst_14 : f32 to vector<1x1x8xf32>
    %12 = arith.cmpf one, %10, %11 : vector<1x1x8xf32>
    %cst_15 = arith.constant -1.000000e+20 : f32
    %13 = vector.shape_cast %12 : vector<1x1x8xi1> to vector<1x1x8xi1>
    %14 = vector.broadcast %13 : vector<1x1x8xi1> to vector<8x8x8xi1>
    %15 = vector.broadcast %cst_15 : f32 to vector<8x8x8xf32>
    %16 = arith.select %14, %9, %15 : vector<8x8x8xi1>, vector<8x8x8xf32>
    %cst_16 = arith.constant 2.500000e-01 : f32
    %17 = vector.broadcast %cst_16 : f32 to vector<8x8x8xf32>
    %18 = arith.mulf %16, %17 : vector<8x8x8xf32>
    %cst_17 = arith.constant dense<0xFF800000> : vector<8x8xf32>
    %19 = vector.multi_reduction <maximumf>, %18, %cst_17 [2] : vector<8x8x8xf32> to vector<8x8xf32>
    %20 = vector.shape_cast %19 : vector<8x8xf32> to vector<8x8x1xf32>
    %21 = vector.broadcast %20 : vector<8x8x1xf32> to vector<8x8x8xf32>
    %22 = arith.subf %18, %21 : vector<8x8x8xf32>
    %23 = math.exp %22 : vector<8x8x8xf32>
    %cst_18 = arith.constant dense<0.000000e+00> : vector<8x8xf32>
    %24 = vector.multi_reduction <add>, %23, %cst_18 [2] : vector<8x8x8xf32> to vector<8x8xf32>
    %25 = vector.shape_cast %24 : vector<8x8xf32> to vector<8x8x1xf32>
    %26 = tpu.reciprocal %25 {approx = true} : vector<8x8x1xf32> -> vector<8x8x1xf32>
    %27 = vector.broadcast %26 : vector<8x8x1xf32> to vector<8x8x8xf32>
    %28 = arith.mulf %23, %27 : vector<8x8x8xf32>
    %29 = arith.truncf %28 : vector<8x8x8xf32> to vector<8x8x8xbf16>
    "tpu.trace_start"() <{level = 10 : i32, message = "hqk,hkd->hqd"}> : () -> ()
    %cst_19 = arith.constant dense<0.000000e+00> : vector<8x8x16xf32>
    %30 = tpu.matmul %29, %8, %cst_19 {dimension_numbers = #tpu.dot_dimension_numbers<[2], [1], [1], [2], [0, 0, 0, 1, 1, 2], [0], [0]>} : vector<8x8x8xbf16>, vector<8x8x16xbf16>, vector<8x8x16xf32> -> vector<8x8x16xf32>
    "tpu.trace_stop"() : () -> ()
    %31 = vector.extract_strided_slice %30 {offsets = [0, 0, 0], sizes = [1, 8, 16], strides = [1, 1, 1]} : vector<8x8x16xf32> to vector<1x8x16xf32>
    %32 = vector.shape_cast %31 : vector<1x8x16xf32> to vector<8x16xf32>
    %33 = vector.extract_strided_slice %30 {offsets = [1, 0, 0], sizes = [1, 8, 16], strides = [1, 1, 1]} : vector<8x8x16xf32> to vector<1x8x16xf32>
    %34 = vector.shape_cast %33 : vector<1x8x16xf32> to vector<8x16xf32>
    %35 = vector.extract_strided_slice %30 {offsets = [2, 0, 0], sizes = [1, 8, 16], strides = [1, 1, 1]} : vector<8x8x16xf32> to vector<1x8x16xf32>
    %36 = vector.shape_cast %35 : vector<1x8x16xf32> to vector<8x16xf32>
    %37 = vector.extract_strided_slice %30 {offsets = [3, 0, 0], sizes = [1, 8, 16], strides = [1, 1, 1]} : vector<8x8x16xf32> to vector<1x8x16xf32>
    %38 = vector.shape_cast %37 : vector<1x8x16xf32> to vector<8x16xf32>
    %39 = vector.extract_strided_slice %30 {offsets = [4, 0, 0], sizes = [1, 8, 16], strides = [1, 1, 1]} : vector<8x8x16xf32> to vector<1x8x16xf32>
    %40 = vector.shape_cast %39 : vector<1x8x16xf32> to vector<8x16xf32>
    %41 = vector.extract_strided_slice %30 {offsets = [5, 0, 0], sizes = [1, 8, 16], strides = [1, 1, 1]} : vector<8x8x16xf32> to vector<1x8x16xf32>
    %42 = vector.shape_cast %41 : vector<1x8x16xf32> to vector<8x16xf32>
    %43 = vector.extract_strided_slice %30 {offsets = [6, 0, 0], sizes = [1, 8, 16], strides = [1, 1, 1]} : vector<8x8x16xf32> to vector<1x8x16xf32>
    %44 = vector.shape_cast %43 : vector<1x8x16xf32> to vector<8x16xf32>
    %45 = vector.extract_strided_slice %30 {offsets = [7, 0, 0], sizes = [1, 8, 16], strides = [1, 1, 1]} : vector<8x8x16xf32> to vector<1x8x16xf32>
    %46 = vector.shape_cast %45 : vector<1x8x16xf32> to vector<8x16xf32>
    %47 = tpu.concatenate %32, %34, %36, %38, %40, %42, %44, %46 in 1 : vector<8x16xf32>, vector<8x16xf32>, vector<8x16xf32>, vector<8x16xf32>, vector<8x16xf32>, vector<8x16xf32>, vector<8x16xf32>, vector<8x16xf32> -> vector<8x128xf32>
    %c0_20 = arith.constant 0 : index
    %c0_21 = arith.constant 0 : index
    %c0_22 = arith.constant 0 : index
    %48 = vector.load %arg5[%c0_20, %c0_21, %c0_22] : memref<1x8x128xf32, #tpu.memory_space<vmem>>, vector<1x8x128xf32>
    %49 = vector.shape_cast %48 : vector<1x8x128xf32> to vector<8x128xf32>
    %50 = vector.shape_cast %47 : vector<8x128xf32> to vector<1x8x128xf32>
    tpu.vector_store %arg5[%c0_20, %c0_21, %c0_22], %50 {strides = array<i32>} : memref<1x8x128xf32, #tpu.memory_space<vmem>>, vector<1x8x128xf32>,
    return
  }
  func.func @transform_0(%arg0: i32) -> (i32, i32, i32, i32) {
    %c0_i32 = arith.constant 0 : i32
    %c0_i32_0 = arith.constant 0 : i32
    %c0_i32_1 = arith.constant 0 : i32
    %c0_i32_2 = arith.constant 0 : i32
    return %arg0, %c0_i32, %c0_i32_0, %c0_i32_1 : i32, i32, i32, i32
  }
  func.func @transform_1(%arg0: i32) -> (i32, i32, i32, i32) {
    %c0_i32 = arith.constant 0 : i32
    %c0_i32_0 = arith.constant 0 : i32
    %c0_i32_1 = arith.constant 0 : i32
    %c0_i32_2 = arith.constant 0 : i32
    return %arg0, %c0_i32, %c0_i32_0, %c0_i32_1 : i32, i32, i32, i32
  }
  func.func @transform_2(%arg0: i32) -> (i32, i32, i32, i32) {
    %c0_i32 = arith.constant 0 : i32
    %c0_i32_0 = arith.constant 0 : i32
    %c0_i32_1 = arith.constant 0 : i32
    %c0_i32_2 = arith.constant 0 : i32
    return %arg0, %c0_i32, %c0_i32_0, %c0_i32_1 : i32, i32, i32, i32
  }
  func.func @transform_3(%arg0: i32) -> (i32, i32, i32) {
    %c0_i32 = arith.constant 0 : i32
    %c0_i32_0 = arith.constant 0 : i32
    %c0_i32_1 = arith.constant 0 : i32
    return %arg0, %c0_i32, %c0_i32_0 : i32, i32, i32
  }
  func.func @transform_4(%arg0: i32) -> (i32, i32, i32) {
    %c0_i32 = arith.constant 0 : i32
    %c0_i32_0 = arith.constant 0 : i32
    %c0_i32_1 = arith.constant 0 : i32
    return %arg0, %c0_i32, %c0_i32_0 : i32, i32, i32
  }
}

module attributes {stable_mosaic.version = 11 : i64} {
  func.func @_cross_qkv_kernel(%arg0: i32, %arg1: memref<16x128xf32, #tpu.memory_space<vmem>>, %arg2: memref<16x128xf32, #tpu.memory_space<vmem>>, %arg3: memref<128x256xbf16, #tpu.memory_space<vmem>>, %arg4: memref<1x256xf32, #tpu.memory_space<vmem>>, %arg5: memref<128x128xbf16, #tpu.memory_space<vmem>>, %arg6: memref<1x128xf32, #tpu.memory_space<vmem>>, %arg7: memref<16x384xf32, #tpu.memory_space<vmem>>) attributes {dimension_semantics = [#tpu.dimension_semantics<parallel>], iteration_bounds = array<i64: 1>, scalar_prefetch = 0 : i64, scratch_operands = 0 : i64, tpu.core_type = #tpu.core_type<tc>, window_params = [{transform_indices = @transform_0, window_bounds = array<i64: 16, 128>}, {transform_indices = @transform_1, window_bounds = array<i64: 16, 128>}, {pipeline_mode = #tpu.pipeline_mode<synchronous>, transform_indices = @transform_2, window_bounds = array<i64: 128, 256>}, {pipeline_mode = #tpu.pipeline_mode<synchronous>, transform_indices = @transform_3, window_bounds = array<i64: 1, 256>}, {pipeline_mode = #tpu.pipeline_mode<synchronous>, transform_indices = @transform_4, window_bounds = array<i64: 128, 128>}, {pipeline_mode = #tpu.pipeline_mode<synchronous>, transform_indices = @transform_5, window_bounds = array<i64: 1, 128>}, {transform_indices = @transform_6, window_bounds = array<i64: 16, 384>}]} {
    %c0 = arith.constant 0 : index
    %c0_0 = arith.constant 0 : index
    %0 = vector.load %arg1[%c0, %c0_0] : memref<16x128xf32, #tpu.memory_space<vmem>>, vector<16x128xf32>
    %1 = arith.truncf %0 : vector<16x128xf32> to vector<16x128xbf16>
    %c0_1 = arith.constant 0 : index
    %c0_2 = arith.constant 0 : index
    %2 = vector.load %arg3[%c0_1, %c0_2] : memref<128x256xbf16, #tpu.memory_space<vmem>>, vector<128x256xbf16>
    %cst = arith.constant dense<0.000000e+00> : vector<16x256xf32>
    %3 = tpu.matmul %1, %2, %cst {dimension_numbers = #tpu.dot_dimension_numbers<[1], [0], [0], [1], [0, 0, 1, 1], [], []>} : vector<16x128xbf16>, vector<128x256xbf16>, vector<16x256xf32> -> vector<16x256xf32>
    %c0_3 = arith.constant 0 : index
    %c0_4 = arith.constant 0 : index
    %4 = vector.load %arg4[%c0_3, %c0_4] : memref<1x256xf32, #tpu.memory_space<vmem>>, vector<1x256xf32>
    %5 = vector.broadcast %4 : vector<1x256xf32> to vector<16x256xf32>
    %6 = arith.addf %3, %5 : vector<16x256xf32>
    %c0_5 = arith.constant 0 : index
    %c0_6 = arith.constant 0 : index
    %7 = vector.load %arg2[%c0_5, %c0_6] : memref<16x128xf32, #tpu.memory_space<vmem>>, vector<16x128xf32>
    %8 = arith.truncf %7 : vector<16x128xf32> to vector<16x128xbf16>
    %c0_7 = arith.constant 0 : index
    %c0_8 = arith.constant 0 : index
    %9 = vector.load %arg5[%c0_7, %c0_8] : memref<128x128xbf16, #tpu.memory_space<vmem>>, vector<128x128xbf16>
    %cst_9 = arith.constant dense<0.000000e+00> : vector<16x128xf32>
    %10 = tpu.matmul %8, %9, %cst_9 {dimension_numbers = #tpu.dot_dimension_numbers<[1], [0], [0], [1], [0, 0, 1, 1], [], []>} : vector<16x128xbf16>, vector<128x128xbf16>, vector<16x128xf32> -> vector<16x128xf32>
    %c0_10 = arith.constant 0 : index
    %c0_11 = arith.constant 0 : index
    %11 = vector.load %arg6[%c0_10, %c0_11] : memref<1x128xf32, #tpu.memory_space<vmem>>, vector<1x128xf32>
    %12 = vector.broadcast %11 : vector<1x128xf32> to vector<16x128xf32>
    %13 = arith.addf %10, %12 : vector<16x128xf32>
    %14 = tpu.concatenate %6, %13 in 1 : vector<16x256xf32>, vector<16x128xf32> -> vector<16x384xf32>
    %c0_12 = arith.constant 0 : index
    %c0_13 = arith.constant 0 : index
    %15 = vector.load %arg7[%c0_12, %c0_13] : memref<16x384xf32, #tpu.memory_space<vmem>>, vector<16x384xf32>
    tpu.vector_store %arg7[%c0_12, %c0_13], %14 {strides = array<i32>} : memref<16x384xf32, #tpu.memory_space<vmem>>, vector<16x384xf32>,
    return
  }
  func.func @transform_0(%arg0: i32) -> (i32, i32) {
    %c0_i32 = arith.constant 0 : i32
    %c0_i32_0 = arith.constant 0 : i32
    return %arg0, %c0_i32 : i32, i32
  }
  func.func @transform_1(%arg0: i32) -> (i32, i32) {
    %c0_i32 = arith.constant 0 : i32
    %c0_i32_0 = arith.constant 0 : i32
    return %arg0, %c0_i32 : i32, i32
  }
  func.func @transform_2(%arg0: i32) -> (i32, i32) {
    %c0_i32 = arith.constant 0 : i32
    %c0_i32_0 = arith.constant 0 : i32
    %c0_i32_1 = arith.constant 0 : i32
    return %c0_i32, %c0_i32_0 : i32, i32
  }
  func.func @transform_3(%arg0: i32) -> (i32, i32) {
    %c0_i32 = arith.constant 0 : i32
    %c0_i32_0 = arith.constant 0 : i32
    %c0_i32_1 = arith.constant 0 : i32
    return %c0_i32, %c0_i32_0 : i32, i32
  }
  func.func @transform_4(%arg0: i32) -> (i32, i32) {
    %c0_i32 = arith.constant 0 : i32
    %c0_i32_0 = arith.constant 0 : i32
    %c0_i32_1 = arith.constant 0 : i32
    return %c0_i32, %c0_i32_0 : i32, i32
  }
  func.func @transform_5(%arg0: i32) -> (i32, i32) {
    %c0_i32 = arith.constant 0 : i32
    %c0_i32_0 = arith.constant 0 : i32
    %c0_i32_1 = arith.constant 0 : i32
    return %c0_i32, %c0_i32_0 : i32, i32
  }
  func.func @transform_6(%arg0: i32) -> (i32, i32) {
    %c0_i32 = arith.constant 0 : i32
    %c0_i32_0 = arith.constant 0 : i32
    return %arg0, %c0_i32 : i32, i32
  }
}

module attributes {stable_mosaic.version = 11 : i64} {
  func.func @_linear_kernel(%arg0: i32, %arg1: memref<16x128xf32, #tpu.memory_space<vmem>>, %arg2: memref<128x256xbf16, #tpu.memory_space<vmem>>, %arg3: memref<1x256xf32, #tpu.memory_space<vmem>>, %arg4: memref<16x256xf32, #tpu.memory_space<vmem>>) attributes {dimension_semantics = [#tpu.dimension_semantics<parallel>], iteration_bounds = array<i64: 1>, scalar_prefetch = 0 : i64, scratch_operands = 0 : i64, tpu.core_type = #tpu.core_type<tc>, window_params = [{transform_indices = @transform_0, window_bounds = array<i64: 16, 128>}, {pipeline_mode = #tpu.pipeline_mode<synchronous>, transform_indices = @transform_1, window_bounds = array<i64: 128, 256>}, {pipeline_mode = #tpu.pipeline_mode<synchronous>, transform_indices = @transform_2, window_bounds = array<i64: 1, 256>}, {transform_indices = @transform_3, window_bounds = array<i64: 16, 256>}]} {
    %c0 = arith.constant 0 : index
    %c0_0 = arith.constant 0 : index
    %0 = vector.load %arg1[%c0, %c0_0] : memref<16x128xf32, #tpu.memory_space<vmem>>, vector<16x128xf32>
    %1 = arith.truncf %0 : vector<16x128xf32> to vector<16x128xbf16>
    %c0_1 = arith.constant 0 : index
    %c0_2 = arith.constant 0 : index
    %2 = vector.load %arg2[%c0_1, %c0_2] : memref<128x256xbf16, #tpu.memory_space<vmem>>, vector<128x256xbf16>
    %cst = arith.constant dense<0.000000e+00> : vector<16x256xf32>
    %3 = tpu.matmul %1, %2, %cst {dimension_numbers = #tpu.dot_dimension_numbers<[1], [0], [0], [1], [0, 0, 1, 1], [], []>} : vector<16x128xbf16>, vector<128x256xbf16>, vector<16x256xf32> -> vector<16x256xf32>
    %c0_3 = arith.constant 0 : index
    %c0_4 = arith.constant 0 : index
    %4 = vector.load %arg3[%c0_3, %c0_4] : memref<1x256xf32, #tpu.memory_space<vmem>>, vector<1x256xf32>
    %5 = vector.broadcast %4 : vector<1x256xf32> to vector<16x256xf32>
    %6 = arith.addf %3, %5 : vector<16x256xf32>
    %c0_5 = arith.constant 0 : index
    %c0_6 = arith.constant 0 : index
    %7 = vector.load %arg4[%c0_5, %c0_6] : memref<16x256xf32, #tpu.memory_space<vmem>>, vector<16x256xf32>
    tpu.vector_store %arg4[%c0_5, %c0_6], %6 {strides = array<i32>} : memref<16x256xf32, #tpu.memory_space<vmem>>, vector<16x256xf32>,
    return
  }
  func.func @transform_0(%arg0: i32) -> (i32, i32) {
    %c0_i32 = arith.constant 0 : i32
    %c0_i32_0 = arith.constant 0 : i32
    return %arg0, %c0_i32 : i32, i32
  }
  func.func @transform_1(%arg0: i32) -> (i32, i32) {
    %c0_i32 = arith.constant 0 : i32
    %c0_i32_0 = arith.constant 0 : i32
    %c0_i32_1 = arith.constant 0 : i32
    return %c0_i32, %c0_i32_0 : i32, i32
  }
  func.func @transform_2(%arg0: i32) -> (i32, i32) {
    %c0_i32 = arith.constant 0 : i32
    %c0_i32_0 = arith.constant 0 : i32
    %c0_i32_1 = arith.constant 0 : i32
    return %c0_i32, %c0_i32_0 : i32, i32
  }
  func.func @transform_3(%arg0: i32) -> (i32, i32) {
    %c0_i32 = arith.constant 0 : i32
    %c0_i32_0 = arith.constant 0 : i32
    return %arg0, %c0_i32 : i32, i32
  }
}

module attributes {stable_mosaic.version = 11 : i64} {
  func.func @_attn_kernel(%arg0: i32, %arg1: memref<1x8x8x16xf32, #tpu.memory_space<vmem>>, %arg2: memref<1x8x8x16xf32, #tpu.memory_space<vmem>>, %arg3: memref<1x8x8x16xf32, #tpu.memory_space<vmem>>, %arg4: memref<1x1x8xf32, #tpu.memory_space<vmem>>, %arg5: memref<1x8x128xf32, #tpu.memory_space<vmem>>) attributes {dimension_semantics = [#tpu.dimension_semantics<parallel>], iteration_bounds = array<i64: 2>, scalar_prefetch = 0 : i64, scratch_operands = 0 : i64, tpu.core_type = #tpu.core_type<tc>, window_params = [{transform_indices = @transform_0, window_bounds = array<i64: 1, 8, 8, 16>}, {transform_indices = @transform_1, window_bounds = array<i64: 1, 8, 8, 16>}, {transform_indices = @transform_2, window_bounds = array<i64: 1, 8, 8, 16>}, {transform_indices = @transform_3, window_bounds = array<i64: 1, 1, 8>}, {transform_indices = @transform_4, window_bounds = array<i64: 1, 8, 128>}]} {
    %c0 = arith.constant 0 : index
    %c0_0 = arith.constant 0 : index
    %c0_1 = arith.constant 0 : index
    %c0_2 = arith.constant 0 : index
    %0 = vector.load %arg1[%c0, %c0_0, %c0_1, %c0_2] : memref<1x8x8x16xf32, #tpu.memory_space<vmem>>, vector<1x8x8x16xf32>
    %1 = vector.shape_cast %0 : vector<1x8x8x16xf32> to vector<8x8x16xf32>
    %2 = arith.truncf %1 : vector<8x8x16xf32> to vector<8x8x16xbf16>
    %c0_3 = arith.constant 0 : index
    %c0_4 = arith.constant 0 : index
    %c0_5 = arith.constant 0 : index
    %c0_6 = arith.constant 0 : index
    %3 = vector.load %arg2[%c0_3, %c0_4, %c0_5, %c0_6] : memref<1x8x8x16xf32, #tpu.memory_space<vmem>>, vector<1x8x8x16xf32>
    %4 = vector.shape_cast %3 : vector<1x8x8x16xf32> to vector<8x8x16xf32>
    %5 = arith.truncf %4 : vector<8x8x16xf32> to vector<8x8x16xbf16>
    %c0_7 = arith.constant 0 : index
    %c0_8 = arith.constant 0 : index
    %c0_9 = arith.constant 0 : index
    %c0_10 = arith.constant 0 : index
    %6 = vector.load %arg3[%c0_7, %c0_8, %c0_9, %c0_10] : memref<1x8x8x16xf32, #tpu.memory_space<vmem>>, vector<1x8x8x16xf32>
    %7 = vector.shape_cast %6 : vector<1x8x8x16xf32> to vector<8x8x16xf32>
    %8 = arith.truncf %7 : vector<8x8x16xf32> to vector<8x8x16xbf16>
    "tpu.trace_start"() <{level = 10 : i32, message = "hqd,hkd->hqk"}> : () -> ()
    %cst = arith.constant dense<0.000000e+00> : vector<8x8x8xf32>
    %9 = tpu.matmul %2, %5, %cst {dimension_numbers = #tpu.dot_dimension_numbers<[2], [2], [1], [1], [0, 0, 0, 1, 1, 1], [0], [0]>} : vector<8x8x16xbf16>, vector<8x8x16xbf16>, vector<8x8x8xf32> -> vector<8x8x8xf32>
    "tpu.trace_stop"() : () -> ()
    %c0_11 = arith.constant 0 : index
    %c0_12 = arith.constant 0 : index
    %c0_13 = arith.constant 0 : index
    %10 = vector.load %arg4[%c0_11, %c0_12, %c0_13] : memref<1x1x8xf32, #tpu.memory_space<vmem>>, vector<1x1x8xf32>
    %cst_14 = arith.constant 0.000000e+00 : f32
    %11 = vector.broadcast %cst_14 : f32 to vector<1x1x8xf32>
    %12 = arith.cmpf one, %10, %11 : vector<1x1x8xf32>
    %13 = tpu.iota {dimensions = array<i32: 1>} : vector<1x8x8xi32>
    %14 = tpu.iota {dimensions = array<i32: 2>} : vector<1x8x8xi32>
    %15 = arith.cmpi sge, %13, %14 : vector<1x8x8xi32>
    %16 = vector.broadcast %12 : vector<1x1x8xi1> to vector<1x8x8xi1>
    %17 = arith.andi %16, %15 : vector<1x8x8xi1>
    %cst_15 = arith.constant -1.000000e+20 : f32
    %18 = vector.shape_cast %17 : vector<1x8x8xi1> to vector<1x8x8xi1>
    %19 = vector.broadcast %18 : vector<1x8x8xi1> to vector<8x8x8xi1>
    %20 = vector.broadcast %cst_15 : f32 to vector<8x8x8xf32>
    %21 = arith.select %19, %9, %20 : vector<8x8x8xi1>, vector<8x8x8xf32>
    %cst_16 = arith.constant 2.500000e-01 : f32
    %22 = vector.broadcast %cst_16 : f32 to vector<8x8x8xf32>
    %23 = arith.mulf %21, %22 : vector<8x8x8xf32>
    %cst_17 = arith.constant dense<0xFF800000> : vector<8x8xf32>
    %24 = vector.multi_reduction <maximumf>, %23, %cst_17 [2] : vector<8x8x8xf32> to vector<8x8xf32>
    %25 = vector.shape_cast %24 : vector<8x8xf32> to vector<8x8x1xf32>
    %26 = vector.broadcast %25 : vector<8x8x1xf32> to vector<8x8x8xf32>
    %27 = arith.subf %23, %26 : vector<8x8x8xf32>
    %28 = math.exp %27 : vector<8x8x8xf32>
    %cst_18 = arith.constant dense<0.000000e+00> : vector<8x8xf32>
    %29 = vector.multi_reduction <add>, %28, %cst_18 [2] : vector<8x8x8xf32> to vector<8x8xf32>
    %30 = vector.shape_cast %29 : vector<8x8xf32> to vector<8x8x1xf32>
    %31 = tpu.reciprocal %30 {approx = true} : vector<8x8x1xf32> -> vector<8x8x1xf32>
    %32 = vector.broadcast %31 : vector<8x8x1xf32> to vector<8x8x8xf32>
    %33 = arith.mulf %28, %32 : vector<8x8x8xf32>
    %34 = arith.truncf %33 : vector<8x8x8xf32> to vector<8x8x8xbf16>
    "tpu.trace_start"() <{level = 10 : i32, message = "hqk,hkd->hqd"}> : () -> ()
    %cst_19 = arith.constant dense<0.000000e+00> : vector<8x8x16xf32>
    %35 = tpu.matmul %34, %8, %cst_19 {dimension_numbers = #tpu.dot_dimension_numbers<[2], [1], [1], [2], [0, 0, 0, 1, 1, 2], [0], [0]>} : vector<8x8x8xbf16>, vector<8x8x16xbf16>, vector<8x8x16xf32> -> vector<8x8x16xf32>
    "tpu.trace_stop"() : () -> ()
    %36 = vector.extract_strided_slice %35 {offsets = [0, 0, 0], sizes = [1, 8, 16], strides = [1, 1, 1]} : vector<8x8x16xf32> to vector<1x8x16xf32>
    %37 = vector.shape_cast %36 : vector<1x8x16xf32> to vector<8x16xf32>
    %38 = vector.extract_strided_slice %35 {offsets = [1, 0, 0], sizes = [1, 8, 16], strides = [1, 1, 1]} : vector<8x8x16xf32> to vector<1x8x16xf32>
    %39 = vector.shape_cast %38 : vector<1x8x16xf32> to vector<8x16xf32>
    %40 = vector.extract_strided_slice %35 {offsets = [2, 0, 0], sizes = [1, 8, 16], strides = [1, 1, 1]} : vector<8x8x16xf32> to vector<1x8x16xf32>
    %41 = vector.shape_cast %40 : vector<1x8x16xf32> to vector<8x16xf32>
    %42 = vector.extract_strided_slice %35 {offsets = [3, 0, 0], sizes = [1, 8, 16], strides = [1, 1, 1]} : vector<8x8x16xf32> to vector<1x8x16xf32>
    %43 = vector.shape_cast %42 : vector<1x8x16xf32> to vector<8x16xf32>
    %44 = vector.extract_strided_slice %35 {offsets = [4, 0, 0], sizes = [1, 8, 16], strides = [1, 1, 1]} : vector<8x8x16xf32> to vector<1x8x16xf32>
    %45 = vector.shape_cast %44 : vector<1x8x16xf32> to vector<8x16xf32>
    %46 = vector.extract_strided_slice %35 {offsets = [5, 0, 0], sizes = [1, 8, 16], strides = [1, 1, 1]} : vector<8x8x16xf32> to vector<1x8x16xf32>
    %47 = vector.shape_cast %46 : vector<1x8x16xf32> to vector<8x16xf32>
    %48 = vector.extract_strided_slice %35 {offsets = [6, 0, 0], sizes = [1, 8, 16], strides = [1, 1, 1]} : vector<8x8x16xf32> to vector<1x8x16xf32>
    %49 = vector.shape_cast %48 : vector<1x8x16xf32> to vector<8x16xf32>
    %50 = vector.extract_strided_slice %35 {offsets = [7, 0, 0], sizes = [1, 8, 16], strides = [1, 1, 1]} : vector<8x8x16xf32> to vector<1x8x16xf32>
    %51 = vector.shape_cast %50 : vector<1x8x16xf32> to vector<8x16xf32>
    %52 = tpu.concatenate %37, %39, %41, %43, %45, %47, %49, %51 in 1 : vector<8x16xf32>, vector<8x16xf32>, vector<8x16xf32>, vector<8x16xf32>, vector<8x16xf32>, vector<8x16xf32>, vector<8x16xf32>, vector<8x16xf32> -> vector<8x128xf32>
    %c0_20 = arith.constant 0 : index
    %c0_21 = arith.constant 0 : index
    %c0_22 = arith.constant 0 : index
    %53 = vector.load %arg5[%c0_20, %c0_21, %c0_22] : memref<1x8x128xf32, #tpu.memory_space<vmem>>, vector<1x8x128xf32>
    %54 = vector.shape_cast %53 : vector<1x8x128xf32> to vector<8x128xf32>
    %55 = vector.shape_cast %52 : vector<8x128xf32> to vector<1x8x128xf32>
    tpu.vector_store %arg5[%c0_20, %c0_21, %c0_22], %55 {strides = array<i32>} : memref<1x8x128xf32, #tpu.memory_space<vmem>>, vector<1x8x128xf32>,
    return
  }
  func.func @transform_0(%arg0: i32) -> (i32, i32, i32, i32) {
    %c0_i32 = arith.constant 0 : i32
    %c0_i32_0 = arith.constant 0 : i32
    %c0_i32_1 = arith.constant 0 : i32
    %c0_i32_2 = arith.constant 0 : i32
    return %arg0, %c0_i32, %c0_i32_0, %c0_i32_1 : i32, i32, i32, i32
  }
  func.func @transform_1(%arg0: i32) -> (i32, i32, i32, i32) {
    %c0_i32 = arith.constant 0 : i32
    %c0_i32_0 = arith.constant 0 : i32
    %c0_i32_1 = arith.constant 0 : i32
    %c0_i32_2 = arith.constant 0 : i32
    return %arg0, %c0_i32, %c0_i32_0, %c0_i32_1 : i32, i32, i32, i32
  }
  func.func @transform_2(%arg0: i32) -> (i32, i32, i32, i32) {
    %c0_i32 = arith.constant 0 : i32
    %c0_i32_0 = arith.constant 0 : i32
    %c0_i32_1 = arith.constant 0 : i32
    %c0_i32_2 = arith.constant 0 : i32
    return %arg0, %c0_i32, %c0_i32_0, %c0_i32_1 : i32, i32, i32, i32
  }
  func.func @transform_3(%arg0: i32) -> (i32, i32, i32) {
    %c0_i32 = arith.constant 0 : i32
    %c0_i32_0 = arith.constant 0 : i32
    %c0_i32_1 = arith.constant 0 : i32
    return %arg0, %c0_i32, %c0_i32_0 : i32, i32, i32
  }
  func.func @transform_4(%arg0: i32) -> (i32, i32, i32) {
    %c0_i32 = arith.constant 0 : i32
    %c0_i32_0 = arith.constant 0 : i32
    %c0_i32_1 = arith.constant 0 : i32
    return %arg0, %c0_i32, %c0_i32_0 : i32, i32, i32
  }
}

</mosaic_0001>

<llo_original>
// kernel: transformer_forward.25
$region0: #{transformer_forward.25}
  #allocation0 [shape = 'u32[]', space=smem, size = 0x4, offset = 0x4, fixed_abs, tag = 'smem constant byte address 0x4 - core index']
  #allocation1 [shape = 'u32[144,128]{1,0:T(1,128)}', space=vmem, size = 0x12000, scoped, tag = 'internal scratch']
  %s0 = inlined_call_operand.vmem [shape: f32[16,128], index: 0, kind: input, shape index: {}]
  %s1 = inlined_call_operand.vmem [shape: bf16[128,128], index: 1, kind: input, shape index: {}]
  %s2 = inlined_call_operand.vmem [shape: f32[1,128], index: 2, kind: input, shape index: {}]
  %s3 = inlined_call_operand.vmem [shape: f32[16,128], index: 3, kind: input, shape index: {}]
  %s4 = inlined_call_operand.vmem [shape: f32[1,128], index: 4, kind: input, shape index: {}]
  %s5 = inlined_call_operand.vmem [shape: f32[1,128], index: 5, kind: input, shape index: {}]
  %s6 = inlined_call_operand.vmem [shape: f32[16,128], index: 6, kind: output, shape index: {}]
  %s7 = sld [smem:[#allocation0]]
  $region34: #{transformer_forward.25} parent=0
    _
  %s9 = ssub.s32 1, %s7
  %s10 = scalar_select 0, %s9, %s7
  // Predicated region
  $region2: #{transformer_forward.25} parent=0 // pred_check
    _
  $region3: #{transformer_forward.25} parent=0 // pred_check_branch
    %12 = sbr.rel (0) target = $region5
  $region4: #{transformer_forward.25} parent=0 // pred_region
    _
  $region5: #{transformer_forward.25} parent=0 // pred_fallthru
    _
  // Predicated region
  $region6: #{transformer_forward.25} parent=0 // pred_check
    _
  $region7: #{transformer_forward.25} parent=0 // pred_check_branch
    %14 = sbr.rel (0) target = $region9
  $region8: #{transformer_forward.25} parent=0 // pred_region
    _
  $region9: #{transformer_forward.25} parent=0 // pred_fallthru
    _
  // Predicated region
  $region10: #{transformer_forward.25} parent=0 // pred_check
    _
  $region11: #{transformer_forward.25} parent=0 // pred_check_branch
    %16 = sbr.rel (0) target = $region13
  $region12: #{transformer_forward.25} parent=0 // pred_region
    _
  $region13: #{transformer_forward.25} parent=0 // pred_fallthru
    _
  // Predicated region
  $region14: #{transformer_forward.25} parent=0 // pred_check
    _
  $region15: #{transformer_forward.25} parent=0 // pred_check_branch
    %18 = sbr.rel (0) target = $region17
  $region16: #{transformer_forward.25} parent=0 // pred_region
    _
  $region17: #{transformer_forward.25} parent=0 // pred_fallthru
    _
  // Predicated region
  $region18: #{transformer_forward.25} parent=0 // pred_check
    _
  $region19: #{transformer_forward.25} parent=0 // pred_check_branch
    %20 = sbr.rel (0) target = $region21
  $region20: #{transformer_forward.25} parent=0 // pred_region
    _
  $region21: #{transformer_forward.25} parent=0 // pred_fallthru
    _
  // Predicated region
  $region22: #{transformer_forward.25} parent=0 // pred_check
    _
  $region23: #{transformer_forward.25} parent=0 // pred_check_branch
    %22 = sbr.rel (0) target = $region25
  $region24: #{transformer_forward.25} parent=0 // pred_region
    _
  $region25: #{transformer_forward.25} parent=0 // pred_fallthru
    _
  %v24 = vld [vmem:[%s0] sm:$0xff]
  %v25 = vld [vmem:[%s0 + $0x8] sm:$0xff]
  %v26 = vpack.c.bf16 %v25, %v24
  %v27 = vld [vmem:[%s1] sm:$0xf]
  %v28 = vld [vmem:[%s1 + $0x4] sm:$0xf]
  %v29 = vld [vmem:[%s1 + $0x8] sm:$0xf]
  %v30 = vld [vmem:[%s1 + $0xc] sm:$0xf]
  %v31 = vld [vmem:[%s1 + $0x10] sm:$0xf]
  %v32 = vld [vmem:[%s1 + $0x14] sm:$0xf]
  %v33 = vld [vmem:[%s1 + $0x18] sm:$0xf]
  %v34 = vld [vmem:[%s1 + $0x1c] sm:$0xf]
  %v35 = vld [vmem:[%s1 + $0x20] sm:$0xf]
  %v36 = vld [vmem:[%s1 + $0x24] sm:$0xf]
  %v37 = vld [vmem:[%s1 + $0x28] sm:$0xf]
  %v38 = vld [vmem:[%s1 + $0x2c] sm:$0xf]
  %v39 = vld [vmem:[%s1 + $0x30] sm:$0xf]
  %v40 = vld [vmem:[%s1 + $0x34] sm:$0xf]
  %v41 = vld [vmem:[%s1 + $0x38] sm:$0xf]
  %v42 = vld [vmem:[%s1 + $0x3c] sm:$0xf]
  %v43 = vld [vmem:[%s2] sm:$0x1]
  %v45 = vlaneseq
  %v46 = vshrl.u32 %v45, 7
  %v47 = vsub.s32 0, %v46
  %v48 = vrot.slane %v43, %v47
  %v66 = vunpack.c.l.b16 %v27
  %v67 = vunpack.c.l.b16 %v28
  %v68 = vunpack.c.l.b16 %v29
  %v69 = vunpack.c.l.b16 %v30
  %v70 = vunpack.c.l.b16 %v31
  %v71 = vunpack.c.l.b16 %v32
  %v72 = vunpack.c.l.b16 %v33
  %v73 = vunpack.c.l.b16 %v34
  %v74 = vunpack.c.l.b16 %v35
  %v75 = vunpack.c.l.b16 %v36
  %v76 = vunpack.c.l.b16 %v37
  %v77 = vunpack.c.l.b16 %v38
  %v78 = vunpack.c.l.b16 %v39
  %v79 = vunpack.c.l.b16 %v40
  %v80 = vunpack.c.l.b16 %v41
  %v81 = vunpack.c.l.b16 %v42
  %v82 = vpack.c.b16 %v67, %v66
  %v83 = vpack.c.b16 %v69, %v68
  %v84 = vpack.c.b16 %v71, %v70
  %v85 = vpack.c.b16 %v73, %v72
  %v86 = vpack.c.b16 %v75, %v74
  %v87 = vpack.c.b16 %v77, %v76
  %v88 = vpack.c.b16 %v79, %v78
  %v89 = vpack.c.b16 %v81, %v80
  %98 = vmatprep.subr.bf16.mxu0 0
  %99 = vmatpush1.bf16.msra.mxu0 %v89
  %100 = vmatprep.subr.bf16.mxu0 0
  %101 = vmatpush1.bf16.msra.mxu0 %v88
  %102 = vmatprep.subr.bf16.mxu0 0
  %103 = vmatpush1.bf16.msra.mxu0 %v87
  %104 = vmatprep.subr.bf16.mxu0 0
  %105 = vmatpush1.bf16.msra.mxu0 %v86
  %106 = vmatprep.subr.bf16.mxu0 0
  %107 = vmatpush1.bf16.msra.mxu0 %v85
  %108 = vmatprep.subr.bf16.mxu0 0
  %109 = vmatpush1.bf16.msra.mxu0 %v84
  %110 = vmatprep.subr.bf16.mxu0 0
  %111 = vmatpush1.bf16.msra.mxu0 %v83
  %112 = vmatprep.subr.bf16.mxu0 0
  %113 = vmatpush1.bf16.msra.mxu0 %v82
  %114 = vmatprep.subr.bf16.mxu0 0
  %115 = vmatpush2.bf16.msra.mxu0 0
  %116 = vmatprep.subr.bf16.mxu0 0
  %117 = vmatpush2.bf16.msra.mxu0 0
  %118 = vmatprep.subr.bf16.mxu0 0
  %119 = vmatpush2.bf16.msra.mxu0 0
  %120 = vmatprep.subr.bf16.mxu0 0
  %121 = vmatpush2.bf16.msra.mxu0 0
  %122 = vmatprep.subr.bf16.mxu0 0
  %123 = vmatpush2.bf16.msra.mxu0 0
  %124 = vmatprep.subr.bf16.mxu0 0
  %125 = vmatpush2.bf16.msra.mxu0 0
  %126 = vmatprep.subr.bf16.mxu0 0
  %127 = vmatpush2.bf16.msra.mxu0 0
  %128 = vmatprep.subr.bf16.mxu0 0
  %129 = vmatpush2.bf16.msra.mxu0 0
  %130 = vmatprep.mubr.bf16.mxu0 0
  %131 = vmatmul.mubr.bf16.gmra.mxu0 %v26
  %v132 = vpop.f32.mrf.mxu0
  %v133 = vadd.f32 %v48, %v132
  %v134 = vpop.f32.mrf.mxu0
  %v135 = vpop.f32.mrf.mxu0
  %v136 = vadd.f32 %v48, %v135
  %v137 = vpop.f32.mrf.mxu0
  %138 = vdwg.mxu0
  %v139 = vld [vmem:[%s3] sm:$0xff]
  %v140 = vld [vmem:[%s3 + $0x8] sm:$0xff]
  %v141 = vadd.f32 %v133, %v139
  %v142 = vadd.f32 %v136, %v140
  %143 = vadd.xlane.f32.xlu0 %v141
  %v144 = vpop.xlane.xlu0 %143
  %145 = vadd.xlane.f32.xlu0 %v142
  %v146 = vpop.xlane.xlu0 %145
  %v147 = vrcp.pop 128.0
  %v148 = vmul.f32 %v144, %v147
  %v149 = vmul.f32 %v146, %v147
  %v150 = vsub.f32 %v141, %v148
  %v151 = vsub.f32 %v142, %v149
  %v152 = vmul.f32 %v150, %v150
  %v153 = vmul.f32 %v151, %v151
  %154 = vadd.xlane.f32.xlu0 %v152
  %v155 = vpop.xlane.xlu0 %154
  %156 = vadd.xlane.f32.xlu0 %v153
  %v157 = vpop.xlane.xlu0 %156
  %v158 = vmul.f32 %v155, %v147
  %v159 = vmul.f32 %v157, %v147
  %v160 = vadd.f32 %v158, 1e-05
  %v161 = vadd.f32 %v159, 1e-05
  %v162 = vrsqrt.pop %v160
  %v163 = vrsqrt.pop %v161
  %v164 = vmul.f32 %v150, %v162
  %v165 = vmul.f32 %v151, %v163
  %v166 = vld [vmem:[%s4] sm:$0x1]
  %v168 = vlaneseq
  %v169 = vshrl.u32 %v168, 7
  %v170 = vsub.s32 0, %v169
  %v171 = vrot.slane %v166, %v170
  %v173 = vmul.f32 %v164, %v171
  %v174 = vmul.f32 %v165, %v171
  %v175 = vld [vmem:[%s5] sm:$0x1]
  %v177 = vlaneseq
  %v178 = vshrl.u32 %v177, 7
  %v179 = vsub.s32 0, %v178
  %v180 = vrot.slane %v175, %v179
  %v182 = vadd.f32 %v173, %v180
  %v183 = vadd.f32 %v174, %v180
  %184 = vst [vmem:[%s6] sm:$0xff] %v182
  %185 = vst [vmem:[%s6 + $0x8] sm:$0xff] %v183
  // Predicated region
  $region26: #{transformer_forward.25} parent=0 // pred_check
    _
  $region27: #{transformer_forward.25} parent=0 // pred_check_branch
    %187 = sbr.rel (0) target = $region29
  $region28: #{transformer_forward.25} parent=0 // pred_region
    _
  $region29: #{transformer_forward.25} parent=0 // pred_fallthru
    _
  // Predicated region
  $region30: #{transformer_forward.25} parent=0 // pred_check
    _
  $region31: #{transformer_forward.25} parent=0 // pred_check_branch
    %189 = sbr.rel (0) target = $region33
  $region32: #{transformer_forward.25} parent=0 // pred_region
    _
  $region33: #{transformer_forward.25} parent=0 // pred_fallthru
    _

// kernel: transformer_forward.23
$region0: #{transformer_forward.23}
  #allocation0 [shape = 'u32[]', space=smem, size = 0x4, offset = 0x4, fixed_abs, tag = 'smem constant byte address 0x4 - core index']
  #allocation1 [shape = 'u32[144,128]{1,0:T(1,128)}', space=vmem, size = 0x12000, scoped, tag = 'internal scratch']
  %s0 = inlined_call_operand.vmem [shape: f32[16,128], index: 0, kind: input, shape index: {}]
  %s1 = inlined_call_operand.vmem [shape: bf16[128,384], index: 1, kind: input, shape index: {}]
  %s2 = inlined_call_operand.vmem [shape: f32[1,384], index: 2, kind: input, shape index: {}]
  %s3 = inlined_call_operand.vmem [shape: f32[16,384], index: 3, kind: output, shape index: {}]
  %s4 = sld [smem:[#allocation0]]
  $region22: #{transformer_forward.23} parent=0
    _
  %s6 = ssub.s32 1, %s4
  %s7 = scalar_select 0, %s6, %s4
  // Predicated region
  $region2: #{transformer_forward.23} parent=0 // pred_check
    _
  $region3: #{transformer_forward.23} parent=0 // pred_check_branch
    %9 = sbr.rel (0) target = $region5
  $region4: #{transformer_forward.23} parent=0 // pred_region
    _
  $region5: #{transformer_forward.23} parent=0 // pred_fallthru
    _
  // Predicated region
  $region6: #{transformer_forward.23} parent=0 // pred_check
    _
  $region7: #{transformer_forward.23} parent=0 // pred_check_branch
    %11 = sbr.rel (0) target = $region9
  $region8: #{transformer_forward.23} parent=0 // pred_region
    _
  $region9: #{transformer_forward.23} parent=0 // pred_fallthru
    _
  // Predicated region
  $region10: #{transformer_forward.23} parent=0 // pred_check
    _
  $region11: #{transformer_forward.23} parent=0 // pred_check_branch
    %13 = sbr.rel (0) target = $region13
  $region12: #{transformer_forward.23} parent=0 // pred_region
    _
  $region13: #{transformer_forward.23} parent=0 // pred_fallthru
    _
  %v15 = vld [vmem:[%s0] sm:$0xff]
  %v16 = vld [vmem:[%s0 + $0x8] sm:$0xff]
  %v17 = vpack.c.bf16 %v16, %v15
  %v18 = vld [vmem:[%s1] sm:$0xff]
  %v19 = vld [vmem:[%s1 + $0x8] sm:$0xf]
  %v20 = vld [vmem:[%s1 + $0xc] sm:$0xff]
  %v21 = vld [vmem:[%s1 + $0x14] sm:$0xf]
  %v22 = vld [vmem:[%s1 + $0x18] sm:$0xff]
  %v23 = vld [vmem:[%s1 + $0x20] sm:$0xf]
  %v24 = vld [vmem:[%s1 + $0x24] sm:$0xff]
  %v25 = vld [vmem:[%s1 + $0x2c] sm:$0xf]
  %v26 = vld [vmem:[%s1 + $0x30] sm:$0xff]
  %v27 = vld [vmem:[%s1 + $0x38] sm:$0xf]
  %v28 = vld [vmem:[%s1 + $0x3c] sm:$0xff]
  %v29 = vld [vmem:[%s1 + $0x44] sm:$0xf]
  %v30 = vld [vmem:[%s1 + $0x48] sm:$0xff]
  %v31 = vld [vmem:[%s1 + $0x50] sm:$0xf]
  %v32 = vld [vmem:[%s1 + $0x54] sm:$0xff]
  %v33 = vld [vmem:[%s1 + $0x5c] sm:$0xf]
  %v34 = vld [vmem:[%s1 + $0x60] sm:$0xff]
  %v35 = vld [vmem:[%s1 + $0x68] sm:$0xf]
  %v36 = vld [vmem:[%s1 + $0x6c] sm:$0xff]
  %v37 = vld [vmem:[%s1 + $0x74] sm:$0xf]
  %v38 = vld [vmem:[%s1 + $0x78] sm:$0xff]
  %v39 = vld [vmem:[%s1 + $0x80] sm:$0xf]
  %v40 = vld [vmem:[%s1 + $0x84] sm:$0xff]
  %v41 = vld [vmem:[%s1 + $0x8c] sm:$0xf]
  %v42 = vld [vmem:[%s1 + $0x90] sm:$0xff]
  %v43 = vld [vmem:[%s1 + $0x98] sm:$0xf]
  %v44 = vld [vmem:[%s1 + $0x9c] sm:$0xff]
  %v45 = vld [vmem:[%s1 + $0xa4] sm:$0xf]
  %v46 = vld [vmem:[%s1 + $0xa8] sm:$0xff]
  %v47 = vld [vmem:[%s1 + $0xb0] sm:$0xf]
  %v48 = vld [vmem:[%s1 + $0xb4] sm:$0xff]
  %v49 = vld [vmem:[%s1 + $0xbc] sm:$0xf]
  %v50 = vld [vmem:[%s2] sm:$0x7]
  %v52 = vlaneseq
  %v53 = vshrl.u32 %v52, 7
  %v54 = vsub.s32 0, %v53
  %v55 = vrot.slane %v50, %v54
  %v56 = vlaneseq
  %v57 = vshrl.u32 %v56, 7
  %v58 = vsub.s32 1, %v57
  %v59 = vrot.slane %v50, %v58
  %v60 = vlaneseq
  %v61 = vshrl.u32 %v60, 7
  %v62 = vsub.s32 2, %v61
  %v63 = vrot.slane %v50, %v62
  %v99 = vunpack.c.l.b16 %v18
  %v100 = vunpack.c.h.b16 %v18
  %v101 = vunpack.c.l.b16 %v19
  %v102 = vunpack.c.l.b16 %v20
  %v103 = vunpack.c.h.b16 %v20
  %v104 = vunpack.c.l.b16 %v21
  %v105 = vunpack.c.l.b16 %v22
  %v106 = vunpack.c.h.b16 %v22
  %v107 = vunpack.c.l.b16 %v23
  %v108 = vunpack.c.l.b16 %v24
  %v109 = vunpack.c.h.b16 %v24
  %v110 = vunpack.c.l.b16 %v25
  %v111 = vunpack.c.l.b16 %v26
  %v112 = vunpack.c.h.b16 %v26
  %v113 = vunpack.c.l.b16 %v27
  %v114 = vunpack.c.l.b16 %v28
  %v115 = vunpack.c.h.b16 %v28
  %v116 = vunpack.c.l.b16 %v29
  %v117 = vunpack.c.l.b16 %v30
  %v118 = vunpack.c.h.b16 %v30
  %v119 = vunpack.c.l.b16 %v31
  %v120 = vunpack.c.l.b16 %v32
  %v121 = vunpack.c.h.b16 %v32
  %v122 = vunpack.c.l.b16 %v33
  %v123 = vunpack.c.l.b16 %v34
  %v124 = vunpack.c.h.b16 %v34
  %v125 = vunpack.c.l.b16 %v35
  %v126 = vunpack.c.l.b16 %v36
  %v127 = vunpack.c.h.b16 %v36
  %v128 = vunpack.c.l.b16 %v37
  %v129 = vunpack.c.l.b16 %v38
  %v130 = vunpack.c.h.b16 %v38
  %v131 = vunpack.c.l.b16 %v39
  %v132 = vunpack.c.l.b16 %v40
  %v133 = vunpack.c.h.b16 %v40
  %v134 = vunpack.c.l.b16 %v41
  %v135 = vunpack.c.l.b16 %v42
  %v136 = vunpack.c.h.b16 %v42
  %v137 = vunpack.c.l.b16 %v43
  %v138 = vunpack.c.l.b16 %v44
  %v139 = vunpack.c.h.b16 %v44
  %v140 = vunpack.c.l.b16 %v45
  %v141 = vunpack.c.l.b16 %v46
  %v142 = vunpack.c.h.b16 %v46
  %v143 = vunpack.c.l.b16 %v47
  %v144 = vunpack.c.l.b16 %v48
  %v145 = vunpack.c.h.b16 %v48
  %v146 = vunpack.c.l.b16 %v49
  %v147 = vpack.c.b16 %v102, %v99
  %v148 = vpack.c.b16 %v103, %v100
  %v149 = vpack.c.b16 %v104, %v101
  %v150 = vpack.c.b16 %v108, %v105
  %v151 = vpack.c.b16 %v109, %v106
  %v152 = vpack.c.b16 %v110, %v107
  %v153 = vpack.c.b16 %v114, %v111
  %v154 = vpack.c.b16 %v115, %v112
  %v155 = vpack.c.b16 %v116, %v113
  %v156 = vpack.c.b16 %v120, %v117
  %v157 = vpack.c.b16 %v121, %v118
  %v158 = vpack.c.b16 %v122, %v119
  %v159 = vpack.c.b16 %v126, %v123
  %v160 = vpack.c.b16 %v127, %v124
  %v161 = vpack.c.b16 %v128, %v125
  %v162 = vpack.c.b16 %v132, %v129
  %v163 = vpack.c.b16 %v133, %v130
  %v164 = vpack.c.b16 %v134, %v131
  %v165 = vpack.c.b16 %v138, %v135
  %v166 = vpack.c.b16 %v139, %v136
  %v167 = vpack.c.b16 %v140, %v137
  %v168 = vpack.c.b16 %v144, %v141
  %v169 = vpack.c.b16 %v145, %v142
  %v170 = vpack.c.b16 %v146, %v143
  %195 = vmatprep.subr.bf16.mxu0 %v169
  %196 = vmatpush1.bf16.msra.mxu0 %v168
  %197 = vmatprep.subr.bf16.mxu0 %v166
  %198 = vmatpush1.bf16.msra.mxu0 %v165
  %199 = vmatprep.subr.bf16.mxu0 %v163
  %200 = vmatpush1.bf16.msra.mxu0 %v162
  %201 = vmatprep.subr.bf16.mxu0 %v160
  %202 = vmatpush1.bf16.msra.mxu0 %v159
  %203 = vmatprep.subr.bf16.mxu0 %v157
  %204 = vmatpush1.bf16.msra.mxu0 %v156
  %205 = vmatprep.subr.bf16.mxu0 %v154
  %206 = vmatpush1.bf16.msra.mxu0 %v153
  %207 = vmatprep.subr.bf16.mxu0 %v151
  %208 = vmatpush1.bf16.msra.mxu0 %v150
  %209 = vmatprep.subr.bf16.mxu0 %v148
  %210 = vmatpush1.bf16.msra.mxu0 %v147
  %211 = vmatprep.subr.bf16.mxu0 0
  %212 = vmatpush2.bf16.msra.mxu0 0
  %213 = vmatprep.subr.bf16.mxu0 0
  %214 = vmatpush2.bf16.msra.mxu0 0
  %215 = vmatprep.subr.bf16.mxu0 0
  %216 = vmatpush2.bf16.msra.mxu0 0
  %217 = vmatprep.subr.bf16.mxu0 0
  %218 = vmatpush2.bf16.msra.mxu0 0
  %219 = vmatprep.subr.bf16.mxu0 0
  %220 = vmatpush2.bf16.msra.mxu0 0
  %221 = vmatprep.subr.bf16.mxu0 0
  %222 = vmatpush2.bf16.msra.mxu0 0
  %223 = vmatprep.subr.bf16.mxu0 0
  %224 = vmatpush2.bf16.msra.mxu0 0
  %225 = vmatprep.subr.bf16.mxu0 0
  %226 = vmatpush2.bf16.msra.mxu0 0
  %227 = vmatprep.mubr.bf16.mxu0 0
  %228 = vmatmul.mubr.bf16.gmra.mxu0 %v17
  %v229 = vpop.f32.mrf.mxu0
  %v230 = vadd.f32 %v55, %v229
  %v231 = vpop.f32.mrf.mxu0
  %v232 = vadd.f32 %v59, %v231
  %v233 = vpop.f32.mrf.mxu0
  %v234 = vadd.f32 %v55, %v233
  %v235 = vpop.f32.mrf.mxu0
  %v236 = vadd.f32 %v59, %v235
  %237 = vdwg.mxu0
  %238 = vmatprep.subr.bf16.mxu0 0
  %239 = vmatpush1.bf16.msra.mxu0 %v170
  %240 = vmatprep.subr.bf16.mxu0 0
  %241 = vmatpush1.bf16.msra.mxu0 %v167
  %242 = vmatprep.subr.bf16.mxu0 0
  %243 = vmatpush1.bf16.msra.mxu0 %v164
  %244 = vmatprep.subr.bf16.mxu0 0
  %245 = vmatpush1.bf16.msra.mxu0 %v161
  %246 = vmatprep.subr.bf16.mxu0 0
  %247 = vmatpush1.bf16.msra.mxu0 %v158
  %248 = vmatprep.subr.bf16.mxu0 0
  %249 = vmatpush1.bf16.msra.mxu0 %v155
  %250 = vmatprep.subr.bf16.mxu0 0
  %251 = vmatpush1.bf16.msra.mxu0 %v152
  %252 = vmatprep.subr.bf16.mxu0 0
  %253 = vmatpush1.bf16.msra.mxu0 %v149
  %254 = vmatprep.subr.bf16.mxu0 0
  %255 = vmatpush2.bf16.msra.mxu0 0
  %256 = vmatprep.subr.bf16.mxu0 0
  %257 = vmatpush2.bf16.msra.mxu0 0
  %258 = vmatprep.subr.bf16.mxu0 0
  %259 = vmatpush2.bf16.msra.mxu0 0
  %260 = vmatprep.subr.bf16.mxu0 0
  %261 = vmatpush2.bf16.msra.mxu0 0
  %262 = vmatprep.subr.bf16.mxu0 0
  %263 = vmatpush2.bf16.msra.mxu0 0
  %264 = vmatprep.subr.bf16.mxu0 0
  %265 = vmatpush2.bf16.msra.mxu0 0
  %266 = vmatprep.subr.bf16.mxu0 0
  %267 = vmatpush2.bf16.msra.mxu0 0
  %268 = vmatprep.subr.bf16.mxu0 0
  %269 = vmatpush2.bf16.msra.mxu0 0
  %270 = vmatprep.mubr.bf16.mxu0 0
  %271 = vmatmul.mubr.bf16.gmra.mxu0 %v17
  %v272 = vpop.f32.mrf.mxu0
  %v273 = vadd.f32 %v63, %v272
  %v274 = vpop.f32.mrf.mxu0
  %v275 = vpop.f32.mrf.mxu0
  %v276 = vadd.f32 %v63, %v275
  %v277 = vpop.f32.mrf.mxu0
  %278 = vdwg.mxu0
  %279 = vst [vmem:[%s3] sm:$0xff] %v230
  %280 = vst [vmem:[%s3 + $0x8] sm:$0xff] %v232
  %281 = vst [vmem:[%s3 + $0x10] sm:$0xff] %v273
  %282 = vst [vmem:[%s3 + $0x18] sm:$0xff] %v234
  %283 = vst [vmem:[%s3 + $0x20] sm:$0xff] %v236
  %284 = vst [vmem:[%s3 + $0x28] sm:$0xff] %v276
  // Predicated region
  $region14: #{transformer_forward.23} parent=0 // pred_check
    _
  $region15: #{transformer_forward.23} parent=0 // pred_check_branch
    %286 = sbr.rel (0) target = $region17
  $region16: #{transformer_forward.23} parent=0 // pred_region
    _
  $region17: #{transformer_forward.23} parent=0 // pred_fallthru
    _
  // Predicated region
  $region18: #{transformer_forward.23} parent=0 // pred_check
    _
  $region19: #{transformer_forward.23} parent=0 // pred_check_branch
    %288 = sbr.rel (0) target = $region21
  $region20: #{transformer_forward.23} parent=0 // pred_region
    _
  $region21: #{transformer_forward.23} parent=0 // pred_fallthru
    _

// kernel: transformer_forward.26
$region0: #{transformer_forward.26}
  #allocation0 [shape = 'u32[]', space=smem, size = 0x4, offset = 0x4, fixed_abs, tag = 'smem constant byte address 0x4 - core index']
  #allocation1 [shape = 'u32[144,128]{1,0:T(1,128)}', space=vmem, size = 0x12000, scoped, tag = 'internal scratch']
  %s0 = inlined_call_operand.vmem [shape: f32[16,128], index: 0, kind: input, shape index: {}]
  %s1 = inlined_call_operand.vmem [shape: bf16[128,128], index: 1, kind: input, shape index: {}]
  %s2 = inlined_call_operand.vmem [shape: f32[1,128], index: 2, kind: input, shape index: {}]
  %s3 = inlined_call_operand.vmem [shape: bf16[128,128], index: 3, kind: input, shape index: {}]
  %s4 = inlined_call_operand.vmem [shape: f32[1,128], index: 4, kind: input, shape index: {}]
  %s5 = inlined_call_operand.vmem [shape: f32[1,128], index: 5, kind: input, shape index: {}]
  %s6 = inlined_call_operand.vmem [shape: f32[1,128], index: 6, kind: input, shape index: {}]
  %s7 = inlined_call_operand.vmem [shape: f32[16,128], index: 7, kind: output, shape index: {}]
  %s8 = sld [smem:[#allocation0]]
  $region38: #{transformer_forward.26} parent=0
    _
  %s10 = ssub.s32 1, %s8
  %s11 = scalar_select 0, %s10, %s8
  // Predicated region
  $region2: #{transformer_forward.26} parent=0 // pred_check
    _
  $region3: #{transformer_forward.26} parent=0 // pred_check_branch
    %13 = sbr.rel (0) target = $region5
  $region4: #{transformer_forward.26} parent=0 // pred_region
    _
  $region5: #{transformer_forward.26} parent=0 // pred_fallthru
    _
  // Predicated region
  $region6: #{transformer_forward.26} parent=0 // pred_check
    _
  $region7: #{transformer_forward.26} parent=0 // pred_check_branch
    %15 = sbr.rel (0) target = $region9
  $region8: #{transformer_forward.26} parent=0 // pred_region
    _
  $region9: #{transformer_forward.26} parent=0 // pred_fallthru
    _
  // Predicated region
  $region10: #{transformer_forward.26} parent=0 // pred_check
    _
  $region11: #{transformer_forward.26} parent=0 // pred_check_branch
    %17 = sbr.rel (0) target = $region13
  $region12: #{transformer_forward.26} parent=0 // pred_region
    _
  $region13: #{transformer_forward.26} parent=0 // pred_fallthru
    _
  // Predicated region
  $region14: #{transformer_forward.26} parent=0 // pred_check
    _
  $region15: #{transformer_forward.26} parent=0 // pred_check_branch
    %19 = sbr.rel (0) target = $region17
  $region16: #{transformer_forward.26} parent=0 // pred_region
    _
  $region17: #{transformer_forward.26} parent=0 // pred_fallthru
    _
  // Predicated region
  $region18: #{transformer_forward.26} parent=0 // pred_check
    _
  $region19: #{transformer_forward.26} parent=0 // pred_check_branch
    %21 = sbr.rel (0) target = $region21
  $region20: #{transformer_forward.26} parent=0 // pred_region
    _
  $region21: #{transformer_forward.26} parent=0 // pred_fallthru
    _
  // Predicated region
  $region22: #{transformer_forward.26} parent=0 // pred_check
    _
  $region23: #{transformer_forward.26} parent=0 // pred_check_branch
    %23 = sbr.rel (0) target = $region25
  $region24: #{transformer_forward.26} parent=0 // pred_region
    _
  $region25: #{transformer_forward.26} parent=0 // pred_fallthru
    _
  // Predicated region
  $region26: #{transformer_forward.26} parent=0 // pred_check
    _
  $region27: #{transformer_forward.26} parent=0 // pred_check_branch
    %25 = sbr.rel (0) target = $region29
  $region28: #{transformer_forward.26} parent=0 // pred_region
    _
  $region29: #{transformer_forward.26} parent=0 // pred_fallthru
    _
  %v27 = vld [vmem:[%s0] sm:$0xff]
  %v28 = vld [vmem:[%s0 + $0x8] sm:$0xff]
  %v29 = vpack.c.bf16 %v28, %v27
  %v30 = vld [vmem:[%s1] sm:$0xf]
  %v31 = vld [vmem:[%s1 + $0x4] sm:$0xf]
  %v32 = vld [vmem:[%s1 + $0x8] sm:$0xf]
  %v33 = vld [vmem:[%s1 + $0xc] sm:$0xf]
  %v34 = vld [vmem:[%s1 + $0x10] sm:$0xf]
  %v35 = vld [vmem:[%s1 + $0x14] sm:$0xf]
  %v36 = vld [vmem:[%s1 + $0x18] sm:$0xf]
  %v37 = vld [vmem:[%s1 + $0x1c] sm:$0xf]
  %v38 = vld [vmem:[%s1 + $0x20] sm:$0xf]
  %v39 = vld [vmem:[%s1 + $0x24] sm:$0xf]
  %v40 = vld [vmem:[%s1 + $0x28] sm:$0xf]
  %v41 = vld [vmem:[%s1 + $0x2c] sm:$0xf]
  %v42 = vld [vmem:[%s1 + $0x30] sm:$0xf]
  %v43 = vld [vmem:[%s1 + $0x34] sm:$0xf]
  %v44 = vld [vmem:[%s1 + $0x38] sm:$0xf]
  %v45 = vld [vmem:[%s1 + $0x3c] sm:$0xf]
  %v46 = vld [vmem:[%s2] sm:$0x1]
  %v48 = vlaneseq
  %v49 = vshrl.u32 %v48, 7
  %v50 = vsub.s32 0, %v49
  %v51 = vrot.slane %v46, %v50
  %v69 = vunpack.c.l.b16 %v30
  %v70 = vunpack.c.l.b16 %v31
  %v71 = vunpack.c.l.b16 %v32
  %v72 = vunpack.c.l.b16 %v33
  %v73 = vunpack.c.l.b16 %v34
  %v74 = vunpack.c.l.b16 %v35
  %v75 = vunpack.c.l.b16 %v36
  %v76 = vunpack.c.l.b16 %v37
  %v77 = vunpack.c.l.b16 %v38
  %v78 = vunpack.c.l.b16 %v39
  %v79 = vunpack.c.l.b16 %v40
  %v80 = vunpack.c.l.b16 %v41
  %v81 = vunpack.c.l.b16 %v42
  %v82 = vunpack.c.l.b16 %v43
  %v83 = vunpack.c.l.b16 %v44
  %v84 = vunpack.c.l.b16 %v45
  %v85 = vpack.c.b16 %v70, %v69
  %v86 = vpack.c.b16 %v72, %v71
  %v87 = vpack.c.b16 %v74, %v73
  %v88 = vpack.c.b16 %v76, %v75
  %v89 = vpack.c.b16 %v78, %v77
  %v90 = vpack.c.b16 %v80, %v79
  %v91 = vpack.c.b16 %v82, %v81
  %v92 = vpack.c.b16 %v84, %v83
  %101 = vmatprep.subr.bf16.mxu0 0
  %102 = vmatpush1.bf16.msra.mxu0 %v92
  %103 = vmatprep.subr.bf16.mxu0 0
  %104 = vmatpush1.bf16.msra.mxu0 %v91
  %105 = vmatprep.subr.bf16.mxu0 0
  %106 = vmatpush1.bf16.msra.mxu0 %v90
  %107 = vmatprep.subr.bf16.mxu0 0
  %108 = vmatpush1.bf16.msra.mxu0 %v89
  %109 = vmatprep.subr.bf16.mxu0 0
  %110 = vmatpush1.bf16.msra.mxu0 %v88
  %111 = vmatprep.subr.bf16.mxu0 0
  %112 = vmatpush1.bf16.msra.mxu0 %v87
  %113 = vmatprep.subr.bf16.mxu0 0
  %114 = vmatpush1.bf16.msra.mxu0 %v86
  %115 = vmatprep.subr.bf16.mxu0 0
  %116 = vmatpush1.bf16.msra.mxu0 %v85
  %117 = vmatprep.subr.bf16.mxu0 0
  %118 = vmatpush2.bf16.msra.mxu0 0
  %119 = vmatprep.subr.bf16.mxu0 0
  %120 = vmatpush2.bf16.msra.mxu0 0
  %121 = vmatprep.subr.bf16.mxu0 0
  %122 = vmatpush2.bf16.msra.mxu0 0
  %123 = vmatprep.subr.bf16.mxu0 0
  %124 = vmatpush2.bf16.msra.mxu0 0
  %125 = vmatprep.subr.bf16.mxu0 0
  %126 = vmatpush2.bf16.msra.mxu0 0
  %127 = vmatprep.subr.bf16.mxu0 0
  %128 = vmatpush2.bf16.msra.mxu0 0
  %129 = vmatprep.subr.bf16.mxu0 0
  %130 = vmatpush2.bf16.msra.mxu0 0
  %131 = vmatprep.subr.bf16.mxu0 0
  %132 = vmatpush2.bf16.msra.mxu0 0
  %133 = vmatprep.mubr.bf16.mxu0 0
  %134 = vmatmul.mubr.bf16.gmra.mxu0 %v29
  %v135 = vpop.f32.mrf.mxu0
  %v136 = vadd.f32 %v51, %v135
  %v137 = vpop.f32.mrf.mxu0
  %v138 = vpop.f32.mrf.mxu0
  %v139 = vadd.f32 %v51, %v138
  %v140 = vpop.f32.mrf.mxu0
  %141 = vdwg.mxu0
  %v142 = vmax.f32 %v136, 0.0
  %v143 = vmax.f32 %v139, 0.0
  %v144 = vpack.c.bf16 %v143, %v142
  %v145 = vld [vmem:[%s3] sm:$0xf]
  %v146 = vld [vmem:[%s3 + $0x4] sm:$0xf]
  %v147 = vld [vmem:[%s3 + $0x8] sm:$0xf]
  %v148 = vld [vmem:[%s3 + $0xc] sm:$0xf]
  %v149 = vld [vmem:[%s3 + $0x10] sm:$0xf]
  %v150 = vld [vmem:[%s3 + $0x14] sm:$0xf]
  %v151 = vld [vmem:[%s3 + $0x18] sm:$0xf]
  %v152 = vld [vmem:[%s3 + $0x1c] sm:$0xf]
  %v153 = vld [vmem:[%s3 + $0x20] sm:$0xf]
  %v154 = vld [vmem:[%s3 + $0x24] sm:$0xf]
  %v155 = vld [vmem:[%s3 + $0x28] sm:$0xf]
  %v156 = vld [vmem:[%s3 + $0x2c] sm:$0xf]
  %v157 = vld [vmem:[%s3 + $0x30] sm:$0xf]
  %v158 = vld [vmem:[%s3 + $0x34] sm:$0xf]
  %v159 = vld [vmem:[%s3 + $0x38] sm:$0xf]
  %v160 = vld [vmem:[%s3 + $0x3c] sm:$0xf]
  %v161 = vld [vmem:[%s4] sm:$0x1]
  %v163 = vlaneseq
  %v164 = vshrl.u32 %v163, 7
  %v165 = vsub.s32 0, %v164
  %v166 = vrot.slane %v161, %v165
  %v184 = vunpack.c.l.b16 %v145
  %v185 = vunpack.c.l.b16 %v146
  %v186 = vunpack.c.l.b16 %v147
  %v187 = vunpack.c.l.b16 %v148
  %v188 = vunpack.c.l.b16 %v149
  %v189 = vunpack.c.l.b16 %v150
  %v190 = vunpack.c.l.b16 %v151
  %v191 = vunpack.c.l.b16 %v152
  %v192 = vunpack.c.l.b16 %v153
  %v193 = vunpack.c.l.b16 %v154
  %v194 = vunpack.c.l.b16 %v155
  %v195 = vunpack.c.l.b16 %v156
  %v196 = vunpack.c.l.b16 %v157
  %v197 = vunpack.c.l.b16 %v158
  %v198 = vunpack.c.l.b16 %v159
  %v199 = vunpack.c.l.b16 %v160
  %v200 = vpack.c.b16 %v185, %v184
  %v201 = vpack.c.b16 %v187, %v186
  %v202 = vpack.c.b16 %v189, %v188
  %v203 = vpack.c.b16 %v191, %v190
  %v204 = vpack.c.b16 %v193, %v192
  %v205 = vpack.c.b16 %v195, %v194
  %v206 = vpack.c.b16 %v197, %v196
  %v207 = vpack.c.b16 %v199, %v198
  %216 = vmatprep.subr.bf16.mxu0 0
  %217 = vmatpush1.bf16.msra.mxu0 %v207
  %218 = vmatprep.subr.bf16.mxu0 0
  %219 = vmatpush1.bf16.msra.mxu0 %v206
  %220 = vmatprep.subr.bf16.mxu0 0
  %221 = vmatpush1.bf16.msra.mxu0 %v205
  %222 = vmatprep.subr.bf16.mxu0 0
  %223 = vmatpush1.bf16.msra.mxu0 %v204
  %224 = vmatprep.subr.bf16.mxu0 0
  %225 = vmatpush1.bf16.msra.mxu0 %v203
  %226 = vmatprep.subr.bf16.mxu0 0
  %227 = vmatpush1.bf16.msra.mxu0 %v202
  %228 = vmatprep.subr.bf16.mxu0 0
  %229 = vmatpush1.bf16.msra.mxu0 %v201
  %230 = vmatprep.subr.bf16.mxu0 0
  %231 = vmatpush1.bf16.msra.mxu0 %v200
  %232 = vmatprep.subr.bf16.mxu0 0
  %233 = vmatpush2.bf16.msra.mxu0 0
  %234 = vmatprep.subr.bf16.mxu0 0
  %235 = vmatpush2.bf16.msra.mxu0 0
  %236 = vmatprep.subr.bf16.mxu0 0
  %237 = vmatpush2.bf16.msra.mxu0 0
  %238 = vmatprep.subr.bf16.mxu0 0
  %239 = vmatpush2.bf16.msra.mxu0 0
  %240 = vmatprep.subr.bf16.mxu0 0
  %241 = vmatpush2.bf16.msra.mxu0 0
  %242 = vmatprep.subr.bf16.mxu0 0
  %243 = vmatpush2.bf16.msra.mxu0 0
  %244 = vmatprep.subr.bf16.mxu0 0
  %245 = vmatpush2.bf16.msra.mxu0 0
  %246 = vmatprep.subr.bf16.mxu0 0
  %247 = vmatpush2.bf16.msra.mxu0 0
  %248 = vmatprep.mubr.bf16.mxu0 0
  %249 = vmatmul.mubr.bf16.gmra.mxu0 %v144
  %v250 = vpop.f32.mrf.mxu0
  %v251 = vadd.f32 %v166, %v250
  %v252 = vpop.f32.mrf.mxu0
  %v253 = vpop.f32.mrf.mxu0
  %v254 = vadd.f32 %v166, %v253
  %v255 = vpop.f32.mrf.mxu0
  %256 = vdwg.mxu0
  %v257 = vadd.f32 %v27, %v251
  %v258 = vadd.f32 %v28, %v254
  %259 = vadd.xlane.f32.xlu0 %v257
  %v260 = vpop.xlane.xlu0 %259
  %261 = vadd.xlane.f32.xlu0 %v258
  %v262 = vpop.xlane.xlu0 %261
  %v263 = vrcp.pop 128.0
  %v264 = vmul.f32 %v260, %v263
  %v265 = vmul.f32 %v262, %v263
  %v266 = vsub.f32 %v257, %v264
  %v267 = vsub.f32 %v258, %v265
  %v268 = vmul.f32 %v266, %v266
  %v269 = vmul.f32 %v267, %v267
  %270 = vadd.xlane.f32.xlu0 %v268
  %v271 = vpop.xlane.xlu0 %270
  %272 = vadd.xlane.f32.xlu0 %v269
  %v273 = vpop.xlane.xlu0 %272
  %v274 = vmul.f32 %v271, %v263
  %v275 = vmul.f32 %v273, %v263
  %v276 = vadd.f32 %v274, 1e-05
  %v277 = vadd.f32 %v275, 1e-05
  %v278 = vrsqrt.pop %v276
  %v279 = vrsqrt.pop %v277
  %v280 = vmul.f32 %v266, %v278
  %v281 = vmul.f32 %v267, %v279
  %v282 = vld [vmem:[%s5] sm:$0x1]
  %v284 = vlaneseq
  %v285 = vshrl.u32 %v284, 7
  %v286 = vsub.s32 0, %v285
  %v287 = vrot.slane %v282, %v286
  %v289 = vmul.f32 %v280, %v287
  %v290 = vmul.f32 %v281, %v287
  %v291 = vld [vmem:[%s6] sm:$0x1]
  %v293 = vlaneseq
  %v294 = vshrl.u32 %v293, 7
  %v295 = vsub.s32 0, %v294
  %v296 = vrot.slane %v291, %v295
  %v298 = vadd.f32 %v289, %v296
  %v299 = vadd.f32 %v290, %v296
  %300 = vst [vmem:[%s7] sm:$0xff] %v298
  %301 = vst [vmem:[%s7 + $0x8] sm:$0xff] %v299
  // Predicated region
  $region30: #{transformer_forward.26} parent=0 // pred_check
    _
  $region31: #{transformer_forward.26} parent=0 // pred_check_branch
    %303 = sbr.rel (0) target = $region33
  $region32: #{transformer_forward.26} parent=0 // pred_region
    _
  $region33: #{transformer_forward.26} parent=0 // pred_fallthru
    _
  // Predicated region
  $region34: #{transformer_forward.26} parent=0 // pred_check
    _
  $region35: #{transformer_forward.26} parent=0 // pred_check_branch
    %305 = sbr.rel (0) target = $region37
  $region36: #{transformer_forward.26} parent=0 // pred_region
    _
  $region37: #{transformer_forward.26} parent=0 // pred_fallthru
    _

// kernel: transformer_forward.24
$region0: #{transformer_forward.24}
  #allocation0 [shape = 'u32[]', space=smem, size = 0x4, offset = 0x4, fixed_abs, tag = 'smem constant byte address 0x4 - core index']
  #allocation1 [shape = 'u32[144,128]{1,0:T(1,128)}', space=vmem, size = 0x12000, scoped, tag = 'internal scratch']
  %s0 = inlined_call_operand.vmem [shape: f32[2,8,8,16], index: 0, kind: input, shape index: {}]
  %s1 = inlined_call_operand.vmem [shape: f32[2,8,8,16], index: 1, kind: input, shape index: {}]
  %s2 = inlined_call_operand.vmem [shape: f32[2,8,8,16], index: 2, kind: input, shape index: {}]
  %s3 = inlined_call_operand.vmem [shape: f32[2,1,8], index: 3, kind: input, shape index: {}]
  %s4 = inlined_call_operand.vmem [shape: f32[2,8,128], index: 4, kind: output, shape index: {}]
  %s5 = sld [smem:[#allocation0]]
  $region49: #{transformer_forward.24} parent=0
    _
  %s7 = ssub.s32 1, %s5
  %s8 = scalar_select 0, %s7, %s5
  loop: start=0, step=1, limit=4
  $region2: #{transformer_forward.24} parent=0 // loop_pre_header
    _
  $region3: #{transformer_forward.24} parent=0 // loop_header
    %s10 = sphi 0, %s14
    %p11 = scmp.ge.s32.totalorder %s10, 4
    %s20 = sphi 0, %s22
    %s23 = sphi 0, %s20
    %s24 = sphi 0, %s23
    %s40 = sphi 0, %s24
    %s46 = sphi 0, %s48
    %s49 = sphi 0, %s46
    %s50 = sphi 0, %s49
    %s66 = sphi 0, %s50
    %s72 = sphi 0, %s74
    %s75 = sphi 0, %s72
    %s76 = sphi 0, %s75
    %s92 = sphi 0, %s76
    %s98 = sphi 0, %s100
    %s101 = sphi 0, %s98
    %s102 = sphi 0, %s101
    %s118 = sphi 0, %s102
    %s124 = sphi 0, %s126
    %s127 = sphi 0, %s124
    %s128 = sphi 0, %s127
    %s144 = sphi 0, %s128
  $region4: #{transformer_forward.24} parent=0 // loop_header_branch
    %13 = sbr.rel (%p11) target = $region8
  $region5: #{transformer_forward.24} parent=0 // loop_body
    %s15 = ssub.s32 %s10, 1
    %s16 = ssub.s32 %s10, 2
    %s17 = sadd.s32 %s10, 1
    %s18 = ssub.s32 %s10, %s17
    %p19 = scmp.eq.s32.totalorder %s18, 0
    %s21 = sadd.s32 %s20, 1
    %s22 = scalar_select %p19, %s20, %s21
    %p25 = pneg %p19
    %p26 = scmp.eq.s32.totalorder %s10, 1
    %p27 = por %p25, %p26
    %p28 = scmp.ne.s32.totalorder %s20, %s23
    %p29 = scmp.eq.s32.totalorder %s10, 0
    %p30 = por %p28, %p29
    %p31 = scmp.ne.s32.totalorder %s20, %s23
    %p32 = scmp.eq.s32.totalorder %s15, 1
    %p33 = por %p31, %p32
    %p34 = scmp.ne.s32.totalorder %s23, %s24
    %p35 = scmp.eq.s32.totalorder %s15, 0
    %p36 = por %p34, %p35
    %p37 = scmp.ne.s32.totalorder %s23, %s24
    %p38 = scmp.eq.s32.totalorder %s16, 1
    %p39 = por %p37, %p38
    %p41 = scmp.ne.s32.totalorder %s24, %s40
    %p42 = scmp.eq.s32.totalorder %s16, 0
    %p43 = por %p41, %p42
    %s44 = ssub.s32 %s10, %s17
    %p45 = scmp.eq.s32.totalorder %s44, 0
    %s47 = sadd.s32 %s46, 1
    %s48 = scalar_select %p45, %s46, %s47
    %p51 = pneg %p45
    %p52 = scmp.eq.s32.totalorder %s10, 1
    %p53 = por %p51, %p52
    %p54 = scmp.ne.s32.totalorder %s46, %s49
    %p55 = scmp.eq.s32.totalorder %s10, 0
    %p56 = por %p54, %p55
    %p57 = scmp.ne.s32.totalorder %s46, %s49
    %p58 = scmp.eq.s32.totalorder %s15, 1
    %p59 = por %p57, %p58
    %p60 = scmp.ne.s32.totalorder %s49, %s50
    %p61 = scmp.eq.s32.totalorder %s15, 0
    %p62 = por %p60, %p61
    %p63 = scmp.ne.s32.totalorder %s49, %s50
    %p64 = scmp.eq.s32.totalorder %s16, 1
    %p65 = por %p63, %p64
    %p67 = scmp.ne.s32.totalorder %s50, %s66
    %p68 = scmp.eq.s32.totalorder %s16, 0
    %p69 = por %p67, %p68
    %s70 = ssub.s32 %s10, %s17
    %p71 = scmp.eq.s32.totalorder %s70, 0
    %s73 = sadd.s32 %s72, 1
    %s74 = scalar_select %p71, %s72, %s73
    %p77 = pneg %p71
    %p78 = scmp.eq.s32.totalorder %s10, 1
    %p79 = por %p77, %p78
    %p80 = scmp.ne.s32.totalorder %s72, %s75
    %p81 = scmp.eq.s32.totalorder %s10, 0
    %p82 = por %p80, %p81
    %p83 = scmp.ne.s32.totalorder %s72, %s75
    %p84 = scmp.eq.s32.totalorder %s15, 1
    %p85 = por %p83, %p84
    %p86 = scmp.ne.s32.totalorder %s75, %s76
    %p87 = scmp.eq.s32.totalorder %s15, 0
    %p88 = por %p86, %p87
    %p89 = scmp.ne.s32.totalorder %s75, %s76
    %p90 = scmp.eq.s32.totalorder %s16, 1
    %p91 = por %p89, %p90
    %p93 = scmp.ne.s32.totalorder %s76, %s92
    %p94 = scmp.eq.s32.totalorder %s16, 0
    %p95 = por %p93, %p94
    %s96 = ssub.s32 %s10, %s17
    %p97 = scmp.eq.s32.totalorder %s96, 0
    %s99 = sadd.s32 %s98, 1
    %s100 = scalar_select %p97, %s98, %s99
    %p103 = pneg %p97
    %p104 = scmp.eq.s32.totalorder %s10, 1
    %p105 = por %p103, %p104
    %p106 = scmp.ne.s32.totalorder %s98, %s101
    %p107 = scmp.eq.s32.totalorder %s10, 0
    %p108 = por %p106, %p107
    %p109 = scmp.ne.s32.totalorder %s98, %s101
    %p110 = scmp.eq.s32.totalorder %s15, 1
    %p111 = por %p109, %p110
    %p112 = scmp.ne.s32.totalorder %s101, %s102
    %p113 = scmp.eq.s32.totalorder %s15, 0
    %p114 = por %p112, %p113
    %p115 = scmp.ne.s32.totalorder %s101, %s102
    %p116 = scmp.eq.s32.totalorder %s16, 1
    %p117 = por %p115, %p116
    %p119 = scmp.ne.s32.totalorder %s102, %s118
    %p120 = scmp.eq.s32.totalorder %s16, 0
    %p121 = por %p119, %p120
    %s122 = ssub.s32 %s10, %s17
    %p123 = scmp.eq.s32.totalorder %s122, 0
    %s125 = sadd.s32 %s124, 1
    %s126 = scalar_select %p123, %s124, %s125
    %p129 = pneg %p123
    %p130 = scmp.eq.s32.totalorder %s10, 1
    %p131 = por %p129, %p130
    %p132 = scmp.ne.s32.totalorder %s124, %s127
    %p133 = scmp.eq.s32.totalorder %s10, 0
    %p134 = por %p132, %p133
    %p135 = scmp.ne.s32.totalorder %s124, %s127
    %p136 = scmp.eq.s32.totalorder %s15, 1
    %p137 = por %p135, %p136
    %p138 = scmp.ne.s32.totalorder %s127, %s128
    %p139 = scmp.eq.s32.totalorder %s15, 0
    %p140 = por %p138, %p139
    %p141 = scmp.ne.s32.totalorder %s127, %s128
    %p142 = scmp.eq.s32.totalorder %s16, 1
    %p143 = por %p141, %p142
    %p145 = scmp.ne.s32.totalorder %s128, %s144
    %p146 = scmp.eq.s32.totalorder %s16, 0
    %p147 = por %p145, %p146
    %p148 = scmp.le.s32.totalorder 1, %s10
    %p149 = scmp.lt.s32.totalorder %s10, 3
    %p150 = pnand %p148, %p149
    %p151 = pneg %p150
    // Predicated region
    $region9: #{transformer_forward.24} parent=5 // pred_check
      _
    $region10: #{transformer_forward.24} parent=5 // pred_check_branch
      %153 = sbr.rel (%p150) target = $region12
    $region11: #{transformer_forward.24} parent=5 // pred_region
      %s154 = ssub.s32 %s10, 1
    $region12: #{transformer_forward.24} parent=5 // pred_fallthru
      _
    %p155 = scmp.lt.s32.totalorder %s10, 2
    // Predicated region
    $region13: #{transformer_forward.24} parent=5 // pred_check
      %p156 = pneg %p155
    $region14: #{transformer_forward.24} parent=5 // pred_check_branch
      %158 = sbr.rel (%p156) target = $region16
    $region15: #{transformer_forward.24} parent=5 // pred_region
      // Predicated region
      $region17: #{transformer_forward.24} parent=15 // pred_check
        %p159 = pneg %p30
      $region18: #{transformer_forward.24} parent=15 // pred_check_branch
        %161 = sbr.rel (%p159) target = $region20
      $region19: #{transformer_forward.24} parent=15 // pred_region
        %p162 = scmp.lt.s32.totalorder %s10, 1
        %s163 = scalar_select %p162, %s10, 1
        %s164 = smul.addr %s163, 8
        %s165 = smul.addr %s164, 8
        %s166 = scalar_lea.vmem %s0, %s165
      $region20: #{transformer_forward.24} parent=15 // pred_fallthru
        _
      // Predicated region
      $region21: #{transformer_forward.24} parent=15 // pred_check
        %p167 = pneg %p56
      $region22: #{transformer_forward.24} parent=15 // pred_check_branch
        %169 = sbr.rel (%p167) target = $region24
      $region23: #{transformer_forward.24} parent=15 // pred_region
        %p170 = scmp.lt.s32.totalorder %s10, 1
        %s171 = scalar_select %p170, %s10, 1
        %s172 = smul.addr %s171, 8
        %s173 = smul.addr %s172, 8
        %s174 = scalar_lea.vmem %s1, %s173
      $region24: #{transformer_forward.24} parent=15 // pred_fallthru
        _
      // Predicated region
      $region25: #{transformer_forward.24} parent=15 // pred_check
        %p175 = pneg %p82
      $region26: #{transformer_forward.24} parent=15 // pred_check_branch
        %177 = sbr.rel (%p175) target = $region28
      $region27: #{transformer_forward.24} parent=15 // pred_region
        %p178 = scmp.lt.s32.totalorder %s10, 1
        %s179 = scalar_select %p178, %s10, 1
        %s180 = smul.addr %s179, 8
        %s181 = smul.addr %s180, 8
        %s182 = scalar_lea.vmem %s2, %s181
      $region28: #{transformer_forward.24} parent=15 // pred_fallthru
        _
      // Predicated region
      $region29: #{transformer_forward.24} parent=15 // pred_check
        %p183 = pneg %p108
      $region30: #{transformer_forward.24} parent=15 // pred_check_branch
        %185 = sbr.rel (%p183) target = $region32
      $region31: #{transformer_forward.24} parent=15 // pred_region
        %p186 = scmp.lt.s32.totalorder %s10, 1
        %s187 = scalar_select %p186, %s10, 1
        %s188 = scalar_lea.vmem %s3, %s187
      $region32: #{transformer_forward.24} parent=15 // pred_fallthru
        _
    $region16: #{transformer_forward.24} parent=5 // pred_fallthru
      _
    %p189 = scmp.le.s32.totalorder 1, %s10
    %p190 = scmp.lt.s32.totalorder %s10, 3
    %p191 = pnand %p189, %p190
    %p192 = pneg %p191
    // Predicated region
    $region33: #{transformer_forward.24} parent=5 // pred_check
      _
    $region34: #{transformer_forward.24} parent=5 // pred_check_branch
      %194 = sbr.rel (%p191) target = $region36
    $region35: #{transformer_forward.24} parent=5 // pred_region
      %s195 = ssub.s32 %s10, 1
      %p196 = scmp.lt.s32.totalorder %s15, 1
      %s197 = scalar_select %p196, %s15, 1
      %s198 = smul.addr %s197, 8
      %s199 = smul.addr %s198, 8
      %s200 = scalar_lea.vmem %s0, %s199
      %p201 = pneg %p36
      %p202 = pneg %p33
      %p203 = scmp.lt.s32.totalorder %s15, 1
      %s204 = scalar_select %p203, %s15, 1
      %s205 = smul.addr %s204, 8
      %s206 = smul.addr %s205, 8
      %s207 = scalar_lea.vmem %s1, %s206
      %p208 = pneg %p62
      %p209 = pneg %p59
      %p210 = scmp.lt.s32.totalorder %s15, 1
      %s211 = scalar_select %p210, %s15, 1
      %s212 = smul.addr %s211, 8
      %s213 = smul.addr %s212, 8
      %s214 = scalar_lea.vmem %s2, %s213
      %p215 = pneg %p88
      %p216 = pneg %p85
      %p217 = scmp.lt.s32.totalorder %s15, 1
      %s218 = scalar_select %p217, %s15, 1
      %s219 = scalar_lea.vmem %s3, %s218
      %p220 = pneg %p114
      %p221 = pneg %p111
      %p222 = pneg %p140
      %p223 = pneg %p137
      %p224 = scmp.lt.s32.totalorder %s15, 1
      %s225 = scalar_select %p224, %s15, 1
      %s226 = smul.addr %s225, 8
      %s227 = scalar_lea.vmem %s4, %s226
      %p228 = scmp.lt.s32.totalorder %s15, 1
      %s229 = scalar_select %p228, %s15, 1
      %s230 = smul.addr %s229, 8
      %s231 = smul.addr %s230, 8
      %s232 = scalar_lea.vmem %s0, %s231
      %p233 = scmp.lt.s32.totalorder %s15, 1
      %s234 = scalar_select %p233, %s15, 1
      %s235 = smul.addr %s234, 8
      %s236 = smul.addr %s235, 8
      %s237 = scalar_lea.vmem %s1, %s236
      %p238 = scmp.lt.s32.totalorder %s15, 1
      %s239 = scalar_select %p238, %s15, 1
      %s240 = smul.addr %s239, 8
      %s241 = smul.addr %s240, 8
      %s242 = scalar_lea.vmem %s2, %s241
      %p243 = scmp.lt.s32.totalorder %s15, 1
      %s244 = scalar_select %p243, %s15, 1
      %s245 = scalar_lea.vmem %s3, %s244
      %p246 = scmp.lt.s32.totalorder %s15, 1
      %s247 = scalar_select %p246, %s15, 1
      %s248 = smul.addr %s247, 8
      %s249 = scalar_lea.vmem %s4, %s248
      %v251 = vld [vmem:[%s232] sm:$0xff]
      %v252 = vld [vmem:[%s232 + $0x8] sm:$0xff]
      %v253 = vld [vmem:[%s232 + $0x10] sm:$0xff]
      %v254 = vld [vmem:[%s232 + $0x18] sm:$0xff]
      %v255 = vld [vmem:[%s232 + $0x20] sm:$0xff]
      %v256 = vld [vmem:[%s232 + $0x28] sm:$0xff]
      %v257 = vld [vmem:[%s232 + $0x30] sm:$0xff]
      %v258 = vld [vmem:[%s232 + $0x38] sm:$0xff]
      %v259 = vpack.c.bf16 %v251, %v251
      %v260 = vpack.c.bf16 %v252, %v252
      %v261 = vpack.c.bf16 %v253, %v253
      %v262 = vpack.c.bf16 %v254, %v254
      %v263 = vpack.c.bf16 %v255, %v255
      %v264 = vpack.c.bf16 %v256, %v256
      %v265 = vpack.c.bf16 %v257, %v257
      %v266 = vpack.c.bf16 %v258, %v258
      %v267 = vld [vmem:[%s237] sm:$0xff]
      %v268 = vld [vmem:[%s237 + $0x8] sm:$0xff]
      %v269 = vld [vmem:[%s237 + $0x10] sm:$0xff]
      %v270 = vld [vmem:[%s237 + $0x18] sm:$0xff]
      %v271 = vld [vmem:[%s237 + $0x20] sm:$0xff]
      %v272 = vld [vmem:[%s237 + $0x28] sm:$0xff]
      %v273 = vld [vmem:[%s237 + $0x30] sm:$0xff]
      %v274 = vld [vmem:[%s237 + $0x38] sm:$0xff]
      %v275 = vpack.c.bf16 %v267, %v267
      %v276 = vpack.c.bf16 %v268, %v268
      %v277 = vpack.c.bf16 %v269, %v269
      %v278 = vpack.c.bf16 %v270, %v270
      %v279 = vpack.c.bf16 %v271, %v271
      %v280 = vpack.c.bf16 %v272, %v272
      %v281 = vpack.c.bf16 %v273, %v273
      %v282 = vpack.c.bf16 %v274, %v274
      %v283 = vld [vmem:[%s242] sm:$0xff]
      %v284 = vld [vmem:[%s242 + $0x8] sm:$0xff]
      %v285 = vld [vmem:[%s242 + $0x10] sm:$0xff]
      %v286 = vld [vmem:[%s242 + $0x18] sm:$0xff]
      %v287 = vld [vmem:[%s242 + $0x20] sm:$0xff]
      %v288 = vld [vmem:[%s242 + $0x28] sm:$0xff]
      %v289 = vld [vmem:[%s242 + $0x30] sm:$0xff]
      %v290 = vld [vmem:[%s242 + $0x38] sm:$0xff]
      %v291 = vpack.c.bf16 %v283, %v283
      %v292 = vpack.c.bf16 %v284, %v284
      %v293 = vpack.c.bf16 %v285, %v285
      %v294 = vpack.c.bf16 %v286, %v286
      %v295 = vpack.c.bf16 %v287, %v287
      %v296 = vpack.c.bf16 %v288, %v288
      %v297 = vpack.c.bf16 %v289, %v289
      %v298 = vpack.c.bf16 %v290, %v290
      %vm299 = vcmask 130048
      %v301 = vsel %vm299, %v259, 0
      %v304 = vsel %vm299, %v275, 0
      %306 = vmatprep.subr.bf16.mxu0 0
      %307 = vmatpush1.bf16.xpose.msra.mxu0 0
      %308 = vmatprep.subr.bf16.mxu0 0
      %309 = vmatpush1.bf16.xpose.msra.mxu0 0
      %310 = vmatprep.subr.bf16.mxu0 0
      %311 = vmatpush1.bf16.xpose.msra.mxu0 0
      %312 = vmatprep.subr.bf16.mxu0 0
      %313 = vmatpush1.bf16.xpose.msra.mxu0 0
      %314 = vmatprep.subr.bf16.mxu0 0
      %315 = vmatpush1.bf16.xpose.msra.mxu0 0
      %316 = vmatprep.subr.bf16.mxu0 0
      %317 = vmatpush1.bf16.xpose.msra.mxu0 0
      %318 = vmatprep.subr.bf16.mxu0 0
      %319 = vmatpush1.bf16.xpose.msra.mxu0 0
      %320 = vmatprep.subr.bf16.mxu0 0
      %321 = vmatpush1.bf16.xpose.msra.mxu0 %v304
      %322 = vmatprep.subr.bf16.mxu0 0
      %323 = vmatpush2.bf16.xpose.msra.mxu0 0
      %324 = vmatprep.subr.bf16.mxu0 0
      %325 = vmatpush2.bf16.xpose.msra.mxu0 0
      %326 = vmatprep.subr.bf16.mxu0 0
      %327 = vmatpush2.bf16.xpose.msra.mxu0 0
      %328 = vmatprep.subr.bf16.mxu0 0
      %329 = vmatpush2.bf16.xpose.msra.mxu0 0
      %330 = vmatprep.subr.bf16.mxu0 0
      %331 = vmatpush2.bf16.xpose.msra.mxu0 0
      %332 = vmatprep.subr.bf16.mxu0 0
      %333 = vmatpush2.bf16.xpose.msra.mxu0 0
      %334 = vmatprep.subr.bf16.mxu0 0
      %335 = vmatpush2.bf16.xpose.msra.mxu0 0
      %336 = vmatprep.subr.bf16.mxu0 0
      %337 = vmatpush2.bf16.xpose.msra.mxu0 0
      %338 = vmatprep.mubr.bf16.mxu0 0
      %339 = vmatmul.mubr.bf16.gmra.mxu0 %v301
      %v340 = vpop.f32.mrf.mxu0
      %v341 = vadd.f32 0.0, %v340
      %v342 = vpop.f32.mrf.mxu0
      %v343 = vpop.f32.mrf.mxu0
      %v344 = vpop.f32.mrf.mxu0
      %345 = vdwg.mxu0
      %v347 = vsel %vm299, %v260, 0
      %v350 = vsel %vm299, %v276, 0
      %352 = vmatprep.subr.bf16.mxu0 0
      %353 = vmatpush1.bf16.xpose.msra.mxu0 0
      %354 = vmatprep.subr.bf16.mxu0 0
      %355 = vmatpush1.bf16.xpose.msra.mxu0 0
      %356 = vmatprep.subr.bf16.mxu0 0
      %357 = vmatpush1.bf16.xpose.msra.mxu0 0
      %358 = vmatprep.subr.bf16.mxu0 0
      %359 = vmatpush1.bf16.xpose.msra.mxu0 0
      %360 = vmatprep.subr.bf16.mxu0 0
      %361 = vmatpush1.bf16.xpose.msra.mxu0 0
      %362 = vmatprep.subr.bf16.mxu0 0
      %363 = vmatpush1.bf16.xpose.msra.mxu0 0
      %364 = vmatprep.subr.bf16.mxu0 0
      %365 = vmatpush1.bf16.xpose.msra.mxu0 0
      %366 = vmatprep.subr.bf16.mxu0 0
      %367 = vmatpush1.bf16.xpose.msra.mxu0 %v350
      %368 = vmatprep.subr.bf16.mxu0 0
      %369 = vmatpush2.bf16.xpose.msra.mxu0 0
      %370 = vmatprep.subr.bf16.mxu0 0
      %371 = vmatpush2.bf16.xpose.msra.mxu0 0
      %372 = vmatprep.subr.bf16.mxu0 0
      %373 = vmatpush2.bf16.xpose.msra.mxu0 0
      %374 = vmatprep.subr.bf16.mxu0 0
      %375 = vmatpush2.bf16.xpose.msra.mxu0 0
      %376 = vmatprep.subr.bf16.mxu0 0
      %377 = vmatpush2.bf16.xpose.msra.mxu0 0
      %378 = vmatprep.subr.bf16.mxu0 0
      %379 = vmatpush2.bf16.xpose.msra.mxu0 0
      %380 = vmatprep.subr.bf16.mxu0 0
      %381 = vmatpush2.bf16.xpose.msra.mxu0 0
      %382 = vmatprep.subr.bf16.mxu0 0
      %383 = vmatpush2.bf16.xpose.msra.mxu0 0
      %384 = vmatprep.mubr.bf16.mxu0 0
      %385 = vmatmul.mubr.bf16.gmra.mxu0 %v347
      %v386 = vpop.f32.mrf.mxu0
      %v387 = vadd.f32 0.0, %v386
      %v388 = vpop.f32.mrf.mxu0
      %v389 = vpop.f32.mrf.mxu0
      %v390 = vpop.f32.mrf.mxu0
      %391 = vdwg.mxu0
      %v393 = vsel %vm299, %v261, 0
      %v396 = vsel %vm299, %v277, 0
      %398 = vmatprep.subr.bf16.mxu0 0
      %399 = vmatpush1.bf16.xpose.msra.mxu0 0
      %400 = vmatprep.subr.bf16.mxu0 0
      %401 = vmatpush1.bf16.xpose.msra.mxu0 0
      %402 = vmatprep.subr.bf16.mxu0 0
      %403 = vmatpush1.bf16.xpose.msra.mxu0 0
      %404 = vmatprep.subr.bf16.mxu0 0
      %405 = vmatpush1.bf16.xpose.msra.mxu0 0
      %406 = vmatprep.subr.bf16.mxu0 0
      %407 = vmatpush1.bf16.xpose.msra.mxu0 0
      %408 = vmatprep.subr.bf16.mxu0 0
      %409 = vmatpush1.bf16.xpose.msra.mxu0 0
      %410 = vmatprep.subr.bf16.mxu0 0
      %411 = vmatpush1.bf16.xpose.msra.mxu0 0
      %412 = vmatprep.subr.bf16.mxu0 0
      %413 = vmatpush1.bf16.xpose.msra.mxu0 %v396
      %414 = vmatprep.subr.bf16.mxu0 0
      %415 = vmatpush2.bf16.xpose.msra.mxu0 0
      %416 = vmatprep.subr.bf16.mxu0 0
      %417 = vmatpush2.bf16.xpose.msra.mxu0 0
      %418 = vmatprep.subr.bf16.mxu0 0
      %419 = vmatpush2.bf16.xpose.msra.mxu0 0
      %420 = vmatprep.subr.bf16.mxu0 0
      %421 = vmatpush2.bf16.xpose.msra.mxu0 0
      %422 = vmatprep.subr.bf16.mxu0 0
      %423 = vmatpush2.bf16.xpose.msra.mxu0 0
      %424 = vmatprep.subr.bf16.mxu0 0
      %425 = vmatpush2.bf16.xpose.msra.mxu0 0
      %426 = vmatprep.subr.bf16.mxu0 0
      %427 = vmatpush2.bf16.xpose.msra.mxu0 0
      %428 = vmatprep.subr.bf16.mxu0 0
      %429 = vmatpush2.bf16.xpose.msra.mxu0 0
      %430 = vmatprep.mubr.bf16.mxu0 0
      %431 = vmatmul.mubr.bf16.gmra.mxu0 %v393
      %v432 = vpop.f32.mrf.mxu0
      %v433 = vadd.f32 0.0, %v432
      %v434 = vpop.f32.mrf.mxu0
      %v435 = vpop.f32.mrf.mxu0
      %v436 = vpop.f32.mrf.mxu0
      %437 = vdwg.mxu0
      %v439 = vsel %vm299, %v262, 0
      %v442 = vsel %vm299, %v278, 0
      %444 = vmatprep.subr.bf16.mxu0 0
      %445 = vmatpush1.bf16.xpose.msra.mxu0 0
      %446 = vmatprep.subr.bf16.mxu0 0
      %447 = vmatpush1.bf16.xpose.msra.mxu0 0
      %448 = vmatprep.subr.bf16.mxu0 0
      %449 = vmatpush1.bf16.xpose.msra.mxu0 0
      %450 = vmatprep.subr.bf16.mxu0 0
      %451 = vmatpush1.bf16.xpose.msra.mxu0 0
      %452 = vmatprep.subr.bf16.mxu0 0
      %453 = vmatpush1.bf16.xpose.msra.mxu0 0
      %454 = vmatprep.subr.bf16.mxu0 0
      %455 = vmatpush1.bf16.xpose.msra.mxu0 0
      %456 = vmatprep.subr.bf16.mxu0 0
      %457 = vmatpush1.bf16.xpose.msra.mxu0 0
      %458 = vmatprep.subr.bf16.mxu0 0
      %459 = vmatpush1.bf16.xpose.msra.mxu0 %v442
      %460 = vmatprep.subr.bf16.mxu0 0
      %461 = vmatpush2.bf16.xpose.msra.mxu0 0
      %462 = vmatprep.subr.bf16.mxu0 0
      %463 = vmatpush2.bf16.xpose.msra.mxu0 0
      %464 = vmatprep.subr.bf16.mxu0 0
      %465 = vmatpush2.bf16.xpose.msra.mxu0 0
      %466 = vmatprep.subr.bf16.mxu0 0
      %467 = vmatpush2.bf16.xpose.msra.mxu0 0
      %468 = vmatprep.subr.bf16.mxu0 0
      %469 = vmatpush2.bf16.xpose.msra.mxu0 0
      %470 = vmatprep.subr.bf16.mxu0 0
      %471 = vmatpush2.bf16.xpose.msra.mxu0 0
      %472 = vmatprep.subr.bf16.mxu0 0
      %473 = vmatpush2.bf16.xpose.msra.mxu0 0
      %474 = vmatprep.subr.bf16.mxu0 0
      %475 = vmatpush2.bf16.xpose.msra.mxu0 0
      %476 = vmatprep.mubr.bf16.mxu0 0
      %477 = vmatmul.mubr.bf16.gmra.mxu0 %v439
      %v478 = vpop.f32.mrf.mxu0
      %v479 = vadd.f32 0.0, %v478
      %v480 = vpop.f32.mrf.mxu0
      %v481 = vpop.f32.mrf.mxu0
      %v482 = vpop.f32.mrf.mxu0
      %483 = vdwg.mxu0
      %v485 = vsel %vm299, %v263, 0
      %v488 = vsel %vm299, %v279, 0
      %490 = vmatprep.subr.bf16.mxu0 0
      %491 = vmatpush1.bf16.xpose.msra.mxu0 0
      %492 = vmatprep.subr.bf16.mxu0 0
      %493 = vmatpush1.bf16.xpose.msra.mxu0 0
      %494 = vmatprep.subr.bf16.mxu0 0
      %495 = vmatpush1.bf16.xpose.msra.mxu0 0
      %496 = vmatprep.subr.bf16.mxu0 0
      %497 = vmatpush1.bf16.xpose.msra.mxu0 0
      %498 = vmatprep.subr.bf16.mxu0 0
      %499 = vmatpush1.bf16.xpose.msra.mxu0 0
      %500 = vmatprep.subr.bf16.mxu0 0
      %501 = vmatpush1.bf16.xpose.msra.mxu0 0
      %502 = vmatprep.subr.bf16.mxu0 0
      %503 = vmatpush1.bf16.xpose.msra.mxu0 0
      %504 = vmatprep.subr.bf16.mxu0 0
      %505 = vmatpush1.bf16.xpose.msra.mxu0 %v488
      %506 = vmatprep.subr.bf16.mxu0 0
      %507 = vmatpush2.bf16.xpose.msra.mxu0 0
      %508 = vmatprep.subr.bf16.mxu0 0
      %509 = vmatpush2.bf16.xpose.msra.mxu0 0
      %510 = vmatprep.subr.bf16.mxu0 0
      %511 = vmatpush2.bf16.xpose.msra.mxu0 0
      %512 = vmatprep.subr.bf16.mxu0 0
      %513 = vmatpush2.bf16.xpose.msra.mxu0 0
      %514 = vmatprep.subr.bf16.mxu0 0
      %515 = vmatpush2.bf16.xpose.msra.mxu0 0
      %516 = vmatprep.subr.bf16.mxu0 0
      %517 = vmatpush2.bf16.xpose.msra.mxu0 0
      %518 = vmatprep.subr.bf16.mxu0 0
      %519 = vmatpush2.bf16.xpose.msra.mxu0 0
      %520 = vmatprep.subr.bf16.mxu0 0
      %521 = vmatpush2.bf16.xpose.msra.mxu0 0
      %522 = vmatprep.mubr.bf16.mxu0 0
      %523 = vmatmul.mubr.bf16.gmra.mxu0 %v485
      %v524 = vpop.f32.mrf.mxu0
      %v525 = vadd.f32 0.0, %v524
      %v526 = vpop.f32.mrf.mxu0
      %v527 = vpop.f32.mrf.mxu0
      %v528 = vpop.f32.mrf.mxu0
      %529 = vdwg.mxu0
      %v531 = vsel %vm299, %v264, 0
      %v534 = vsel %vm299, %v280, 0
      %536 = vmatprep.subr.bf16.mxu0 0
      %537 = vmatpush1.bf16.xpose.msra.mxu0 0
      %538 = vmatprep.subr.bf16.mxu0 0
      %539 = vmatpush1.bf16.xpose.msra.mxu0 0
      %540 = vmatprep.subr.bf16.mxu0 0
      %541 = vmatpush1.bf16.xpose.msra.mxu0 0
      %542 = vmatprep.subr.bf16.mxu0 0
      %543 = vmatpush1.bf16.xpose.msra.mxu0 0
      %544 = vmatprep.subr.bf16.mxu0 0
      %545 = vmatpush1.bf16.xpose.msra.mxu0 0
      %546 = vmatprep.subr.bf16.mxu0 0
      %547 = vmatpush1.bf16.xpose.msra.mxu0 0
      %548 = vmatprep.subr.bf16.mxu0 0
      %549 = vmatpush1.bf16.xpose.msra.mxu0 0
      %550 = vmatprep.subr.bf16.mxu0 0
      %551 = vmatpush1.bf16.xpose.msra.mxu0 %v534
      %552 = vmatprep.subr.bf16.mxu0 0
      %553 = vmatpush2.bf16.xpose.msra.mxu0 0
      %554 = vmatprep.subr.bf16.mxu0 0
      %555 = vmatpush2.bf16.xpose.msra.mxu0 0
      %556 = vmatprep.subr.bf16.mxu0 0
      %557 = vmatpush2.bf16.xpose.msra.mxu0 0
      %558 = vmatprep.subr.bf16.mxu0 0
      %559 = vmatpush2.bf16.xpose.msra.mxu0 0
      %560 = vmatprep.subr.bf16.mxu0 0
      %561 = vmatpush2.bf16.xpose.msra.mxu0 0
      %562 = vmatprep.subr.bf16.mxu0 0
      %563 = vmatpush2.bf16.xpose.msra.mxu0 0
      %564 = vmatprep.subr.bf16.mxu0 0
      %565 = vmatpush2.bf16.xpose.msra.mxu0 0
      %566 = vmatprep.subr.bf16.mxu0 0
      %567 = vmatpush2.bf16.xpose.msra.mxu0 0
      %568 = vmatprep.mubr.bf16.mxu0 0
      %569 = vmatmul.mubr.bf16.gmra.mxu0 %v531
      %v570 = vpop.f32.mrf.mxu0
      %v571 = vadd.f32 0.0, %v570
      %v572 = vpop.f32.mrf.mxu0
      %v573 = vpop.f32.mrf.mxu0
      %v574 = vpop.f32.mrf.mxu0
      %575 = vdwg.mxu0
      %v577 = vsel %vm299, %v265, 0
      %v580 = vsel %vm299, %v281, 0
      %582 = vmatprep.subr.bf16.mxu0 0
      %583 = vmatpush1.bf16.xpose.msra.mxu0 0
      %584 = vmatprep.subr.bf16.mxu0 0
      %585 = vmatpush1.bf16.xpose.msra.mxu0 0
      %586 = vmatprep.subr.bf16.mxu0 0
      %587 = vmatpush1.bf16.xpose.msra.mxu0 0
      %588 = vmatprep.subr.bf16.mxu0 0
      %589 = vmatpush1.bf16.xpose.msra.mxu0 0
      %590 = vmatprep.subr.bf16.mxu0 0
      %591 = vmatpush1.bf16.xpose.msra.mxu0 0
      %592 = vmatprep.subr.bf16.mxu0 0
      %593 = vmatpush1.bf16.xpose.msra.mxu0 0
      %594 = vmatprep.subr.bf16.mxu0 0
      %595 = vmatpush1.bf16.xpose.msra.mxu0 0
      %596 = vmatprep.subr.bf16.mxu0 0
      %597 = vmatpush1.bf16.xpose.msra.mxu0 %v580
      %598 = vmatprep.subr.bf16.mxu0 0
      %599 = vmatpush2.bf16.xpose.msra.mxu0 0
      %600 = vmatprep.subr.bf16.mxu0 0
      %601 = vmatpush2.bf16.xpose.msra.mxu0 0
      %602 = vmatprep.subr.bf16.mxu0 0
      %603 = vmatpush2.bf16.xpose.msra.mxu0 0
      %604 = vmatprep.subr.bf16.mxu0 0
      %605 = vmatpush2.bf16.xpose.msra.mxu0 0
      %606 = vmatprep.subr.bf16.mxu0 0
      %607 = vmatpush2.bf16.xpose.msra.mxu0 0
      %608 = vmatprep.subr.bf16.mxu0 0
      %609 = vmatpush2.bf16.xpose.msra.mxu0 0
      %610 = vmatprep.subr.bf16.mxu0 0
      %611 = vmatpush2.bf16.xpose.msra.mxu0 0
      %612 = vmatprep.subr.bf16.mxu0 0
      %613 = vmatpush2.bf16.xpose.msra.mxu0 0
      %614 = vmatprep.mubr.bf16.mxu0 0
      %615 = vmatmul.mubr.bf16.gmra.mxu0 %v577
      %v616 = vpop.f32.mrf.mxu0
      %v617 = vadd.f32 0.0, %v616
      %v618 = vpop.f32.mrf.mxu0
      %v619 = vpop.f32.mrf.mxu0
      %v620 = vpop.f32.mrf.mxu0
      %621 = vdwg.mxu0
      %v623 = vsel %vm299, %v266, 0
      %v626 = vsel %vm299, %v282, 0
      %628 = vmatprep.subr.bf16.mxu0 0
      %629 = vmatpush1.bf16.xpose.msra.mxu0 0
      %630 = vmatprep.subr.bf16.mxu0 0
      %631 = vmatpush1.bf16.xpose.msra.mxu0 0
      %632 = vmatprep.subr.bf16.mxu0 0
      %633 = vmatpush1.bf16.xpose.msra.mxu0 0
      %634 = vmatprep.subr.bf16.mxu0 0
      %635 = vmatpush1.bf16.xpose.msra.mxu0 0
      %636 = vmatprep.subr.bf16.mxu0 0
      %637 = vmatpush1.bf16.xpose.msra.mxu0 0
      %638 = vmatprep.subr.bf16.mxu0 0
      %639 = vmatpush1.bf16.xpose.msra.mxu0 0
      %640 = vmatprep.subr.bf16.mxu0 0
      %641 = vmatpush1.bf16.xpose.msra.mxu0 0
      %642 = vmatprep.subr.bf16.mxu0 0
      %643 = vmatpush1.bf16.xpose.msra.mxu0 %v626
      %644 = vmatprep.subr.bf16.mxu0 0
      %645 = vmatpush2.bf16.xpose.msra.mxu0 0
      %646 = vmatprep.subr.bf16.mxu0 0
      %647 = vmatpush2.bf16.xpose.msra.mxu0 0
      %648 = vmatprep.subr.bf16.mxu0 0
      %649 = vmatpush2.bf16.xpose.msra.mxu0 0
      %650 = vmatprep.subr.bf16.mxu0 0
      %651 = vmatpush2.bf16.xpose.msra.mxu0 0
      %652 = vmatprep.subr.bf16.mxu0 0
      %653 = vmatpush2.bf16.xpose.msra.mxu0 0
      %654 = vmatprep.subr.bf16.mxu0 0
      %655 = vmatpush2.bf16.xpose.msra.mxu0 0
      %656 = vmatprep.subr.bf16.mxu0 0
      %657 = vmatpush2.bf16.xpose.msra.mxu0 0
      %658 = vmatprep.subr.bf16.mxu0 0
      %659 = vmatpush2.bf16.xpose.msra.mxu0 0
      %660 = vmatprep.mubr.bf16.mxu0 0
      %661 = vmatmul.mubr.bf16.gmra.mxu0 %v623
      %v662 = vpop.f32.mrf.mxu0
      %v663 = vadd.f32 0.0, %v662
      %v664 = vpop.f32.mrf.mxu0
      %v665 = vpop.f32.mrf.mxu0
      %v666 = vpop.f32.mrf.mxu0
      %667 = vdwg.mxu0
      %v668 = vld [vmem:[%s245] sm:$0x1]
      %vm669 = vcmp.ne.f32.partialorder %v668, 0.0
      %v670 = vsel %vm669, 1, 0
      %v671 = vlaneseq
      %v672 = vshrl.u32 %v671, 7
      %v673 = vsub.s32 0, %v672
      %v674 = vrot.slane %v670, %v673
      %vm675 = vcmp.eq.s32.totalorder %v674, 1
      %v676 = vsel %vm675, %v341, -1e+20
      %v677 = vsel %vm675, %v387, -1e+20
      %v678 = vsel %vm675, %v433, -1e+20
      %v679 = vsel %vm675, %v479, -1e+20
      %v680 = vsel %vm675, %v525, -1e+20
      %v681 = vsel %vm675, %v571, -1e+20
      %v682 = vsel %vm675, %v617, -1e+20
      %v683 = vsel %vm675, %v663, -1e+20
      %v684 = vmul.f32 %v676, 0.25
      %v685 = vmul.f32 %v677, 0.25
      %v686 = vmul.f32 %v678, 0.25
      %v687 = vmul.f32 %v679, 0.25
      %v688 = vmul.f32 %v680, 0.25
      %v689 = vmul.f32 %v681, 0.25
      %v690 = vmul.f32 %v682, 0.25
      %v691 = vmul.f32 %v683, 0.25
      %vm692 = vcmask 64512
      %v693 = vsel %vm692, %v684, -inf
      %694 = vmax.xlane.f32.xlu0 %v693
      %v695 = vpop.xlane.xlu0 %694
      %v696 = vsel %vm692, %v685, -inf
      %697 = vmax.xlane.f32.xlu0 %v696
      %v698 = vpop.xlane.xlu0 %697
      %v699 = vsel %vm692, %v686, -inf
      %700 = vmax.xlane.f32.xlu0 %v699
      %v701 = vpop.xlane.xlu0 %700
      %v702 = vsel %vm692, %v687, -inf
      %703 = vmax.xlane.f32.xlu0 %v702
      %v704 = vpop.xlane.xlu0 %703
      %v705 = vsel %vm692, %v688, -inf
      %706 = vmax.xlane.f32.xlu0 %v705
      %v707 = vpop.xlane.xlu0 %706
      %v708 = vsel %vm692, %v689, -inf
      %709 = vmax.xlane.f32.xlu0 %v708
      %v710 = vpop.xlane.xlu0 %709
      %v711 = vsel %vm692, %v690, -inf
      %712 = vmax.xlane.f32.xlu0 %v711
      %v713 = vpop.xlane.xlu0 %712
      %v714 = vsel %vm692, %v691, -inf
      %715 = vmax.xlane.f32.xlu0 %v714
      %v716 = vpop.xlane.xlu0 %715
      %v717 = vsub.f32 %v684, %v695
      %v718 = vsub.f32 %v685, %v698
      %v719 = vsub.f32 %v686, %v701
      %v720 = vsub.f32 %v687, %v704
      %v721 = vsub.f32 %v688, %v707
      %v722 = vsub.f32 %v689, %v710
      %v723 = vsub.f32 %v690, %v713
      %v724 = vsub.f32 %v691, %v716
      %v725 = vmul.f32 %v717, 1.442695
      %v726 = vpow.pop %v725
      %v727 = vmul.f32 %v718, 1.442695
      %v728 = vpow.pop %v727
      %v729 = vmul.f32 %v719, 1.442695
      %v730 = vpow.pop %v729
      %v731 = vmul.f32 %v720, 1.442695
      %v732 = vpow.pop %v731
      %v733 = vmul.f32 %v721, 1.442695
      %v734 = vpow.pop %v733
      %v735 = vmul.f32 %v722, 1.442695
      %v736 = vpow.pop %v735
      %v737 = vmul.f32 %v723, 1.442695
      %v738 = vpow.pop %v737
      %v739 = vmul.f32 %v724, 1.442695
      %v740 = vpow.pop %v739
      %v741 = vsel %vm692, %v726, 0.0
      %742 = vadd.xlane.f32.xlu0 %v741
      %v743 = vpop.xlane.xlu0 %742
      %v744 = vsel %vm692, %v728, 0.0
      %745 = vadd.xlane.f32.xlu0 %v744
      %v746 = vpop.xlane.xlu0 %745
      %v747 = vsel %vm692, %v730, 0.0
      %748 = vadd.xlane.f32.xlu0 %v747
      %v749 = vpop.xlane.xlu0 %748
      %v750 = vsel %vm692, %v732, 0.0
      %751 = vadd.xlane.f32.xlu0 %v750
      %v752 = vpop.xlane.xlu0 %751
      %v753 = vsel %vm692, %v734, 0.0
      %754 = vadd.xlane.f32.xlu0 %v753
      %v755 = vpop.xlane.xlu0 %754
      %v756 = vsel %vm692, %v736, 0.0
      %757 = vadd.xlane.f32.xlu0 %v756
      %v758 = vpop.xlane.xlu0 %757
      %v759 = vsel %vm692, %v738, 0.0
      %760 = vadd.xlane.f32.xlu0 %v759
      %v761 = vpop.xlane.xlu0 %760
      %v762 = vsel %vm692, %v740, 0.0
      %763 = vadd.xlane.f32.xlu0 %v762
      %v764 = vpop.xlane.xlu0 %763
      %v765 = vrcp.pop %v743
      %v766 = vrcp.pop %v746
      %v767 = vrcp.pop %v749
      %v768 = vrcp.pop %v752
      %v769 = vrcp.pop %v755
      %v770 = vrcp.pop %v758
      %v771 = vrcp.pop %v761
      %v772 = vrcp.pop %v764
      %v773 = vmul.f32 %v726, %v765
      %v774 = vmul.f32 %v728, %v766
      %v775 = vmul.f32 %v730, %v767
      %v776 = vmul.f32 %v732, %v768
      %v777 = vmul.f32 %v734, %v769
      %v778 = vmul.f32 %v736, %v770
      %v779 = vmul.f32 %v738, %v771
      %v780 = vmul.f32 %v740, %v772
      %v781 = vpack.c.bf16 %v773, %v773
      %v782 = vpack.c.bf16 %v774, %v774
      %v783 = vpack.c.bf16 %v775, %v775
      %v784 = vpack.c.bf16 %v776, %v776
      %v785 = vpack.c.bf16 %v777, %v777
      %v786 = vpack.c.bf16 %v778, %v778
      %v787 = vpack.c.bf16 %v779, %v779
      %v788 = vpack.c.bf16 %v780, %v780
      %v790 = vsel %vm692, %v781, 0
      %vm792 = vcmask 1043456
      %v794 = vsel %vm792, %v291, 0
      %796 = vmatprep.subr.bf16.mxu0 0
      %797 = vmatpush1.bf16.msra.mxu0 0
      %798 = vmatprep.subr.bf16.mxu0 0
      %799 = vmatpush1.bf16.msra.mxu0 0
      %800 = vmatprep.subr.bf16.mxu0 0
      %801 = vmatpush1.bf16.msra.mxu0 0
      %802 = vmatprep.subr.bf16.mxu0 0
      %803 = vmatpush1.bf16.msra.mxu0 0
      %804 = vmatprep.subr.bf16.mxu0 0
      %805 = vmatpush1.bf16.msra.mxu0 0
      %806 = vmatprep.subr.bf16.mxu0 0
      %807 = vmatpush1.bf16.msra.mxu0 0
      %808 = vmatprep.subr.bf16.mxu0 0
      %809 = vmatpush1.bf16.msra.mxu0 0
      %810 = vmatprep.subr.bf16.mxu0 0
      %811 = vmatpush1.bf16.msra.mxu0 %v794
      %812 = vmatprep.subr.bf16.mxu0 0
      %813 = vmatpush2.bf16.msra.mxu0 0
      %814 = vmatprep.subr.bf16.mxu0 0
      %815 = vmatpush2.bf16.msra.mxu0 0
      %816 = vmatprep.subr.bf16.mxu0 0
      %817 = vmatpush2.bf16.msra.mxu0 0
      %818 = vmatprep.subr.bf16.mxu0 0
      %819 = vmatpush2.bf16.msra.mxu0 0
      %820 = vmatprep.subr.bf16.mxu0 0
      %821 = vmatpush2.bf16.msra.mxu0 0
      %822 = vmatprep.subr.bf16.mxu0 0
      %823 = vmatpush2.bf16.msra.mxu0 0
      %824 = vmatprep.subr.bf16.mxu0 0
      %825 = vmatpush2.bf16.msra.mxu0 0
      %826 = vmatprep.subr.bf16.mxu0 0
      %827 = vmatpush2.bf16.msra.mxu0 0
      %828 = vmatprep.mubr.bf16.mxu0 0
      %829 = vmatmul.mubr.bf16.gmra.mxu0 %v790
      %v830 = vpop.f32.mrf.mxu0
      %v831 = vadd.f32 0.0, %v830
      %v832 = vpop.f32.mrf.mxu0
      %v833 = vpop.f32.mrf.mxu0
      %v834 = vpop.f32.mrf.mxu0
      %835 = vdwg.mxu0
      %v837 = vsel %vm692, %v782, 0
      %v840 = vsel %vm792, %v292, 0
      %842 = vmatprep.subr.bf16.mxu0 0
      %843 = vmatpush1.bf16.msra.mxu0 0
      %844 = vmatprep.subr.bf16.mxu0 0
      %845 = vmatpush1.bf16.msra.mxu0 0
      %846 = vmatprep.subr.bf16.mxu0 0
      %847 = vmatpush1.bf16.msra.mxu0 0
      %848 = vmatprep.subr.bf16.mxu0 0
      %849 = vmatpush1.bf16.msra.mxu0 0
      %850 = vmatprep.subr.bf16.mxu0 0
      %851 = vmatpush1.bf16.msra.mxu0 0
      %852 = vmatprep.subr.bf16.mxu0 0
      %853 = vmatpush1.bf16.msra.mxu0 0
      %854 = vmatprep.subr.bf16.mxu0 0
      %855 = vmatpush1.bf16.msra.mxu0 0
      %856 = vmatprep.subr.bf16.mxu0 0
      %857 = vmatpush1.bf16.msra.mxu0 %v840
      %858 = vmatprep.subr.bf16.mxu0 0
      %859 = vmatpush2.bf16.msra.mxu0 0
      %860 = vmatprep.subr.bf16.mxu0 0
      %861 = vmatpush2.bf16.msra.mxu0 0
      %862 = vmatprep.subr.bf16.mxu0 0
      %863 = vmatpush2.bf16.msra.mxu0 0
      %864 = vmatprep.subr.bf16.mxu0 0
      %865 = vmatpush2.bf16.msra.mxu0 0
      %866 = vmatprep.subr.bf16.mxu0 0
      %867 = vmatpush2.bf16.msra.mxu0 0
      %868 = vmatprep.subr.bf16.mxu0 0
      %869 = vmatpush2.bf16.msra.mxu0 0
      %870 = vmatprep.subr.bf16.mxu0 0
      %871 = vmatpush2.bf16.msra.mxu0 0
      %872 = vmatprep.subr.bf16.mxu0 0
      %873 = vmatpush2.bf16.msra.mxu0 0
      %874 = vmatprep.mubr.bf16.mxu0 0
      %875 = vmatmul.mubr.bf16.gmra.mxu0 %v837
      %v876 = vpop.f32.mrf.mxu0
      %v877 = vadd.f32 0.0, %v876
      %v878 = vpop.f32.mrf.mxu0
      %v879 = vpop.f32.mrf.mxu0
      %v880 = vpop.f32.mrf.mxu0
      %881 = vdwg.mxu0
      %v883 = vsel %vm692, %v783, 0
      %v886 = vsel %vm792, %v293, 0
      %888 = vmatprep.subr.bf16.mxu0 0
      %889 = vmatpush1.bf16.msra.mxu0 0
      %890 = vmatprep.subr.bf16.mxu0 0
      %891 = vmatpush1.bf16.msra.mxu0 0
      %892 = vmatprep.subr.bf16.mxu0 0
      %893 = vmatpush1.bf16.msra.mxu0 0
      %894 = vmatprep.subr.bf16.mxu0 0
      %895 = vmatpush1.bf16.msra.mxu0 0
      %896 = vmatprep.subr.bf16.mxu0 0
      %897 = vmatpush1.bf16.msra.mxu0 0
      %898 = vmatprep.subr.bf16.mxu0 0
      %899 = vmatpush1.bf16.msra.mxu0 0
      %900 = vmatprep.subr.bf16.mxu0 0
      %901 = vmatpush1.bf16.msra.mxu0 0
      %902 = vmatprep.subr.bf16.mxu0 0
      %903 = vmatpush1.bf16.msra.mxu0 %v886
      %904 = vmatprep.subr.bf16.mxu0 0
      %905 = vmatpush2.bf16.msra.mxu0 0
      %906 = vmatprep.subr.bf16.mxu0 0
      %907 = vmatpush2.bf16.msra.mxu0 0
      %908 = vmatprep.subr.bf16.mxu0 0
      %909 = vmatpush2.bf16.msra.mxu0 0
      %910 = vmatprep.subr.bf16.mxu0 0
      %911 = vmatpush2.bf16.msra.mxu0 0
      %912 = vmatprep.subr.bf16.mxu0 0
      %913 = vmatpush2.bf16.msra.mxu0 0
      %914 = vmatprep.subr.bf16.mxu0 0
      %915 = vmatpush2.bf16.msra.mxu0 0
      %916 = vmatprep.subr.bf16.mxu0 0
      %917 = vmatpush2.bf16.msra.mxu0 0
      %918 = vmatprep.subr.bf16.mxu0 0
      %919 = vmatpush2.bf16.msra.mxu0 0
      %920 = vmatprep.mubr.bf16.mxu0 0
      %921 = vmatmul.mubr.bf16.gmra.mxu0 %v883
      %v922 = vpop.f32.mrf.mxu0
      %v923 = vadd.f32 0.0, %v922
      %v924 = vpop.f32.mrf.mxu0
      %v925 = vpop.f32.mrf.mxu0
      %v926 = vpop.f32.mrf.mxu0
      %927 = vdwg.mxu0
      %v929 = vsel %vm692, %v784, 0
      %v932 = vsel %vm792, %v294, 0
      %934 = vmatprep.subr.bf16.mxu0 0
      %935 = vmatpush1.bf16.msra.mxu0 0
      %936 = vmatprep.subr.bf16.mxu0 0
      %937 = vmatpush1.bf16.msra.mxu0 0
      %938 = vmatprep.subr.bf16.mxu0 0
      %939 = vmatpush1.bf16.msra.mxu0 0
      %940 = vmatprep.subr.bf16.mxu0 0
      %941 = vmatpush1.bf16.msra.mxu0 0
      %942 = vmatprep.subr.bf16.mxu0 0
      %943 = vmatpush1.bf16.msra.mxu0 0
      %944 = vmatprep.subr.bf16.mxu0 0
      %945 = vmatpush1.bf16.msra.mxu0 0
      %946 = vmatprep.subr.bf16.mxu0 0
      %947 = vmatpush1.bf16.msra.mxu0 0
      %948 = vmatprep.subr.bf16.mxu0 0
      %949 = vmatpush1.bf16.msra.mxu0 %v932
      %950 = vmatprep.subr.bf16.mxu0 0
      %951 = vmatpush2.bf16.msra.mxu0 0
      %952 = vmatprep.subr.bf16.mxu0 0
      %953 = vmatpush2.bf16.msra.mxu0 0
      %954 = vmatprep.subr.bf16.mxu0 0
      %955 = vmatpush2.bf16.msra.mxu0 0
      %956 = vmatprep.subr.bf16.mxu0 0
      %957 = vmatpush2.bf16.msra.mxu0 0
      %958 = vmatprep.subr.bf16.mxu0 0
      %959 = vmatpush2.bf16.msra.mxu0 0
      %960 = vmatprep.subr.bf16.mxu0 0
      %961 = vmatpush2.bf16.msra.mxu0 0
      %962 = vmatprep.subr.bf16.mxu0 0
      %963 = vmatpush2.bf16.msra.mxu0 0
      %964 = vmatprep.subr.bf16.mxu0 0
      %965 = vmatpush2.bf16.msra.mxu0 0
      %966 = vmatprep.mubr.bf16.mxu0 0
      %967 = vmatmul.mubr.bf16.gmra.mxu0 %v929
      %v968 = vpop.f32.mrf.mxu0
      %v969 = vadd.f32 0.0, %v968
      %v970 = vpop.f32.mrf.mxu0
      %v971 = vpop.f32.mrf.mxu0
      %v972 = vpop.f32.mrf.mxu0
      %973 = vdwg.mxu0
      %v975 = vsel %vm692, %v785, 0
      %v978 = vsel %vm792, %v295, 0
      %980 = vmatprep.subr.bf16.mxu0 0
      %981 = vmatpush1.bf16.msra.mxu0 0
      %982 = vmatprep.subr.bf16.mxu0 0
      %983 = vmatpush1.bf16.msra.mxu0 0
      %984 = vmatprep.subr.bf16.mxu0 0
      %985 = vmatpush1.bf16.msra.mxu0 0
      %986 = vmatprep.subr.bf16.mxu0 0
      %987 = vmatpush1.bf16.msra.mxu0 0
      %988 = vmatprep.subr.bf16.mxu0 0
      %989 = vmatpush1.bf16.msra.mxu0 0
      %990 = vmatprep.subr.bf16.mxu0 0
      %991 = vmatpush1.bf16.msra.mxu0 0
      %992 = vmatprep.subr.bf16.mxu0 0
      %993 = vmatpush1.bf16.msra.mxu0 0
      %994 = vmatprep.subr.bf16.mxu0 0
      %995 = vmatpush1.bf16.msra.mxu0 %v978
      %996 = vmatprep.subr.bf16.mxu0 0
      %997 = vmatpush2.bf16.msra.mxu0 0
      %998 = vmatprep.subr.bf16.mxu0 0
      %999 = vmatpush2.bf16.msra.mxu0 0
      %1000 = vmatprep.subr.bf16.mxu0 0
      %1001 = vmatpush2.bf16.msra.mxu0 0
      %1002 = vmatprep.subr.bf16.mxu0 0
      %1003 = vmatpush2.bf16.msra.mxu0 0
      %1004 = vmatprep.subr.bf16.mxu0 0
      %1005 = vmatpush2.bf16.msra.mxu0 0
      %1006 = vmatprep.subr.bf16.mxu0 0
      %1007 = vmatpush2.bf16.msra.mxu0 0
      %1008 = vmatprep.subr.bf16.mxu0 0
      %1009 = vmatpush2.bf16.msra.mxu0 0
      %1010 = vmatprep.subr.bf16.mxu0 0
      %1011 = vmatpush2.bf16.msra.mxu0 0
      %1012 = vmatprep.mubr.bf16.mxu0 0
      %1013 = vmatmul.mubr.bf16.gmra.mxu0 %v975
      %v1014 = vpop.f32.mrf.mxu0
      %v1015 = vadd.f32 0.0, %v1014
      %v1016 = vpop.f32.mrf.mxu0
      %v1017 = vpop.f32.mrf.mxu0
      %v1018 = vpop.f32.mrf.mxu0
      %1019 = vdwg.mxu0
      %v1021 = vsel %vm692, %v786, 0
      %v1024 = vsel %vm792, %v296, 0
      %1026 = vmatprep.subr.bf16.mxu0 0
      %1027 = vmatpush1.bf16.msra.mxu0 0
      %1028 = vmatprep.subr.bf16.mxu0 0
      %1029 = vmatpush1.bf16.msra.mxu0 0
      %1030 = vmatprep.subr.bf16.mxu0 0
      %1031 = vmatpush1.bf16.msra.mxu0 0
      %1032 = vmatprep.subr.bf16.mxu0 0
      %1033 = vmatpush1.bf16.msra.mxu0 0
      %1034 = vmatprep.subr.bf16.mxu0 0
      %1035 = vmatpush1.bf16.msra.mxu0 0
      %1036 = vmatprep.subr.bf16.mxu0 0
      %1037 = vmatpush1.bf16.msra.mxu0 0
      %1038 = vmatprep.subr.bf16.mxu0 0
      %1039 = vmatpush1.bf16.msra.mxu0 0
      %1040 = vmatprep.subr.bf16.mxu0 0
      %1041 = vmatpush1.bf16.msra.mxu0 %v1024
      %1042 = vmatprep.subr.bf16.mxu0 0
      %1043 = vmatpush2.bf16.msra.mxu0 0
      %1044 = vmatprep.subr.bf16.mxu0 0
      %1045 = vmatpush2.bf16.msra.mxu0 0
      %1046 = vmatprep.subr.bf16.mxu0 0
      %1047 = vmatpush2.bf16.msra.mxu0 0
      %1048 = vmatprep.subr.bf16.mxu0 0
      %1049 = vmatpush2.bf16.msra.mxu0 0
      %1050 = vmatprep.subr.bf16.mxu0 0
      %1051 = vmatpush2.bf16.msra.mxu0 0
      %1052 = vmatprep.subr.bf16.mxu0 0
      %1053 = vmatpush2.bf16.msra.mxu0 0
      %1054 = vmatprep.subr.bf16.mxu0 0
      %1055 = vmatpush2.bf16.msra.mxu0 0
      %1056 = vmatprep.subr.bf16.mxu0 0
      %1057 = vmatpush2.bf16.msra.mxu0 0
      %1058 = vmatprep.mubr.bf16.mxu0 0
      %1059 = vmatmul.mubr.bf16.gmra.mxu0 %v1021
      %v1060 = vpop.f32.mrf.mxu0
      %v1061 = vadd.f32 0.0, %v1060
      %v1062 = vpop.f32.mrf.mxu0
      %v1063 = vpop.f32.mrf.mxu0
      %v1064 = vpop.f32.mrf.mxu0
      %1065 = vdwg.mxu0
      %v1067 = vsel %vm692, %v787, 0
      %v1070 = vsel %vm792, %v297, 0
      %1072 = vmatprep.subr.bf16.mxu0 0
      %1073 = vmatpush1.bf16.msra.mxu0 0
      %1074 = vmatprep.subr.bf16.mxu0 0
      %1075 = vmatpush1.bf16.msra.mxu0 0
      %1076 = vmatprep.subr.bf16.mxu0 0
      %1077 = vmatpush1.bf16.msra.mxu0 0
      %1078 = vmatprep.subr.bf16.mxu0 0
      %1079 = vmatpush1.bf16.msra.mxu0 0
      %1080 = vmatprep.subr.bf16.mxu0 0
      %1081 = vmatpush1.bf16.msra.mxu0 0
      %1082 = vmatprep.subr.bf16.mxu0 0
      %1083 = vmatpush1.bf16.msra.mxu0 0
      %1084 = vmatprep.subr.bf16.mxu0 0
      %1085 = vmatpush1.bf16.msra.mxu0 0
      %1086 = vmatprep.subr.bf16.mxu0 0
      %1087 = vmatpush1.bf16.msra.mxu0 %v1070
      %1088 = vmatprep.subr.bf16.mxu0 0
      %1089 = vmatpush2.bf16.msra.mxu0 0
      %1090 = vmatprep.subr.bf16.mxu0 0
      %1091 = vmatpush2.bf16.msra.mxu0 0
      %1092 = vmatprep.subr.bf16.mxu0 0
      %1093 = vmatpush2.bf16.msra.mxu0 0
      %1094 = vmatprep.subr.bf16.mxu0 0
      %1095 = vmatpush2.bf16.msra.mxu0 0
      %1096 = vmatprep.subr.bf16.mxu0 0
      %1097 = vmatpush2.bf16.msra.mxu0 0
      %1098 = vmatprep.subr.bf16.mxu0 0
      %1099 = vmatpush2.bf16.msra.mxu0 0
      %1100 = vmatprep.subr.bf16.mxu0 0
      %1101 = vmatpush2.bf16.msra.mxu0 0
      %1102 = vmatprep.subr.bf16.mxu0 0
      %1103 = vmatpush2.bf16.msra.mxu0 0
      %1104 = vmatprep.mubr.bf16.mxu0 0
      %1105 = vmatmul.mubr.bf16.gmra.mxu0 %v1067
      %v1106 = vpop.f32.mrf.mxu0
      %v1107 = vadd.f32 0.0, %v1106
      %v1108 = vpop.f32.mrf.mxu0
      %v1109 = vpop.f32.mrf.mxu0
      %v1110 = vpop.f32.mrf.mxu0
      %1111 = vdwg.mxu0
      %v1113 = vsel %vm692, %v788, 0
      %v1116 = vsel %vm792, %v298, 0
      %1118 = vmatprep.subr.bf16.mxu0 0
      %1119 = vmatpush1.bf16.msra.mxu0 0
      %1120 = vmatprep.subr.bf16.mxu0 0
      %1121 = vmatpush1.bf16.msra.mxu0 0
      %1122 = vmatprep.subr.bf16.mxu0 0
      %1123 = vmatpush1.bf16.msra.mxu0 0
      %1124 = vmatprep.subr.bf16.mxu0 0
      %1125 = vmatpush1.bf16.msra.mxu0 0
      %1126 = vmatprep.subr.bf16.mxu0 0
      %1127 = vmatpush1.bf16.msra.mxu0 0
      %1128 = vmatprep.subr.bf16.mxu0 0
      %1129 = vmatpush1.bf16.msra.mxu0 0
      %1130 = vmatprep.subr.bf16.mxu0 0
      %1131 = vmatpush1.bf16.msra.mxu0 0
      %1132 = vmatprep.subr.bf16.mxu0 0
      %1133 = vmatpush1.bf16.msra.mxu0 %v1116
      %1134 = vmatprep.subr.bf16.mxu0 0
      %1135 = vmatpush2.bf16.msra.mxu0 0
      %1136 = vmatprep.subr.bf16.mxu0 0
      %1137 = vmatpush2.bf16.msra.mxu0 0
      %1138 = vmatprep.subr.bf16.mxu0 0
      %1139 = vmatpush2.bf16.msra.mxu0 0
      %1140 = vmatprep.subr.bf16.mxu0 0
      %1141 = vmatpush2.bf16.msra.mxu0 0
      %1142 = vmatprep.subr.bf16.mxu0 0
      %1143 = vmatpush2.bf16.msra.mxu0 0
      %1144 = vmatprep.subr.bf16.mxu0 0
      %1145 = vmatpush2.bf16.msra.mxu0 0
      %1146 = vmatprep.subr.bf16.mxu0 0
      %1147 = vmatpush2.bf16.msra.mxu0 0
      %1148 = vmatprep.subr.bf16.mxu0 0
      %1149 = vmatpush2.bf16.msra.mxu0 0
      %1150 = vmatprep.mubr.bf16.mxu0 0
      %1151 = vmatmul.mubr.bf16.gmra.mxu0 %v1113
      %v1152 = vpop.f32.mrf.mxu0
      %v1153 = vadd.f32 0.0, %v1152
      %v1154 = vpop.f32.mrf.mxu0
      %v1155 = vpop.f32.mrf.mxu0
      %v1156 = vpop.f32.mrf.mxu0
      %1157 = vdwg.mxu0
      %1159 = vrot.lane.b32.xlu0 %v877, 16
      %v1160 = vpop.permute.xlu0 %1159
      %1163 = vrot.lane.b32.xlu0 %v923, 32
      %v1164 = vpop.permute.xlu0 %1163
      %1167 = vrot.lane.b32.xlu0 %v969, 48
      %v1168 = vpop.permute.xlu0 %1167
      %1171 = vrot.lane.b32.xlu0 %v1015, 64
      %v1172 = vpop.permute.xlu0 %1171
      %1175 = vrot.lane.b32.xlu0 %v1061, 80
      %v1176 = vpop.permute.xlu0 %1175
      %1179 = vrot.lane.b32.xlu0 %v1107, 96
      %v1180 = vpop.permute.xlu0 %1179
      %1183 = vrot.lane.b32.xlu0 %v1153, 112
      %v1184 = vpop.permute.xlu0 %1183
      %v1186 = vsel %vm299, %v831, %v1160
      %vm1187 = vcmask 261120
      %v1188 = vsel %vm1187, %v1186, %v1164
      %vm1189 = vcmask 392192
      %v1190 = vsel %vm1189, %v1188, %v1168
      %vm1191 = vcmask 523264
      %v1192 = vsel %vm1191, %v1190, %v1172
      %vm1193 = vcmask 654336
      %v1194 = vsel %vm1193, %v1192, %v1176
      %vm1195 = vcmask 785408
      %v1196 = vsel %vm1195, %v1194, %v1180
      %vm1197 = vcmask 916480
      %v1198 = vsel %vm1197, %v1196, %v1184
      %1199 = vst [vmem:[%s249] sm:$0xff] %v1198
      %p1200 = scmp.lt.s32.totalorder %s15, 1
      %s1201 = scalar_select %p1200, %s15, 1
      %s1202 = smul.addr %s1201, 8
      %s1203 = scalar_lea.vmem %s4, %s1202
      // Predicated region
      $region37: #{transformer_forward.24} parent=35 // pred_check
        %p1204 = pneg %p137
      $region38: #{transformer_forward.24} parent=35 // pred_check_branch
        %1206 = sbr.rel (%p1204) target = $region40
      $region39: #{transformer_forward.24} parent=35 // pred_region
        _
      $region40: #{transformer_forward.24} parent=35 // pred_fallthru
        _
    $region36: #{transformer_forward.24} parent=5 // pred_fallthru
      _
    %p1207 = scmp.le.s32.totalorder 2, %s10
    // Predicated region
    $region41: #{transformer_forward.24} parent=5 // pred_check
      %p1208 = pneg %p1207
    $region42: #{transformer_forward.24} parent=5 // pred_check_branch
      %1210 = sbr.rel (%p1208) target = $region44
    $region43: #{transformer_forward.24} parent=5 // pred_region
      %s1211 = ssub.s32 %s10, 2
      // Predicated region
      $region45: #{transformer_forward.24} parent=43 // pred_check
        %p1212 = pneg %p143
      $region46: #{transformer_forward.24} parent=43 // pred_check_branch
        %1214 = sbr.rel (%p1212) target = $region48
      $region47: #{transformer_forward.24} parent=43 // pred_region
        %p1215 = scmp.lt.s32.totalorder %s16, 1
        %s1216 = scalar_select %p1215, %s16, 1
        %s1217 = smul.addr %s1216, 8
        %s1218 = scalar_lea.vmem %s4, %s1217
      $region48: #{transformer_forward.24} parent=43 // pred_fallthru
        _
    $region44: #{transformer_forward.24} parent=5 // pred_fallthru
      _
  $region6: #{transformer_forward.24} parent=0 // loop_footer
    %s14 = sadd.s32 1, %s10
  $region7: #{transformer_forward.24} parent=0 // loop_footer_branch
    %9 = sbr.rel target = $region3
  $region8: #{transformer_forward.24} parent=0 // loop_exit
    _

// kernel: transformer_forward.45
$region0: #{transformer_forward.45}
  #allocation0 [shape = 'u32[]', space=smem, size = 0x4, offset = 0x4, fixed_abs, tag = 'smem constant byte address 0x4 - core index']
  #allocation1 [shape = 'u32[144,128]{1,0:T(1,128)}', space=vmem, size = 0x12000, scoped, tag = 'internal scratch']
  %s0 = inlined_call_operand.vmem [shape: f32[16,128], index: 0, kind: input, shape index: {}]
  %s1 = inlined_call_operand.vmem [shape: bf16[128,256], index: 1, kind: input, shape index: {}]
  %s2 = inlined_call_operand.vmem [shape: f32[1,256], index: 2, kind: input, shape index: {}]
  %s3 = inlined_call_operand.hbm [shape: f32[16,256], index: 3, kind: output, shape index: {}]
  %s4 = sld [smem:[#allocation0]]
  $region22: #{transformer_forward.45} parent=0
    _
  %s6 = ssub.s32 1, %s4
  %s7 = scalar_select 0, %s6, %s4
  $region1: #{transformer_forward.45} parent=0
    #allocation2 [shape = 'u8[16384]{0}', space=vmem, size = 0x4000, scoped, tag = 'output window, operand 0, single buffered']
    #allocation3 [shape = 's32[1]{0}', space=sflag, size = 0x4, scoped, tag = 'scoped memory for transformer_forward.45']
    %8 = vsyncpa [#allocation3], 0
    // Predicated region
    $region2: #{transformer_forward.45} parent=1 // pred_check
      _
    $region3: #{transformer_forward.45} parent=1 // pred_check_branch
      %10 = sbr.rel (0) target = $region5
    $region4: #{transformer_forward.45} parent=1 // pred_region
      _
    $region5: #{transformer_forward.45} parent=1 // pred_fallthru
      _
    // Predicated region
    $region6: #{transformer_forward.45} parent=1 // pred_check
      _
    $region7: #{transformer_forward.45} parent=1 // pred_check_branch
      %12 = sbr.rel (0) target = $region9
    $region8: #{transformer_forward.45} parent=1 // pred_region
      _
    $region9: #{transformer_forward.45} parent=1 // pred_fallthru
      _
    // Predicated region
    $region10: #{transformer_forward.45} parent=1 // pred_check
      _
    $region11: #{transformer_forward.45} parent=1 // pred_check_branch
      %14 = sbr.rel (0) target = $region13
    $region12: #{transformer_forward.45} parent=1 // pred_region
      _
    $region13: #{transformer_forward.45} parent=1 // pred_fallthru
      _
    %v16 = vld [vmem:[%s0] sm:$0xff]
    %v17 = vld [vmem:[%s0 + $0x8] sm:$0xff]
    %v18 = vpack.c.bf16 %v17, %v16
    %v19 = vld [vmem:[%s1] sm:$0xff]
    %v20 = vld [vmem:[%s1 + $0x8] sm:$0xff]
    %v21 = vld [vmem:[%s1 + $0x10] sm:$0xff]
    %v22 = vld [vmem:[%s1 + $0x18] sm:$0xff]
    %v23 = vld [vmem:[%s1 + $0x20] sm:$0xff]
    %v24 = vld [vmem:[%s1 + $0x28] sm:$0xff]
    %v25 = vld [vmem:[%s1 + $0x30] sm:$0xff]
    %v26 = vld [vmem:[%s1 + $0x38] sm:$0xff]
    %v27 = vld [vmem:[%s1 + $0x40] sm:$0xff]
    %v28 = vld [vmem:[%s1 + $0x48] sm:$0xff]
    %v29 = vld [vmem:[%s1 + $0x50] sm:$0xff]
    %v30 = vld [vmem:[%s1 + $0x58] sm:$0xff]
    %v31 = vld [vmem:[%s1 + $0x60] sm:$0xff]
    %v32 = vld [vmem:[%s1 + $0x68] sm:$0xff]
    %v33 = vld [vmem:[%s1 + $0x70] sm:$0xff]
    %v34 = vld [vmem:[%s1 + $0x78] sm:$0xff]
    %v35 = vld [vmem:[%s2] sm:$0x3]
    %v37 = vlaneseq
    %v38 = vshrl.u32 %v37, 7
    %v39 = vsub.s32 0, %v38
    %v40 = vrot.slane %v35, %v39
    %v41 = vlaneseq
    %v42 = vshrl.u32 %v41, 7
    %v43 = vsub.s32 1, %v42
    %v44 = vrot.slane %v35, %v43
    %v63 = vunpack.c.l.b16 %v19
    %v64 = vunpack.c.h.b16 %v19
    %v65 = vunpack.c.l.b16 %v20
    %v66 = vunpack.c.h.b16 %v20
    %v67 = vunpack.c.l.b16 %v21
    %v68 = vunpack.c.h.b16 %v21
    %v69 = vunpack.c.l.b16 %v22
    %v70 = vunpack.c.h.b16 %v22
    %v71 = vunpack.c.l.b16 %v23
    %v72 = vunpack.c.h.b16 %v23
    %v73 = vunpack.c.l.b16 %v24
    %v74 = vunpack.c.h.b16 %v24
    %v75 = vunpack.c.l.b16 %v25
    %v76 = vunpack.c.h.b16 %v25
    %v77 = vunpack.c.l.b16 %v26
    %v78 = vunpack.c.h.b16 %v26
    %v79 = vunpack.c.l.b16 %v27
    %v80 = vunpack.c.h.b16 %v27
    %v81 = vunpack.c.l.b16 %v28
    %v82 = vunpack.c.h.b16 %v28
    %v83 = vunpack.c.l.b16 %v29
    %v84 = vunpack.c.h.b16 %v29
    %v85 = vunpack.c.l.b16 %v30
    %v86 = vunpack.c.h.b16 %v30
    %v87 = vunpack.c.l.b16 %v31
    %v88 = vunpack.c.h.b16 %v31
    %v89 = vunpack.c.l.b16 %v32
    %v90 = vunpack.c.h.b16 %v32
    %v91 = vunpack.c.l.b16 %v33
    %v92 = vunpack.c.h.b16 %v33
    %v93 = vunpack.c.l.b16 %v34
    %v94 = vunpack.c.h.b16 %v34
    %v95 = vpack.c.b16 %v65, %v63
    %v96 = vpack.c.b16 %v66, %v64
    %v97 = vpack.c.b16 %v69, %v67
    %v98 = vpack.c.b16 %v70, %v68
    %v99 = vpack.c.b16 %v73, %v71
    %v100 = vpack.c.b16 %v74, %v72
    %v101 = vpack.c.b16 %v77, %v75
    %v102 = vpack.c.b16 %v78, %v76
    %v103 = vpack.c.b16 %v81, %v79
    %v104 = vpack.c.b16 %v82, %v80
    %v105 = vpack.c.b16 %v85, %v83
    %v106 = vpack.c.b16 %v86, %v84
    %v107 = vpack.c.b16 %v89, %v87
    %v108 = vpack.c.b16 %v90, %v88
    %v109 = vpack.c.b16 %v93, %v91
    %v110 = vpack.c.b16 %v94, %v92
    %127 = vmatprep.subr.bf16.mxu0 %v110
    %128 = vmatpush1.bf16.msra.mxu0 %v109
    %129 = vmatprep.subr.bf16.mxu0 %v108
    %130 = vmatpush1.bf16.msra.mxu0 %v107
    %131 = vmatprep.subr.bf16.mxu0 %v106
    %132 = vmatpush1.bf16.msra.mxu0 %v105
    %133 = vmatprep.subr.bf16.mxu0 %v104
    %134 = vmatpush1.bf16.msra.mxu0 %v103
    %135 = vmatprep.subr.bf16.mxu0 %v102
    %136 = vmatpush1.bf16.msra.mxu0 %v101
    %137 = vmatprep.subr.bf16.mxu0 %v100
    %138 = vmatpush1.bf16.msra.mxu0 %v99
    %139 = vmatprep.subr.bf16.mxu0 %v98
    %140 = vmatpush1.bf16.msra.mxu0 %v97
    %141 = vmatprep.subr.bf16.mxu0 %v96
    %142 = vmatpush1.bf16.msra.mxu0 %v95
    %143 = vmatprep.subr.bf16.mxu0 0
    %144 = vmatpush2.bf16.msra.mxu0 0
    %145 = vmatprep.subr.bf16.mxu0 0
    %146 = vmatpush2.bf16.msra.mxu0 0
    %147 = vmatprep.subr.bf16.mxu0 0
    %148 = vmatpush2.bf16.msra.mxu0 0
    %149 = vmatprep.subr.bf16.mxu0 0
    %150 = vmatpush2.bf16.msra.mxu0 0
    %151 = vmatprep.subr.bf16.mxu0 0
    %152 = vmatpush2.bf16.msra.mxu0 0
    %153 = vmatprep.subr.bf16.mxu0 0
    %154 = vmatpush2.bf16.msra.mxu0 0
    %155 = vmatprep.subr.bf16.mxu0 0
    %156 = vmatpush2.bf16.msra.mxu0 0
    %157 = vmatprep.subr.bf16.mxu0 0
    %158 = vmatpush2.bf16.msra.mxu0 0
    %159 = vmatprep.mubr.bf16.mxu0 0
    %160 = vmatmul.mubr.bf16.gmra.mxu0 %v18
    %v161 = vpop.f32.mrf.mxu0
    %v162 = vadd.f32 %v40, %v161
    %v163 = vpop.f32.mrf.mxu0
    %v164 = vadd.f32 %v44, %v163
    %v165 = vpop.f32.mrf.mxu0
    %v166 = vadd.f32 %v40, %v165
    %v167 = vpop.f32.mrf.mxu0
    %v168 = vadd.f32 %v44, %v167
    %169 = vdwg.mxu0
    %170 = vst [vmem:[#allocation2] sm:$0xff] %v162
    %171 = vst [vmem:[#allocation2 + $0x8] sm:$0xff] %v164
    %172 = vst [vmem:[#allocation2 + $0x10] sm:$0xff] %v166
    %173 = vst [vmem:[#allocation2 + $0x18] sm:$0xff] %v168
    // Predicated region
    $region14: #{transformer_forward.45} parent=1 // pred_check
      _
    $region15: #{transformer_forward.45} parent=1 // pred_check_branch
      %175 = sbr.rel (0) target = $region17
    $region16: #{transformer_forward.45} parent=1 // pred_region
      %s177 = ssub.s32 512, 512
      %178 = vsyncadd [#allocation3], %s177
      %s179 = sshll.u32 [#allocation2], 4
      %s180 = int_to_ptr.vmem [resolvable:$true] %s179
      %185 = dma.vmem_to_hbm [thread:$0]  %s180, 512, %s3, [#allocation3], 256, 256, 16
    $region17: #{transformer_forward.45} parent=1 // pred_fallthru
      _
    // Predicated region
    $region18: #{transformer_forward.45} parent=1 // pred_check
      _
    $region19: #{transformer_forward.45} parent=1 // pred_check_branch
      %187 = sbr.rel (0) target = $region21
    $region20: #{transformer_forward.45} parent=1 // pred_region
      %188 = dma.done [#allocation3], 512
    $region21: #{transformer_forward.45} parent=1 // pred_fallthru
      _
    %189 = vsyncpa [#allocation3], 1

// kernel: transformer_forward.34
$region0: #{transformer_forward.34}
  #allocation0 [shape = 'u32[]', space=smem, size = 0x4, offset = 0x4, fixed_abs, tag = 'smem constant byte address 0x4 - core index']
  #allocation1 [shape = 'u32[144,128]{1,0:T(1,128)}', space=vmem, size = 0x12000, scoped, tag = 'internal scratch']
  %s0 = inlined_call_operand.vmem [shape: f32[16,128], index: 0, kind: input, shape index: {}]
  %s1 = inlined_call_operand.vmem [shape: f32[16,128], index: 1, kind: input, shape index: {}]
  %s2 = inlined_call_operand.vmem [shape: bf16[128,256], index: 2, kind: input, shape index: {}]
  %s3 = inlined_call_operand.vmem [shape: f32[1,256], index: 3, kind: input, shape index: {}]
  %s4 = inlined_call_operand.vmem [shape: bf16[128,128], index: 4, kind: input, shape index: {}]
  %s5 = inlined_call_operand.vmem [shape: f32[1,128], index: 5, kind: input, shape index: {}]
  %s6 = inlined_call_operand.vmem [shape: f32[16,384], index: 6, kind: output, shape index: {}]
  %s7 = sld [smem:[#allocation0]]
  $region34: #{transformer_forward.34} parent=0
    _
  %s9 = ssub.s32 1, %s7
  %s10 = scalar_select 0, %s9, %s7
  // Predicated region
  $region2: #{transformer_forward.34} parent=0 // pred_check
    _
  $region3: #{transformer_forward.34} parent=0 // pred_check_branch
    %12 = sbr.rel (0) target = $region5
  $region4: #{transformer_forward.34} parent=0 // pred_region
    _
  $region5: #{transformer_forward.34} parent=0 // pred_fallthru
    _
  // Predicated region
  $region6: #{transformer_forward.34} parent=0 // pred_check
    _
  $region7: #{transformer_forward.34} parent=0 // pred_check_branch
    %14 = sbr.rel (0) target = $region9
  $region8: #{transformer_forward.34} parent=0 // pred_region
    _
  $region9: #{transformer_forward.34} parent=0 // pred_fallthru
    _
  // Predicated region
  $region10: #{transformer_forward.34} parent=0 // pred_check
    _
  $region11: #{transformer_forward.34} parent=0 // pred_check_branch
    %16 = sbr.rel (0) target = $region13
  $region12: #{transformer_forward.34} parent=0 // pred_region
    _
  $region13: #{transformer_forward.34} parent=0 // pred_fallthru
    _
  // Predicated region
  $region14: #{transformer_forward.34} parent=0 // pred_check
    _
  $region15: #{transformer_forward.34} parent=0 // pred_check_branch
    %18 = sbr.rel (0) target = $region17
  $region16: #{transformer_forward.34} parent=0 // pred_region
    _
  $region17: #{transformer_forward.34} parent=0 // pred_fallthru
    _
  // Predicated region
  $region18: #{transformer_forward.34} parent=0 // pred_check
    _
  $region19: #{transformer_forward.34} parent=0 // pred_check_branch
    %20 = sbr.rel (0) target = $region21
  $region20: #{transformer_forward.34} parent=0 // pred_region
    _
  $region21: #{transformer_forward.34} parent=0 // pred_fallthru
    _
  // Predicated region
  $region22: #{transformer_forward.34} parent=0 // pred_check
    _
  $region23: #{transformer_forward.34} parent=0 // pred_check_branch
    %22 = sbr.rel (0) target = $region25
  $region24: #{transformer_forward.34} parent=0 // pred_region
    _
  $region25: #{transformer_forward.34} parent=0 // pred_fallthru
    _
  %v24 = vld [vmem:[%s0] sm:$0xff]
  %v25 = vld [vmem:[%s0 + $0x8] sm:$0xff]
  %v26 = vpack.c.bf16 %v25, %v24
  %v27 = vld [vmem:[%s2] sm:$0xff]
  %v28 = vld [vmem:[%s2 + $0x8] sm:$0xff]
  %v29 = vld [vmem:[%s2 + $0x10] sm:$0xff]
  %v30 = vld [vmem:[%s2 + $0x18] sm:$0xff]
  %v31 = vld [vmem:[%s2 + $0x20] sm:$0xff]
  %v32 = vld [vmem:[%s2 + $0x28] sm:$0xff]
  %v33 = vld [vmem:[%s2 + $0x30] sm:$0xff]
  %v34 = vld [vmem:[%s2 + $0x38] sm:$0xff]
  %v35 = vld [vmem:[%s2 + $0x40] sm:$0xff]
  %v36 = vld [vmem:[%s2 + $0x48] sm:$0xff]
  %v37 = vld [vmem:[%s2 + $0x50] sm:$0xff]
  %v38 = vld [vmem:[%s2 + $0x58] sm:$0xff]
  %v39 = vld [vmem:[%s2 + $0x60] sm:$0xff]
  %v40 = vld [vmem:[%s2 + $0x68] sm:$0xff]
  %v41 = vld [vmem:[%s2 + $0x70] sm:$0xff]
  %v42 = vld [vmem:[%s2 + $0x78] sm:$0xff]
  %v43 = vld [vmem:[%s3] sm:$0x3]
  %v45 = vlaneseq
  %v46 = vshrl.u32 %v45, 7
  %v47 = vsub.s32 0, %v46
  %v48 = vrot.slane %v43, %v47
  %v49 = vlaneseq
  %v50 = vshrl.u32 %v49, 7
  %v51 = vsub.s32 1, %v50
  %v52 = vrot.slane %v43, %v51
  %v71 = vunpack.c.l.b16 %v27
  %v72 = vunpack.c.h.b16 %v27
  %v73 = vunpack.c.l.b16 %v28
  %v74 = vunpack.c.h.b16 %v28
  %v75 = vunpack.c.l.b16 %v29
  %v76 = vunpack.c.h.b16 %v29
  %v77 = vunpack.c.l.b16 %v30
  %v78 = vunpack.c.h.b16 %v30
  %v79 = vunpack.c.l.b16 %v31
  %v80 = vunpack.c.h.b16 %v31
  %v81 = vunpack.c.l.b16 %v32
  %v82 = vunpack.c.h.b16 %v32
  %v83 = vunpack.c.l.b16 %v33
  %v84 = vunpack.c.h.b16 %v33
  %v85 = vunpack.c.l.b16 %v34
  %v86 = vunpack.c.h.b16 %v34
  %v87 = vunpack.c.l.b16 %v35
  %v88 = vunpack.c.h.b16 %v35
  %v89 = vunpack.c.l.b16 %v36
  %v90 = vunpack.c.h.b16 %v36
  %v91 = vunpack.c.l.b16 %v37
  %v92 = vunpack.c.h.b16 %v37
  %v93 = vunpack.c.l.b16 %v38
  %v94 = vunpack.c.h.b16 %v38
  %v95 = vunpack.c.l.b16 %v39
  %v96 = vunpack.c.h.b16 %v39
  %v97 = vunpack.c.l.b16 %v40
  %v98 = vunpack.c.h.b16 %v40
  %v99 = vunpack.c.l.b16 %v41
  %v100 = vunpack.c.h.b16 %v41
  %v101 = vunpack.c.l.b16 %v42
  %v102 = vunpack.c.h.b16 %v42
  %v103 = vpack.c.b16 %v73, %v71
  %v104 = vpack.c.b16 %v74, %v72
  %v105 = vpack.c.b16 %v77, %v75
  %v106 = vpack.c.b16 %v78, %v76
  %v107 = vpack.c.b16 %v81, %v79
  %v108 = vpack.c.b16 %v82, %v80
  %v109 = vpack.c.b16 %v85, %v83
  %v110 = vpack.c.b16 %v86, %v84
  %v111 = vpack.c.b16 %v89, %v87
  %v112 = vpack.c.b16 %v90, %v88
  %v113 = vpack.c.b16 %v93, %v91
  %v114 = vpack.c.b16 %v94, %v92
  %v115 = vpack.c.b16 %v97, %v95
  %v116 = vpack.c.b16 %v98, %v96
  %v117 = vpack.c.b16 %v101, %v99
  %v118 = vpack.c.b16 %v102, %v100
  %135 = vmatprep.subr.bf16.mxu0 %v118
  %136 = vmatpush1.bf16.msra.mxu0 %v117
  %137 = vmatprep.subr.bf16.mxu0 %v116
  %138 = vmatpush1.bf16.msra.mxu0 %v115
  %139 = vmatprep.subr.bf16.mxu0 %v114
  %140 = vmatpush1.bf16.msra.mxu0 %v113
  %141 = vmatprep.subr.bf16.mxu0 %v112
  %142 = vmatpush1.bf16.msra.mxu0 %v111
  %143 = vmatprep.subr.bf16.mxu0 %v110
  %144 = vmatpush1.bf16.msra.mxu0 %v109
  %145 = vmatprep.subr.bf16.mxu0 %v108
  %146 = vmatpush1.bf16.msra.mxu0 %v107
  %147 = vmatprep.subr.bf16.mxu0 %v106
  %148 = vmatpush1.bf16.msra.mxu0 %v105
  %149 = vmatprep.subr.bf16.mxu0 %v104
  %150 = vmatpush1.bf16.msra.mxu0 %v103
  %151 = vmatprep.subr.bf16.mxu0 0
  %152 = vmatpush2.bf16.msra.mxu0 0
  %153 = vmatprep.subr.bf16.mxu0 0
  %154 = vmatpush2.bf16.msra.mxu0 0
  %155 = vmatprep.subr.bf16.mxu0 0
  %156 = vmatpush2.bf16.msra.mxu0 0
  %157 = vmatprep.subr.bf16.mxu0 0
  %158 = vmatpush2.bf16.msra.mxu0 0
  %159 = vmatprep.subr.bf16.mxu0 0
  %160 = vmatpush2.bf16.msra.mxu0 0
  %161 = vmatprep.subr.bf16.mxu0 0
  %162 = vmatpush2.bf16.msra.mxu0 0
  %163 = vmatprep.subr.bf16.mxu0 0
  %164 = vmatpush2.bf16.msra.mxu0 0
  %165 = vmatprep.subr.bf16.mxu0 0
  %166 = vmatpush2.bf16.msra.mxu0 0
  %167 = vmatprep.mubr.bf16.mxu0 0
  %168 = vmatmul.mubr.bf16.gmra.mxu0 %v26
  %v169 = vpop.f32.mrf.mxu0
  %v170 = vadd.f32 %v48, %v169
  %v171 = vpop.f32.mrf.mxu0
  %v172 = vadd.f32 %v52, %v171
  %v173 = vpop.f32.mrf.mxu0
  %v174 = vadd.f32 %v48, %v173
  %v175 = vpop.f32.mrf.mxu0
  %v176 = vadd.f32 %v52, %v175
  %177 = vdwg.mxu0
  %v178 = vld [vmem:[%s1] sm:$0xff]
  %v179 = vld [vmem:[%s1 + $0x8] sm:$0xff]
  %v180 = vpack.c.bf16 %v179, %v178
  %v181 = vld [vmem:[%s4] sm:$0xf]
  %v182 = vld [vmem:[%s4 + $0x4] sm:$0xf]
  %v183 = vld [vmem:[%s4 + $0x8] sm:$0xf]
  %v184 = vld [vmem:[%s4 + $0xc] sm:$0xf]
  %v185 = vld [vmem:[%s4 + $0x10] sm:$0xf]
  %v186 = vld [vmem:[%s4 + $0x14] sm:$0xf]
  %v187 = vld [vmem:[%s4 + $0x18] sm:$0xf]
  %v188 = vld [vmem:[%s4 + $0x1c] sm:$0xf]
  %v189 = vld [vmem:[%s4 + $0x20] sm:$0xf]
  %v190 = vld [vmem:[%s4 + $0x24] sm:$0xf]
  %v191 = vld [vmem:[%s4 + $0x28] sm:$0xf]
  %v192 = vld [vmem:[%s4 + $0x2c] sm:$0xf]
  %v193 = vld [vmem:[%s4 + $0x30] sm:$0xf]
  %v194 = vld [vmem:[%s4 + $0x34] sm:$0xf]
  %v195 = vld [vmem:[%s4 + $0x38] sm:$0xf]
  %v196 = vld [vmem:[%s4 + $0x3c] sm:$0xf]
  %v197 = vld [vmem:[%s5] sm:$0x1]
  %v199 = vlaneseq
  %v200 = vshrl.u32 %v199, 7
  %v201 = vsub.s32 0, %v200
  %v202 = vrot.slane %v197, %v201
  %v220 = vunpack.c.l.b16 %v181
  %v221 = vunpack.c.l.b16 %v182
  %v222 = vunpack.c.l.b16 %v183
  %v223 = vunpack.c.l.b16 %v184
  %v224 = vunpack.c.l.b16 %v185
  %v225 = vunpack.c.l.b16 %v186
  %v226 = vunpack.c.l.b16 %v187
  %v227 = vunpack.c.l.b16 %v188
  %v228 = vunpack.c.l.b16 %v189
  %v229 = vunpack.c.l.b16 %v190
  %v230 = vunpack.c.l.b16 %v191
  %v231 = vunpack.c.l.b16 %v192
  %v232 = vunpack.c.l.b16 %v193
  %v233 = vunpack.c.l.b16 %v194
  %v234 = vunpack.c.l.b16 %v195
  %v235 = vunpack.c.l.b16 %v196
  %v236 = vpack.c.b16 %v221, %v220
  %v237 = vpack.c.b16 %v223, %v222
  %v238 = vpack.c.b16 %v225, %v224
  %v239 = vpack.c.b16 %v227, %v226
  %v240 = vpack.c.b16 %v229, %v228
  %v241 = vpack.c.b16 %v231, %v230
  %v242 = vpack.c.b16 %v233, %v232
  %v243 = vpack.c.b16 %v235, %v234
  %252 = vmatprep.subr.bf16.mxu0 0
  %253 = vmatpush1.bf16.msra.mxu0 %v243
  %254 = vmatprep.subr.bf16.mxu0 0
  %255 = vmatpush1.bf16.msra.mxu0 %v242
  %256 = vmatprep.subr.bf16.mxu0 0
  %257 = vmatpush1.bf16.msra.mxu0 %v241
  %258 = vmatprep.subr.bf16.mxu0 0
  %259 = vmatpush1.bf16.msra.mxu0 %v240
  %260 = vmatprep.subr.bf16.mxu0 0
  %261 = vmatpush1.bf16.msra.mxu0 %v239
  %262 = vmatprep.subr.bf16.mxu0 0
  %263 = vmatpush1.bf16.msra.mxu0 %v238
  %264 = vmatprep.subr.bf16.mxu0 0
  %265 = vmatpush1.bf16.msra.mxu0 %v237
  %266 = vmatprep.subr.bf16.mxu0 0
  %267 = vmatpush1.bf16.msra.mxu0 %v236
  %268 = vmatprep.subr.bf16.mxu0 0
  %269 = vmatpush2.bf16.msra.mxu0 0
  %270 = vmatprep.subr.bf16.mxu0 0
  %271 = vmatpush2.bf16.msra.mxu0 0
  %272 = vmatprep.subr.bf16.mxu0 0
  %273 = vmatpush2.bf16.msra.mxu0 0
  %274 = vmatprep.subr.bf16.mxu0 0
  %275 = vmatpush2.bf16.msra.mxu0 0
  %276 = vmatprep.subr.bf16.mxu0 0
  %277 = vmatpush2.bf16.msra.mxu0 0
  %278 = vmatprep.subr.bf16.mxu0 0
  %279 = vmatpush2.bf16.msra.mxu0 0
  %280 = vmatprep.subr.bf16.mxu0 0
  %281 = vmatpush2.bf16.msra.mxu0 0
  %282 = vmatprep.subr.bf16.mxu0 0
  %283 = vmatpush2.bf16.msra.mxu0 0
  %284 = vmatprep.mubr.bf16.mxu0 0
  %285 = vmatmul.mubr.bf16.gmra.mxu0 %v180
  %v286 = vpop.f32.mrf.mxu0
  %v287 = vadd.f32 %v202, %v286
  %v288 = vpop.f32.mrf.mxu0
  %v289 = vpop.f32.mrf.mxu0
  %v290 = vadd.f32 %v202, %v289
  %v291 = vpop.f32.mrf.mxu0
  %292 = vdwg.mxu0
  %293 = vst [vmem:[%s6] sm:$0xff] %v170
  %294 = vst [vmem:[%s6 + $0x8] sm:$0xff] %v172
  %295 = vst [vmem:[%s6 + $0x10] sm:$0xff] %v287
  %296 = vst [vmem:[%s6 + $0x18] sm:$0xff] %v174
  %297 = vst [vmem:[%s6 + $0x20] sm:$0xff] %v176
  %298 = vst [vmem:[%s6 + $0x28] sm:$0xff] %v290
  // Predicated region
  $region26: #{transformer_forward.34} parent=0 // pred_check
    _
  $region27: #{transformer_forward.34} parent=0 // pred_check_branch
    %300 = sbr.rel (0) target = $region29
  $region28: #{transformer_forward.34} parent=0 // pred_region
    _
  $region29: #{transformer_forward.34} parent=0 // pred_fallthru
    _
  // Predicated region
  $region30: #{transformer_forward.34} parent=0 // pred_check
    _
  $region31: #{transformer_forward.34} parent=0 // pred_check_branch
    %302 = sbr.rel (0) target = $region33
  $region32: #{transformer_forward.34} parent=0 // pred_region
    _
  $region33: #{transformer_forward.34} parent=0 // pred_fallthru
    _

// kernel: transformer_forward.32
$region0: #{transformer_forward.32}
  #allocation0 [shape = 'u32[]', space=smem, size = 0x4, offset = 0x4, fixed_abs, tag = 'smem constant byte address 0x4 - core index']
  #allocation1 [shape = 'u32[144,128]{1,0:T(1,128)}', space=vmem, size = 0x12000, scoped, tag = 'internal scratch']
  %s0 = inlined_call_operand.vmem [shape: f32[2,8,8,16], index: 0, kind: input, shape index: {}]
  %s1 = inlined_call_operand.vmem [shape: f32[2,8,8,16], index: 1, kind: input, shape index: {}]
  %s2 = inlined_call_operand.vmem [shape: f32[2,8,8,16], index: 2, kind: input, shape index: {}]
  %s3 = inlined_call_operand.vmem [shape: f32[2,1,8], index: 3, kind: input, shape index: {}]
  %s4 = inlined_call_operand.vmem [shape: f32[2,8,128], index: 4, kind: output, shape index: {}]
  %s5 = sld [smem:[#allocation0]]
  $region49: #{transformer_forward.32} parent=0
    _
  %s7 = ssub.s32 1, %s5
  %s8 = scalar_select 0, %s7, %s5
  loop: start=0, step=1, limit=4
  $region2: #{transformer_forward.32} parent=0 // loop_pre_header
    _
  $region3: #{transformer_forward.32} parent=0 // loop_header
    %s10 = sphi 0, %s14
    %p11 = scmp.ge.s32.totalorder %s10, 4
    %s20 = sphi 0, %s22
    %s23 = sphi 0, %s20
    %s24 = sphi 0, %s23
    %s40 = sphi 0, %s24
    %s46 = sphi 0, %s48
    %s49 = sphi 0, %s46
    %s50 = sphi 0, %s49
    %s66 = sphi 0, %s50
    %s72 = sphi 0, %s74
    %s75 = sphi 0, %s72
    %s76 = sphi 0, %s75
    %s92 = sphi 0, %s76
    %s98 = sphi 0, %s100
    %s101 = sphi 0, %s98
    %s102 = sphi 0, %s101
    %s118 = sphi 0, %s102
    %s124 = sphi 0, %s126
    %s127 = sphi 0, %s124
    %s128 = sphi 0, %s127
    %s144 = sphi 0, %s128
  $region4: #{transformer_forward.32} parent=0 // loop_header_branch
    %13 = sbr.rel (%p11) target = $region8
  $region5: #{transformer_forward.32} parent=0 // loop_body
    %s15 = ssub.s32 %s10, 1
    %s16 = ssub.s32 %s10, 2
    %s17 = sadd.s32 %s10, 1
    %s18 = ssub.s32 %s10, %s17
    %p19 = scmp.eq.s32.totalorder %s18, 0
    %s21 = sadd.s32 %s20, 1
    %s22 = scalar_select %p19, %s20, %s21
    %p25 = pneg %p19
    %p26 = scmp.eq.s32.totalorder %s10, 1
    %p27 = por %p25, %p26
    %p28 = scmp.ne.s32.totalorder %s20, %s23
    %p29 = scmp.eq.s32.totalorder %s10, 0
    %p30 = por %p28, %p29
    %p31 = scmp.ne.s32.totalorder %s20, %s23
    %p32 = scmp.eq.s32.totalorder %s15, 1
    %p33 = por %p31, %p32
    %p34 = scmp.ne.s32.totalorder %s23, %s24
    %p35 = scmp.eq.s32.totalorder %s15, 0
    %p36 = por %p34, %p35
    %p37 = scmp.ne.s32.totalorder %s23, %s24
    %p38 = scmp.eq.s32.totalorder %s16, 1
    %p39 = por %p37, %p38
    %p41 = scmp.ne.s32.totalorder %s24, %s40
    %p42 = scmp.eq.s32.totalorder %s16, 0
    %p43 = por %p41, %p42
    %s44 = ssub.s32 %s10, %s17
    %p45 = scmp.eq.s32.totalorder %s44, 0
    %s47 = sadd.s32 %s46, 1
    %s48 = scalar_select %p45, %s46, %s47
    %p51 = pneg %p45
    %p52 = scmp.eq.s32.totalorder %s10, 1
    %p53 = por %p51, %p52
    %p54 = scmp.ne.s32.totalorder %s46, %s49
    %p55 = scmp.eq.s32.totalorder %s10, 0
    %p56 = por %p54, %p55
    %p57 = scmp.ne.s32.totalorder %s46, %s49
    %p58 = scmp.eq.s32.totalorder %s15, 1
    %p59 = por %p57, %p58
    %p60 = scmp.ne.s32.totalorder %s49, %s50
    %p61 = scmp.eq.s32.totalorder %s15, 0
    %p62 = por %p60, %p61
    %p63 = scmp.ne.s32.totalorder %s49, %s50
    %p64 = scmp.eq.s32.totalorder %s16, 1
    %p65 = por %p63, %p64
    %p67 = scmp.ne.s32.totalorder %s50, %s66
    %p68 = scmp.eq.s32.totalorder %s16, 0
    %p69 = por %p67, %p68
    %s70 = ssub.s32 %s10, %s17
    %p71 = scmp.eq.s32.totalorder %s70, 0
    %s73 = sadd.s32 %s72, 1
    %s74 = scalar_select %p71, %s72, %s73
    %p77 = pneg %p71
    %p78 = scmp.eq.s32.totalorder %s10, 1
    %p79 = por %p77, %p78
    %p80 = scmp.ne.s32.totalorder %s72, %s75
    %p81 = scmp.eq.s32.totalorder %s10, 0
    %p82 = por %p80, %p81
    %p83 = scmp.ne.s32.totalorder %s72, %s75
    %p84 = scmp.eq.s32.totalorder %s15, 1
    %p85 = por %p83, %p84
    %p86 = scmp.ne.s32.totalorder %s75, %s76
    %p87 = scmp.eq.s32.totalorder %s15, 0
    %p88 = por %p86, %p87
    %p89 = scmp.ne.s32.totalorder %s75, %s76
    %p90 = scmp.eq.s32.totalorder %s16, 1
    %p91 = por %p89, %p90
    %p93 = scmp.ne.s32.totalorder %s76, %s92
    %p94 = scmp.eq.s32.totalorder %s16, 0
    %p95 = por %p93, %p94
    %s96 = ssub.s32 %s10, %s17
    %p97 = scmp.eq.s32.totalorder %s96, 0
    %s99 = sadd.s32 %s98, 1
    %s100 = scalar_select %p97, %s98, %s99
    %p103 = pneg %p97
    %p104 = scmp.eq.s32.totalorder %s10, 1
    %p105 = por %p103, %p104
    %p106 = scmp.ne.s32.totalorder %s98, %s101
    %p107 = scmp.eq.s32.totalorder %s10, 0
    %p108 = por %p106, %p107
    %p109 = scmp.ne.s32.totalorder %s98, %s101
    %p110 = scmp.eq.s32.totalorder %s15, 1
    %p111 = por %p109, %p110
    %p112 = scmp.ne.s32.totalorder %s101, %s102
    %p113 = scmp.eq.s32.totalorder %s15, 0
    %p114 = por %p112, %p113
    %p115 = scmp.ne.s32.totalorder %s101, %s102
    %p116 = scmp.eq.s32.totalorder %s16, 1
    %p117 = por %p115, %p116
    %p119 = scmp.ne.s32.totalorder %s102, %s118
    %p120 = scmp.eq.s32.totalorder %s16, 0
    %p121 = por %p119, %p120
    %s122 = ssub.s32 %s10, %s17
    %p123 = scmp.eq.s32.totalorder %s122, 0
    %s125 = sadd.s32 %s124, 1
    %s126 = scalar_select %p123, %s124, %s125
    %p129 = pneg %p123
    %p130 = scmp.eq.s32.totalorder %s10, 1
    %p131 = por %p129, %p130
    %p132 = scmp.ne.s32.totalorder %s124, %s127
    %p133 = scmp.eq.s32.totalorder %s10, 0
    %p134 = por %p132, %p133
    %p135 = scmp.ne.s32.totalorder %s124, %s127
    %p136 = scmp.eq.s32.totalorder %s15, 1
    %p137 = por %p135, %p136
    %p138 = scmp.ne.s32.totalorder %s127, %s128
    %p139 = scmp.eq.s32.totalorder %s15, 0
    %p140 = por %p138, %p139
    %p141 = scmp.ne.s32.totalorder %s127, %s128
    %p142 = scmp.eq.s32.totalorder %s16, 1
    %p143 = por %p141, %p142
    %p145 = scmp.ne.s32.totalorder %s128, %s144
    %p146 = scmp.eq.s32.totalorder %s16, 0
    %p147 = por %p145, %p146
    %p148 = scmp.le.s32.totalorder 1, %s10
    %p149 = scmp.lt.s32.totalorder %s10, 3
    %p150 = pnand %p148, %p149
    %p151 = pneg %p150
    // Predicated region
    $region9: #{transformer_forward.32} parent=5 // pred_check
      _
    $region10: #{transformer_forward.32} parent=5 // pred_check_branch
      %153 = sbr.rel (%p150) target = $region12
    $region11: #{transformer_forward.32} parent=5 // pred_region
      %s154 = ssub.s32 %s10, 1
    $region12: #{transformer_forward.32} parent=5 // pred_fallthru
      _
    %p155 = scmp.lt.s32.totalorder %s10, 2
    // Predicated region
    $region13: #{transformer_forward.32} parent=5 // pred_check
      %p156 = pneg %p155
    $region14: #{transformer_forward.32} parent=5 // pred_check_branch
      %158 = sbr.rel (%p156) target = $region16
    $region15: #{transformer_forward.32} parent=5 // pred_region
      // Predicated region
      $region17: #{transformer_forward.32} parent=15 // pred_check
        %p159 = pneg %p30
      $region18: #{transformer_forward.32} parent=15 // pred_check_branch
        %161 = sbr.rel (%p159) target = $region20
      $region19: #{transformer_forward.32} parent=15 // pred_region
        %p162 = scmp.lt.s32.totalorder %s10, 1
        %s163 = scalar_select %p162, %s10, 1
        %s164 = smul.addr %s163, 8
        %s165 = smul.addr %s164, 8
        %s166 = scalar_lea.vmem %s0, %s165
      $region20: #{transformer_forward.32} parent=15 // pred_fallthru
        _
      // Predicated region
      $region21: #{transformer_forward.32} parent=15 // pred_check
        %p167 = pneg %p56
      $region22: #{transformer_forward.32} parent=15 // pred_check_branch
        %169 = sbr.rel (%p167) target = $region24
      $region23: #{transformer_forward.32} parent=15 // pred_region
        %p170 = scmp.lt.s32.totalorder %s10, 1
        %s171 = scalar_select %p170, %s10, 1
        %s172 = smul.addr %s171, 8
        %s173 = smul.addr %s172, 8
        %s174 = scalar_lea.vmem %s1, %s173
      $region24: #{transformer_forward.32} parent=15 // pred_fallthru
        _
      // Predicated region
      $region25: #{transformer_forward.32} parent=15 // pred_check
        %p175 = pneg %p82
      $region26: #{transformer_forward.32} parent=15 // pred_check_branch
        %177 = sbr.rel (%p175) target = $region28
      $region27: #{transformer_forward.32} parent=15 // pred_region
        %p178 = scmp.lt.s32.totalorder %s10, 1
        %s179 = scalar_select %p178, %s10, 1
        %s180 = smul.addr %s179, 8
        %s181 = smul.addr %s180, 8
        %s182 = scalar_lea.vmem %s2, %s181
      $region28: #{transformer_forward.32} parent=15 // pred_fallthru
        _
      // Predicated region
      $region29: #{transformer_forward.32} parent=15 // pred_check
        %p183 = pneg %p108
      $region30: #{transformer_forward.32} parent=15 // pred_check_branch
        %185 = sbr.rel (%p183) target = $region32
      $region31: #{transformer_forward.32} parent=15 // pred_region
        %p186 = scmp.lt.s32.totalorder %s10, 1
        %s187 = scalar_select %p186, %s10, 1
        %s188 = scalar_lea.vmem %s3, %s187
      $region32: #{transformer_forward.32} parent=15 // pred_fallthru
        _
    $region16: #{transformer_forward.32} parent=5 // pred_fallthru
      _
    %p189 = scmp.le.s32.totalorder 1, %s10
    %p190 = scmp.lt.s32.totalorder %s10, 3
    %p191 = pnand %p189, %p190
    %p192 = pneg %p191
    // Predicated region
    $region33: #{transformer_forward.32} parent=5 // pred_check
      _
    $region34: #{transformer_forward.32} parent=5 // pred_check_branch
      %194 = sbr.rel (%p191) target = $region36
    $region35: #{transformer_forward.32} parent=5 // pred_region
      %s195 = ssub.s32 %s10, 1
      %p196 = scmp.lt.s32.totalorder %s15, 1
      %s197 = scalar_select %p196, %s15, 1
      %s198 = smul.addr %s197, 8
      %s199 = smul.addr %s198, 8
      %s200 = scalar_lea.vmem %s0, %s199
      %p201 = pneg %p36
      %p202 = pneg %p33
      %p203 = scmp.lt.s32.totalorder %s15, 1
      %s204 = scalar_select %p203, %s15, 1
      %s205 = smul.addr %s204, 8
      %s206 = smul.addr %s205, 8
      %s207 = scalar_lea.vmem %s1, %s206
      %p208 = pneg %p62
      %p209 = pneg %p59
      %p210 = scmp.lt.s32.totalorder %s15, 1
      %s211 = scalar_select %p210, %s15, 1
      %s212 = smul.addr %s211, 8
      %s213 = smul.addr %s212, 8
      %s214 = scalar_lea.vmem %s2, %s213
      %p215 = pneg %p88
      %p216 = pneg %p85
      %p217 = scmp.lt.s32.totalorder %s15, 1
      %s218 = scalar_select %p217, %s15, 1
      %s219 = scalar_lea.vmem %s3, %s218
      %p220 = pneg %p114
      %p221 = pneg %p111
      %p222 = pneg %p140
      %p223 = pneg %p137
      %p224 = scmp.lt.s32.totalorder %s15, 1
      %s225 = scalar_select %p224, %s15, 1
      %s226 = smul.addr %s225, 8
      %s227 = scalar_lea.vmem %s4, %s226
      %p228 = scmp.lt.s32.totalorder %s15, 1
      %s229 = scalar_select %p228, %s15, 1
      %s230 = smul.addr %s229, 8
      %s231 = smul.addr %s230, 8
      %s232 = scalar_lea.vmem %s0, %s231
      %p233 = scmp.lt.s32.totalorder %s15, 1
      %s234 = scalar_select %p233, %s15, 1
      %s235 = smul.addr %s234, 8
      %s236 = smul.addr %s235, 8
      %s237 = scalar_lea.vmem %s1, %s236
      %p238 = scmp.lt.s32.totalorder %s15, 1
      %s239 = scalar_select %p238, %s15, 1
      %s240 = smul.addr %s239, 8
      %s241 = smul.addr %s240, 8
      %s242 = scalar_lea.vmem %s2, %s241
      %p243 = scmp.lt.s32.totalorder %s15, 1
      %s244 = scalar_select %p243, %s15, 1
      %s245 = scalar_lea.vmem %s3, %s244
      %p246 = scmp.lt.s32.totalorder %s15, 1
      %s247 = scalar_select %p246, %s15, 1
      %s248 = smul.addr %s247, 8
      %s249 = scalar_lea.vmem %s4, %s248
      %v251 = vld [vmem:[%s232] sm:$0xff]
      %v252 = vld [vmem:[%s232 + $0x8] sm:$0xff]
      %v253 = vld [vmem:[%s232 + $0x10] sm:$0xff]
      %v254 = vld [vmem:[%s232 + $0x18] sm:$0xff]
      %v255 = vld [vmem:[%s232 + $0x20] sm:$0xff]
      %v256 = vld [vmem:[%s232 + $0x28] sm:$0xff]
      %v257 = vld [vmem:[%s232 + $0x30] sm:$0xff]
      %v258 = vld [vmem:[%s232 + $0x38] sm:$0xff]
      %v259 = vpack.c.bf16 %v251, %v251
      %v260 = vpack.c.bf16 %v252, %v252
      %v261 = vpack.c.bf16 %v253, %v253
      %v262 = vpack.c.bf16 %v254, %v254
      %v263 = vpack.c.bf16 %v255, %v255
      %v264 = vpack.c.bf16 %v256, %v256
      %v265 = vpack.c.bf16 %v257, %v257
      %v266 = vpack.c.bf16 %v258, %v258
      %v267 = vld [vmem:[%s237] sm:$0xff]
      %v268 = vld [vmem:[%s237 + $0x8] sm:$0xff]
      %v269 = vld [vmem:[%s237 + $0x10] sm:$0xff]
      %v270 = vld [vmem:[%s237 + $0x18] sm:$0xff]
      %v271 = vld [vmem:[%s237 + $0x20] sm:$0xff]
      %v272 = vld [vmem:[%s237 + $0x28] sm:$0xff]
      %v273 = vld [vmem:[%s237 + $0x30] sm:$0xff]
      %v274 = vld [vmem:[%s237 + $0x38] sm:$0xff]
      %v275 = vpack.c.bf16 %v267, %v267
      %v276 = vpack.c.bf16 %v268, %v268
      %v277 = vpack.c.bf16 %v269, %v269
      %v278 = vpack.c.bf16 %v270, %v270
      %v279 = vpack.c.bf16 %v271, %v271
      %v280 = vpack.c.bf16 %v272, %v272
      %v281 = vpack.c.bf16 %v273, %v273
      %v282 = vpack.c.bf16 %v274, %v274
      %v283 = vld [vmem:[%s242] sm:$0xff]
      %v284 = vld [vmem:[%s242 + $0x8] sm:$0xff]
      %v285 = vld [vmem:[%s242 + $0x10] sm:$0xff]
      %v286 = vld [vmem:[%s242 + $0x18] sm:$0xff]
      %v287 = vld [vmem:[%s242 + $0x20] sm:$0xff]
      %v288 = vld [vmem:[%s242 + $0x28] sm:$0xff]
      %v289 = vld [vmem:[%s242 + $0x30] sm:$0xff]
      %v290 = vld [vmem:[%s242 + $0x38] sm:$0xff]
      %v291 = vpack.c.bf16 %v283, %v283
      %v292 = vpack.c.bf16 %v284, %v284
      %v293 = vpack.c.bf16 %v285, %v285
      %v294 = vpack.c.bf16 %v286, %v286
      %v295 = vpack.c.bf16 %v287, %v287
      %v296 = vpack.c.bf16 %v288, %v288
      %v297 = vpack.c.bf16 %v289, %v289
      %v298 = vpack.c.bf16 %v290, %v290
      %vm299 = vcmask 130048
      %v301 = vsel %vm299, %v259, 0
      %v304 = vsel %vm299, %v275, 0
      %306 = vmatprep.subr.bf16.mxu0 0
      %307 = vmatpush1.bf16.xpose.msra.mxu0 0
      %308 = vmatprep.subr.bf16.mxu0 0
      %309 = vmatpush1.bf16.xpose.msra.mxu0 0
      %310 = vmatprep.subr.bf16.mxu0 0
      %311 = vmatpush1.bf16.xpose.msra.mxu0 0
      %312 = vmatprep.subr.bf16.mxu0 0
      %313 = vmatpush1.bf16.xpose.msra.mxu0 0
      %314 = vmatprep.subr.bf16.mxu0 0
      %315 = vmatpush1.bf16.xpose.msra.mxu0 0
      %316 = vmatprep.subr.bf16.mxu0 0
      %317 = vmatpush1.bf16.xpose.msra.mxu0 0
      %318 = vmatprep.subr.bf16.mxu0 0
      %319 = vmatpush1.bf16.xpose.msra.mxu0 0
      %320 = vmatprep.subr.bf16.mxu0 0
      %321 = vmatpush1.bf16.xpose.msra.mxu0 %v304
      %322 = vmatprep.subr.bf16.mxu0 0
      %323 = vmatpush2.bf16.xpose.msra.mxu0 0
      %324 = vmatprep.subr.bf16.mxu0 0
      %325 = vmatpush2.bf16.xpose.msra.mxu0 0
      %326 = vmatprep.subr.bf16.mxu0 0
      %327 = vmatpush2.bf16.xpose.msra.mxu0 0
      %328 = vmatprep.subr.bf16.mxu0 0
      %329 = vmatpush2.bf16.xpose.msra.mxu0 0
      %330 = vmatprep.subr.bf16.mxu0 0
      %331 = vmatpush2.bf16.xpose.msra.mxu0 0
      %332 = vmatprep.subr.bf16.mxu0 0
      %333 = vmatpush2.bf16.xpose.msra.mxu0 0
      %334 = vmatprep.subr.bf16.mxu0 0
      %335 = vmatpush2.bf16.xpose.msra.mxu0 0
      %336 = vmatprep.subr.bf16.mxu0 0
      %337 = vmatpush2.bf16.xpose.msra.mxu0 0
      %338 = vmatprep.mubr.bf16.mxu0 0
      %339 = vmatmul.mubr.bf16.gmra.mxu0 %v301
      %v340 = vpop.f32.mrf.mxu0
      %v341 = vadd.f32 0.0, %v340
      %v342 = vpop.f32.mrf.mxu0
      %v343 = vpop.f32.mrf.mxu0
      %v344 = vpop.f32.mrf.mxu0
      %345 = vdwg.mxu0
      %v347 = vsel %vm299, %v260, 0
      %v350 = vsel %vm299, %v276, 0
      %352 = vmatprep.subr.bf16.mxu0 0
      %353 = vmatpush1.bf16.xpose.msra.mxu0 0
      %354 = vmatprep.subr.bf16.mxu0 0
      %355 = vmatpush1.bf16.xpose.msra.mxu0 0
      %356 = vmatprep.subr.bf16.mxu0 0
      %357 = vmatpush1.bf16.xpose.msra.mxu0 0
      %358 = vmatprep.subr.bf16.mxu0 0
      %359 = vmatpush1.bf16.xpose.msra.mxu0 0
      %360 = vmatprep.subr.bf16.mxu0 0
      %361 = vmatpush1.bf16.xpose.msra.mxu0 0
      %362 = vmatprep.subr.bf16.mxu0 0
      %363 = vmatpush1.bf16.xpose.msra.mxu0 0
      %364 = vmatprep.subr.bf16.mxu0 0
      %365 = vmatpush1.bf16.xpose.msra.mxu0 0
      %366 = vmatprep.subr.bf16.mxu0 0
      %367 = vmatpush1.bf16.xpose.msra.mxu0 %v350
      %368 = vmatprep.subr.bf16.mxu0 0
      %369 = vmatpush2.bf16.xpose.msra.mxu0 0
      %370 = vmatprep.subr.bf16.mxu0 0
      %371 = vmatpush2.bf16.xpose.msra.mxu0 0
      %372 = vmatprep.subr.bf16.mxu0 0
      %373 = vmatpush2.bf16.xpose.msra.mxu0 0
      %374 = vmatprep.subr.bf16.mxu0 0
      %375 = vmatpush2.bf16.xpose.msra.mxu0 0
      %376 = vmatprep.subr.bf16.mxu0 0
      %377 = vmatpush2.bf16.xpose.msra.mxu0 0
      %378 = vmatprep.subr.bf16.mxu0 0
      %379 = vmatpush2.bf16.xpose.msra.mxu0 0
      %380 = vmatprep.subr.bf16.mxu0 0
      %381 = vmatpush2.bf16.xpose.msra.mxu0 0
      %382 = vmatprep.subr.bf16.mxu0 0
      %383 = vmatpush2.bf16.xpose.msra.mxu0 0
      %384 = vmatprep.mubr.bf16.mxu0 0
      %385 = vmatmul.mubr.bf16.gmra.mxu0 %v347
      %v386 = vpop.f32.mrf.mxu0
      %v387 = vadd.f32 0.0, %v386
      %v388 = vpop.f32.mrf.mxu0
      %v389 = vpop.f32.mrf.mxu0
      %v390 = vpop.f32.mrf.mxu0
      %391 = vdwg.mxu0
      %v393 = vsel %vm299, %v261, 0
      %v396 = vsel %vm299, %v277, 0
      %398 = vmatprep.subr.bf16.mxu0 0
      %399 = vmatpush1.bf16.xpose.msra.mxu0 0
      %400 = vmatprep.subr.bf16.mxu0 0
      %401 = vmatpush1.bf16.xpose.msra.mxu0 0
      %402 = vmatprep.subr.bf16.mxu0 0
      %403 = vmatpush1.bf16.xpose.msra.mxu0 0
      %404 = vmatprep.subr.bf16.mxu0 0
      %405 = vmatpush1.bf16.xpose.msra.mxu0 0
      %406 = vmatprep.subr.bf16.mxu0 0
      %407 = vmatpush1.bf16.xpose.msra.mxu0 0
      %408 = vmatprep.subr.bf16.mxu0 0
      %409 = vmatpush1.bf16.xpose.msra.mxu0 0
      %410 = vmatprep.subr.bf16.mxu0 0
      %411 = vmatpush1.bf16.xpose.msra.mxu0 0
      %412 = vmatprep.subr.bf16.mxu0 0
      %413 = vmatpush1.bf16.xpose.msra.mxu0 %v396
      %414 = vmatprep.subr.bf16.mxu0 0
      %415 = vmatpush2.bf16.xpose.msra.mxu0 0
      %416 = vmatprep.subr.bf16.mxu0 0
      %417 = vmatpush2.bf16.xpose.msra.mxu0 0
      %418 = vmatprep.subr.bf16.mxu0 0
      %419 = vmatpush2.bf16.xpose.msra.mxu0 0
      %420 = vmatprep.subr.bf16.mxu0 0
      %421 = vmatpush2.bf16.xpose.msra.mxu0 0
      %422 = vmatprep.subr.bf16.mxu0 0
      %423 = vmatpush2.bf16.xpose.msra.mxu0 0
      %424 = vmatprep.subr.bf16.mxu0 0
      %425 = vmatpush2.bf16.xpose.msra.mxu0 0
      %426 = vmatprep.subr.bf16.mxu0 0
      %427 = vmatpush2.bf16.xpose.msra.mxu0 0
      %428 = vmatprep.subr.bf16.mxu0 0
      %429 = vmatpush2.bf16.xpose.msra.mxu0 0
      %430 = vmatprep.mubr.bf16.mxu0 0
      %431 = vmatmul.mubr.bf16.gmra.mxu0 %v393
      %v432 = vpop.f32.mrf.mxu0
      %v433 = vadd.f32 0.0, %v432
      %v434 = vpop.f32.mrf.mxu0
      %v435 = vpop.f32.mrf.mxu0
      %v436 = vpop.f32.mrf.mxu0
      %437 = vdwg.mxu0
      %v439 = vsel %vm299, %v262, 0
      %v442 = vsel %vm299, %v278, 0
      %444 = vmatprep.subr.bf16.mxu0 0
      %445 = vmatpush1.bf16.xpose.msra.mxu0 0
      %446 = vmatprep.subr.bf16.mxu0 0
      %447 = vmatpush1.bf16.xpose.msra.mxu0 0
      %448 = vmatprep.subr.bf16.mxu0 0
      %449 = vmatpush1.bf16.xpose.msra.mxu0 0
      %450 = vmatprep.subr.bf16.mxu0 0
      %451 = vmatpush1.bf16.xpose.msra.mxu0 0
      %452 = vmatprep.subr.bf16.mxu0 0
      %453 = vmatpush1.bf16.xpose.msra.mxu0 0
      %454 = vmatprep.subr.bf16.mxu0 0
      %455 = vmatpush1.bf16.xpose.msra.mxu0 0
      %456 = vmatprep.subr.bf16.mxu0 0
      %457 = vmatpush1.bf16.xpose.msra.mxu0 0
      %458 = vmatprep.subr.bf16.mxu0 0
      %459 = vmatpush1.bf16.xpose.msra.mxu0 %v442
      %460 = vmatprep.subr.bf16.mxu0 0
      %461 = vmatpush2.bf16.xpose.msra.mxu0 0
      %462 = vmatprep.subr.bf16.mxu0 0
      %463 = vmatpush2.bf16.xpose.msra.mxu0 0
      %464 = vmatprep.subr.bf16.mxu0 0
      %465 = vmatpush2.bf16.xpose.msra.mxu0 0
      %466 = vmatprep.subr.bf16.mxu0 0
      %467 = vmatpush2.bf16.xpose.msra.mxu0 0
      %468 = vmatprep.subr.bf16.mxu0 0
      %469 = vmatpush2.bf16.xpose.msra.mxu0 0
      %470 = vmatprep.subr.bf16.mxu0 0
      %471 = vmatpush2.bf16.xpose.msra.mxu0 0
      %472 = vmatprep.subr.bf16.mxu0 0
      %473 = vmatpush2.bf16.xpose.msra.mxu0 0
      %474 = vmatprep.subr.bf16.mxu0 0
      %475 = vmatpush2.bf16.xpose.msra.mxu0 0
      %476 = vmatprep.mubr.bf16.mxu0 0
      %477 = vmatmul.mubr.bf16.gmra.mxu0 %v439
      %v478 = vpop.f32.mrf.mxu0
      %v479 = vadd.f32 0.0, %v478
      %v480 = vpop.f32.mrf.mxu0
      %v481 = vpop.f32.mrf.mxu0
      %v482 = vpop.f32.mrf.mxu0
      %483 = vdwg.mxu0
      %v485 = vsel %vm299, %v263, 0
      %v488 = vsel %vm299, %v279, 0
      %490 = vmatprep.subr.bf16.mxu0 0
      %491 = vmatpush1.bf16.xpose.msra.mxu0 0
      %492 = vmatprep.subr.bf16.mxu0 0
      %493 = vmatpush1.bf16.xpose.msra.mxu0 0
      %494 = vmatprep.subr.bf16.mxu0 0
      %495 = vmatpush1.bf16.xpose.msra.mxu0 0
      %496 = vmatprep.subr.bf16.mxu0 0
      %497 = vmatpush1.bf16.xpose.msra.mxu0 0
      %498 = vmatprep.subr.bf16.mxu0 0
      %499 = vmatpush1.bf16.xpose.msra.mxu0 0
      %500 = vmatprep.subr.bf16.mxu0 0
      %501 = vmatpush1.bf16.xpose.msra.mxu0 0
      %502 = vmatprep.subr.bf16.mxu0 0
      %503 = vmatpush1.bf16.xpose.msra.mxu0 0
      %504 = vmatprep.subr.bf16.mxu0 0
      %505 = vmatpush1.bf16.xpose.msra.mxu0 %v488
      %506 = vmatprep.subr.bf16.mxu0 0
      %507 = vmatpush2.bf16.xpose.msra.mxu0 0
      %508 = vmatprep.subr.bf16.mxu0 0
      %509 = vmatpush2.bf16.xpose.msra.mxu0 0
      %510 = vmatprep.subr.bf16.mxu0 0
      %511 = vmatpush2.bf16.xpose.msra.mxu0 0
      %512 = vmatprep.subr.bf16.mxu0 0
      %513 = vmatpush2.bf16.xpose.msra.mxu0 0
      %514 = vmatprep.subr.bf16.mxu0 0
      %515 = vmatpush2.bf16.xpose.msra.mxu0 0
      %516 = vmatprep.subr.bf16.mxu0 0
      %517 = vmatpush2.bf16.xpose.msra.mxu0 0
      %518 = vmatprep.subr.bf16.mxu0 0
      %519 = vmatpush2.bf16.xpose.msra.mxu0 0
      %520 = vmatprep.subr.bf16.mxu0 0
      %521 = vmatpush2.bf16.xpose.msra.mxu0 0
      %522 = vmatprep.mubr.bf16.mxu0 0
      %523 = vmatmul.mubr.bf16.gmra.mxu0 %v485
      %v524 = vpop.f32.mrf.mxu0
      %v525 = vadd.f32 0.0, %v524
      %v526 = vpop.f32.mrf.mxu0
      %v527 = vpop.f32.mrf.mxu0
      %v528 = vpop.f32.mrf.mxu0
      %529 = vdwg.mxu0
      %v531 = vsel %vm299, %v264, 0
      %v534 = vsel %vm299, %v280, 0
      %536 = vmatprep.subr.bf16.mxu0 0
      %537 = vmatpush1.bf16.xpose.msra.mxu0 0
      %538 = vmatprep.subr.bf16.mxu0 0
      %539 = vmatpush1.bf16.xpose.msra.mxu0 0
      %540 = vmatprep.subr.bf16.mxu0 0
      %541 = vmatpush1.bf16.xpose.msra.mxu0 0
      %542 = vmatprep.subr.bf16.mxu0 0
      %543 = vmatpush1.bf16.xpose.msra.mxu0 0
      %544 = vmatprep.subr.bf16.mxu0 0
      %545 = vmatpush1.bf16.xpose.msra.mxu0 0
      %546 = vmatprep.subr.bf16.mxu0 0
      %547 = vmatpush1.bf16.xpose.msra.mxu0 0
      %548 = vmatprep.subr.bf16.mxu0 0
      %549 = vmatpush1.bf16.xpose.msra.mxu0 0
      %550 = vmatprep.subr.bf16.mxu0 0
      %551 = vmatpush1.bf16.xpose.msra.mxu0 %v534
      %552 = vmatprep.subr.bf16.mxu0 0
      %553 = vmatpush2.bf16.xpose.msra.mxu0 0
      %554 = vmatprep.subr.bf16.mxu0 0
      %555 = vmatpush2.bf16.xpose.msra.mxu0 0
      %556 = vmatprep.subr.bf16.mxu0 0
      %557 = vmatpush2.bf16.xpose.msra.mxu0 0
      %558 = vmatprep.subr.bf16.mxu0 0
      %559 = vmatpush2.bf16.xpose.msra.mxu0 0
      %560 = vmatprep.subr.bf16.mxu0 0
      %561 = vmatpush2.bf16.xpose.msra.mxu0 0
      %562 = vmatprep.subr.bf16.mxu0 0
      %563 = vmatpush2.bf16.xpose.msra.mxu0 0
      %564 = vmatprep.subr.bf16.mxu0 0
      %565 = vmatpush2.bf16.xpose.msra.mxu0 0
      %566 = vmatprep.subr.bf16.mxu0 0
      %567 = vmatpush2.bf16.xpose.msra.mxu0 0
      %568 = vmatprep.mubr.bf16.mxu0 0
      %569 = vmatmul.mubr.bf16.gmra.mxu0 %v531
      %v570 = vpop.f32.mrf.mxu0
      %v571 = vadd.f32 0.0, %v570
      %v572 = vpop.f32.mrf.mxu0
      %v573 = vpop.f32.mrf.mxu0
      %v574 = vpop.f32.mrf.mxu0
      %575 = vdwg.mxu0
      %v577 = vsel %vm299, %v265, 0
      %v580 = vsel %vm299, %v281, 0
      %582 = vmatprep.subr.bf16.mxu0 0
      %583 = vmatpush1.bf16.xpose.msra.mxu0 0
      %584 = vmatprep.subr.bf16.mxu0 0
      %585 = vmatpush1.bf16.xpose.msra.mxu0 0
      %586 = vmatprep.subr.bf16.mxu0 0
      %587 = vmatpush1.bf16.xpose.msra.mxu0 0
      %588 = vmatprep.subr.bf16.mxu0 0
      %589 = vmatpush1.bf16.xpose.msra.mxu0 0
      %590 = vmatprep.subr.bf16.mxu0 0
      %591 = vmatpush1.bf16.xpose.msra.mxu0 0
      %592 = vmatprep.subr.bf16.mxu0 0
      %593 = vmatpush1.bf16.xpose.msra.mxu0 0
      %594 = vmatprep.subr.bf16.mxu0 0
      %595 = vmatpush1.bf16.xpose.msra.mxu0 0
      %596 = vmatprep.subr.bf16.mxu0 0
      %597 = vmatpush1.bf16.xpose.msra.mxu0 %v580
      %598 = vmatprep.subr.bf16.mxu0 0
      %599 = vmatpush2.bf16.xpose.msra.mxu0 0
      %600 = vmatprep.subr.bf16.mxu0 0
      %601 = vmatpush2.bf16.xpose.msra.mxu0 0
      %602 = vmatprep.subr.bf16.mxu0 0
      %603 = vmatpush2.bf16.xpose.msra.mxu0 0
      %604 = vmatprep.subr.bf16.mxu0 0
      %605 = vmatpush2.bf16.xpose.msra.mxu0 0
      %606 = vmatprep.subr.bf16.mxu0 0
      %607 = vmatpush2.bf16.xpose.msra.mxu0 0
      %608 = vmatprep.subr.bf16.mxu0 0
      %609 = vmatpush2.bf16.xpose.msra.mxu0 0
      %610 = vmatprep.subr.bf16.mxu0 0
      %611 = vmatpush2.bf16.xpose.msra.mxu0 0
      %612 = vmatprep.subr.bf16.mxu0 0
      %613 = vmatpush2.bf16.xpose.msra.mxu0 0
      %614 = vmatprep.mubr.bf16.mxu0 0
      %615 = vmatmul.mubr.bf16.gmra.mxu0 %v577
      %v616 = vpop.f32.mrf.mxu0
      %v617 = vadd.f32 0.0, %v616
      %v618 = vpop.f32.mrf.mxu0
      %v619 = vpop.f32.mrf.mxu0
      %v620 = vpop.f32.mrf.mxu0
      %621 = vdwg.mxu0
      %v623 = vsel %vm299, %v266, 0
      %v626 = vsel %vm299, %v282, 0
      %628 = vmatprep.subr.bf16.mxu0 0
      %629 = vmatpush1.bf16.xpose.msra.mxu0 0
      %630 = vmatprep.subr.bf16.mxu0 0
      %631 = vmatpush1.bf16.xpose.msra.mxu0 0
      %632 = vmatprep.subr.bf16.mxu0 0
      %633 = vmatpush1.bf16.xpose.msra.mxu0 0
      %634 = vmatprep.subr.bf16.mxu0 0
      %635 = vmatpush1.bf16.xpose.msra.mxu0 0
      %636 = vmatprep.subr.bf16.mxu0 0
      %637 = vmatpush1.bf16.xpose.msra.mxu0 0
      %638 = vmatprep.subr.bf16.mxu0 0
      %639 = vmatpush1.bf16.xpose.msra.mxu0 0
      %640 = vmatprep.subr.bf16.mxu0 0
      %641 = vmatpush1.bf16.xpose.msra.mxu0 0
      %642 = vmatprep.subr.bf16.mxu0 0
      %643 = vmatpush1.bf16.xpose.msra.mxu0 %v626
      %644 = vmatprep.subr.bf16.mxu0 0
      %645 = vmatpush2.bf16.xpose.msra.mxu0 0
      %646 = vmatprep.subr.bf16.mxu0 0
      %647 = vmatpush2.bf16.xpose.msra.mxu0 0
      %648 = vmatprep.subr.bf16.mxu0 0
      %649 = vmatpush2.bf16.xpose.msra.mxu0 0
      %650 = vmatprep.subr.bf16.mxu0 0
      %651 = vmatpush2.bf16.xpose.msra.mxu0 0
      %652 = vmatprep.subr.bf16.mxu0 0
      %653 = vmatpush2.bf16.xpose.msra.mxu0 0
      %654 = vmatprep.subr.bf16.mxu0 0
      %655 = vmatpush2.bf16.xpose.msra.mxu0 0
      %656 = vmatprep.subr.bf16.mxu0 0
      %657 = vmatpush2.bf16.xpose.msra.mxu0 0
      %658 = vmatprep.subr.bf16.mxu0 0
      %659 = vmatpush2.bf16.xpose.msra.mxu0 0
      %660 = vmatprep.mubr.bf16.mxu0 0
      %661 = vmatmul.mubr.bf16.gmra.mxu0 %v623
      %v662 = vpop.f32.mrf.mxu0
      %v663 = vadd.f32 0.0, %v662
      %v664 = vpop.f32.mrf.mxu0
      %v665 = vpop.f32.mrf.mxu0
      %v666 = vpop.f32.mrf.mxu0
      %667 = vdwg.mxu0
      %v668 = vld [vmem:[%s245] sm:$0x1]
      %vm669 = vcmp.ne.f32.partialorder %v668, 0.0
      %v670 = vlaneseq
      %v671 = vshrl.u32 %v670, 7
      %v672 = vlaneseq
      %v673 = vand.u32 %v672, 127
      %vm674 = vcmp.ge.s32.totalorder %v671, %v673
      %v675 = vsel %vm669, 1, 0
      %v676 = vlaneseq
      %v677 = vshrl.u32 %v676, 7
      %v678 = vsub.s32 0, %v677
      %v679 = vrot.slane %v675, %v678
      %vm680 = vcmp.eq.s32.totalorder %v679, 1
      %vm681 = vmand %vm680, %vm674
      %v682 = vsel %vm681, 1, 0
      %vm683 = vcmp.eq.s32.totalorder %v682, 1
      %v684 = vsel %vm683, %v341, -1e+20
      %v685 = vsel %vm683, %v387, -1e+20
      %v686 = vsel %vm683, %v433, -1e+20
      %v687 = vsel %vm683, %v479, -1e+20
      %v688 = vsel %vm683, %v525, -1e+20
      %v689 = vsel %vm683, %v571, -1e+20
      %v690 = vsel %vm683, %v617, -1e+20
      %v691 = vsel %vm683, %v663, -1e+20
      %v692 = vmul.f32 %v684, 0.25
      %v693 = vmul.f32 %v685, 0.25
      %v694 = vmul.f32 %v686, 0.25
      %v695 = vmul.f32 %v687, 0.25
      %v696 = vmul.f32 %v688, 0.25
      %v697 = vmul.f32 %v689, 0.25
      %v698 = vmul.f32 %v690, 0.25
      %v699 = vmul.f32 %v691, 0.25
      %vm700 = vcmask 64512
      %v701 = vsel %vm700, %v692, -inf
      %702 = vmax.xlane.f32.xlu0 %v701
      %v703 = vpop.xlane.xlu0 %702
      %v704 = vsel %vm700, %v693, -inf
      %705 = vmax.xlane.f32.xlu0 %v704
      %v706 = vpop.xlane.xlu0 %705
      %v707 = vsel %vm700, %v694, -inf
      %708 = vmax.xlane.f32.xlu0 %v707
      %v709 = vpop.xlane.xlu0 %708
      %v710 = vsel %vm700, %v695, -inf
      %711 = vmax.xlane.f32.xlu0 %v710
      %v712 = vpop.xlane.xlu0 %711
      %v713 = vsel %vm700, %v696, -inf
      %714 = vmax.xlane.f32.xlu0 %v713
      %v715 = vpop.xlane.xlu0 %714
      %v716 = vsel %vm700, %v697, -inf
      %717 = vmax.xlane.f32.xlu0 %v716
      %v718 = vpop.xlane.xlu0 %717
      %v719 = vsel %vm700, %v698, -inf
      %720 = vmax.xlane.f32.xlu0 %v719
      %v721 = vpop.xlane.xlu0 %720
      %v722 = vsel %vm700, %v699, -inf
      %723 = vmax.xlane.f32.xlu0 %v722
      %v724 = vpop.xlane.xlu0 %723
      %v725 = vsub.f32 %v692, %v703
      %v726 = vsub.f32 %v693, %v706
      %v727 = vsub.f32 %v694, %v709
      %v728 = vsub.f32 %v695, %v712
      %v729 = vsub.f32 %v696, %v715
      %v730 = vsub.f32 %v697, %v718
      %v731 = vsub.f32 %v698, %v721
      %v732 = vsub.f32 %v699, %v724
      %v733 = vmul.f32 %v725, 1.442695
      %v734 = vpow.pop %v733
      %v735 = vmul.f32 %v726, 1.442695
      %v736 = vpow.pop %v735
      %v737 = vmul.f32 %v727, 1.442695
      %v738 = vpow.pop %v737
      %v739 = vmul.f32 %v728, 1.442695
      %v740 = vpow.pop %v739
      %v741 = vmul.f32 %v729, 1.442695
      %v742 = vpow.pop %v741
      %v743 = vmul.f32 %v730, 1.442695
      %v744 = vpow.pop %v743
      %v745 = vmul.f32 %v731, 1.442695
      %v746 = vpow.pop %v745
      %v747 = vmul.f32 %v732, 1.442695
      %v748 = vpow.pop %v747
      %v749 = vsel %vm700, %v734, 0.0
      %750 = vadd.xlane.f32.xlu0 %v749
      %v751 = vpop.xlane.xlu0 %750
      %v752 = vsel %vm700, %v736, 0.0
      %753 = vadd.xlane.f32.xlu0 %v752
      %v754 = vpop.xlane.xlu0 %753
      %v755 = vsel %vm700, %v738, 0.0
      %756 = vadd.xlane.f32.xlu0 %v755
      %v757 = vpop.xlane.xlu0 %756
      %v758 = vsel %vm700, %v740, 0.0
      %759 = vadd.xlane.f32.xlu0 %v758
      %v760 = vpop.xlane.xlu0 %759
      %v761 = vsel %vm700, %v742, 0.0
      %762 = vadd.xlane.f32.xlu0 %v761
      %v763 = vpop.xlane.xlu0 %762
      %v764 = vsel %vm700, %v744, 0.0
      %765 = vadd.xlane.f32.xlu0 %v764
      %v766 = vpop.xlane.xlu0 %765
      %v767 = vsel %vm700, %v746, 0.0
      %768 = vadd.xlane.f32.xlu0 %v767
      %v769 = vpop.xlane.xlu0 %768
      %v770 = vsel %vm700, %v748, 0.0
      %771 = vadd.xlane.f32.xlu0 %v770
      %v772 = vpop.xlane.xlu0 %771
      %v773 = vrcp.pop %v751
      %v774 = vrcp.pop %v754
      %v775 = vrcp.pop %v757
      %v776 = vrcp.pop %v760
      %v777 = vrcp.pop %v763
      %v778 = vrcp.pop %v766
      %v779 = vrcp.pop %v769
      %v780 = vrcp.pop %v772
      %v781 = vmul.f32 %v734, %v773
      %v782 = vmul.f32 %v736, %v774
      %v783 = vmul.f32 %v738, %v775
      %v784 = vmul.f32 %v740, %v776
      %v785 = vmul.f32 %v742, %v777
      %v786 = vmul.f32 %v744, %v778
      %v787 = vmul.f32 %v746, %v779
      %v788 = vmul.f32 %v748, %v780
      %v789 = vpack.c.bf16 %v781, %v781
      %v790 = vpack.c.bf16 %v782, %v782
      %v791 = vpack.c.bf16 %v783, %v783
      %v792 = vpack.c.bf16 %v784, %v784
      %v793 = vpack.c.bf16 %v785, %v785
      %v794 = vpack.c.bf16 %v786, %v786
      %v795 = vpack.c.bf16 %v787, %v787
      %v796 = vpack.c.bf16 %v788, %v788
      %v798 = vsel %vm700, %v789, 0
      %vm800 = vcmask 1043456
      %v802 = vsel %vm800, %v291, 0
      %804 = vmatprep.subr.bf16.mxu0 0
      %805 = vmatpush1.bf16.msra.mxu0 0
      %806 = vmatprep.subr.bf16.mxu0 0
      %807 = vmatpush1.bf16.msra.mxu0 0
      %808 = vmatprep.subr.bf16.mxu0 0
      %809 = vmatpush1.bf16.msra.mxu0 0
      %810 = vmatprep.subr.bf16.mxu0 0
      %811 = vmatpush1.bf16.msra.mxu0 0
      %812 = vmatprep.subr.bf16.mxu0 0
      %813 = vmatpush1.bf16.msra.mxu0 0
      %814 = vmatprep.subr.bf16.mxu0 0
      %815 = vmatpush1.bf16.msra.mxu0 0
      %816 = vmatprep.subr.bf16.mxu0 0
      %817 = vmatpush1.bf16.msra.mxu0 0
      %818 = vmatprep.subr.bf16.mxu0 0
      %819 = vmatpush1.bf16.msra.mxu0 %v802
      %820 = vmatprep.subr.bf16.mxu0 0
      %821 = vmatpush2.bf16.msra.mxu0 0
      %822 = vmatprep.subr.bf16.mxu0 0
      %823 = vmatpush2.bf16.msra.mxu0 0
      %824 = vmatprep.subr.bf16.mxu0 0
      %825 = vmatpush2.bf16.msra.mxu0 0
      %826 = vmatprep.subr.bf16.mxu0 0
      %827 = vmatpush2.bf16.msra.mxu0 0
      %828 = vmatprep.subr.bf16.mxu0 0
      %829 = vmatpush2.bf16.msra.mxu0 0
      %830 = vmatprep.subr.bf16.mxu0 0
      %831 = vmatpush2.bf16.msra.mxu0 0
      %832 = vmatprep.subr.bf16.mxu0 0
      %833 = vmatpush2.bf16.msra.mxu0 0
      %834 = vmatprep.subr.bf16.mxu0 0
      %835 = vmatpush2.bf16.msra.mxu0 0
      %836 = vmatprep.mubr.bf16.mxu0 0
      %837 = vmatmul.mubr.bf16.gmra.mxu0 %v798
      %v838 = vpop.f32.mrf.mxu0
      %v839 = vadd.f32 0.0, %v838
      %v840 = vpop.f32.mrf.mxu0
      %v841 = vpop.f32.mrf.mxu0
      %v842 = vpop.f32.mrf.mxu0
      %843 = vdwg.mxu0
      %v845 = vsel %vm700, %v790, 0
      %v848 = vsel %vm800, %v292, 0
      %850 = vmatprep.subr.bf16.mxu0 0
      %851 = vmatpush1.bf16.msra.mxu0 0
      %852 = vmatprep.subr.bf16.mxu0 0
      %853 = vmatpush1.bf16.msra.mxu0 0
      %854 = vmatprep.subr.bf16.mxu0 0
      %855 = vmatpush1.bf16.msra.mxu0 0
      %856 = vmatprep.subr.bf16.mxu0 0
      %857 = vmatpush1.bf16.msra.mxu0 0
      %858 = vmatprep.subr.bf16.mxu0 0
      %859 = vmatpush1.bf16.msra.mxu0 0
      %860 = vmatprep.subr.bf16.mxu0 0
      %861 = vmatpush1.bf16.msra.mxu0 0
      %862 = vmatprep.subr.bf16.mxu0 0
      %863 = vmatpush1.bf16.msra.mxu0 0
      %864 = vmatprep.subr.bf16.mxu0 0
      %865 = vmatpush1.bf16.msra.mxu0 %v848
      %866 = vmatprep.subr.bf16.mxu0 0
      %867 = vmatpush2.bf16.msra.mxu0 0
      %868 = vmatprep.subr.bf16.mxu0 0
      %869 = vmatpush2.bf16.msra.mxu0 0
      %870 = vmatprep.subr.bf16.mxu0 0
      %871 = vmatpush2.bf16.msra.mxu0 0
      %872 = vmatprep.subr.bf16.mxu0 0
      %873 = vmatpush2.bf16.msra.mxu0 0
      %874 = vmatprep.subr.bf16.mxu0 0
      %875 = vmatpush2.bf16.msra.mxu0 0
      %876 = vmatprep.subr.bf16.mxu0 0
      %877 = vmatpush2.bf16.msra.mxu0 0
      %878 = vmatprep.subr.bf16.mxu0 0
      %879 = vmatpush2.bf16.msra.mxu0 0
      %880 = vmatprep.subr.bf16.mxu0 0
      %881 = vmatpush2.bf16.msra.mxu0 0
      %882 = vmatprep.mubr.bf16.mxu0 0
      %883 = vmatmul.mubr.bf16.gmra.mxu0 %v845
      %v884 = vpop.f32.mrf.mxu0
      %v885 = vadd.f32 0.0, %v884
      %v886 = vpop.f32.mrf.mxu0
      %v887 = vpop.f32.mrf.mxu0
      %v888 = vpop.f32.mrf.mxu0
      %889 = vdwg.mxu0
      %v891 = vsel %vm700, %v791, 0
      %v894 = vsel %vm800, %v293, 0
      %896 = vmatprep.subr.bf16.mxu0 0
      %897 = vmatpush1.bf16.msra.mxu0 0
      %898 = vmatprep.subr.bf16.mxu0 0
      %899 = vmatpush1.bf16.msra.mxu0 0
      %900 = vmatprep.subr.bf16.mxu0 0
      %901 = vmatpush1.bf16.msra.mxu0 0
      %902 = vmatprep.subr.bf16.mxu0 0
      %903 = vmatpush1.bf16.msra.mxu0 0
      %904 = vmatprep.subr.bf16.mxu0 0
      %905 = vmatpush1.bf16.msra.mxu0 0
      %906 = vmatprep.subr.bf16.mxu0 0
      %907 = vmatpush1.bf16.msra.mxu0 0
      %908 = vmatprep.subr.bf16.mxu0 0
      %909 = vmatpush1.bf16.msra.mxu0 0
      %910 = vmatprep.subr.bf16.mxu0 0
      %911 = vmatpush1.bf16.msra.mxu0 %v894
      %912 = vmatprep.subr.bf16.mxu0 0
      %913 = vmatpush2.bf16.msra.mxu0 0
      %914 = vmatprep.subr.bf16.mxu0 0
      %915 = vmatpush2.bf16.msra.mxu0 0
      %916 = vmatprep.subr.bf16.mxu0 0
      %917 = vmatpush2.bf16.msra.mxu0 0
      %918 = vmatprep.subr.bf16.mxu0 0
      %919 = vmatpush2.bf16.msra.mxu0 0
      %920 = vmatprep.subr.bf16.mxu0 0
      %921 = vmatpush2.bf16.msra.mxu0 0
      %922 = vmatprep.subr.bf16.mxu0 0
      %923 = vmatpush2.bf16.msra.mxu0 0
      %924 = vmatprep.subr.bf16.mxu0 0
      %925 = vmatpush2.bf16.msra.mxu0 0
      %926 = vmatprep.subr.bf16.mxu0 0
      %927 = vmatpush2.bf16.msra.mxu0 0
      %928 = vmatprep.mubr.bf16.mxu0 0
      %929 = vmatmul.mubr.bf16.gmra.mxu0 %v891
      %v930 = vpop.f32.mrf.mxu0
      %v931 = vadd.f32 0.0, %v930
      %v932 = vpop.f32.mrf.mxu0
      %v933 = vpop.f32.mrf.mxu0
      %v934 = vpop.f32.mrf.mxu0
      %935 = vdwg.mxu0
      %v937 = vsel %vm700, %v792, 0
      %v940 = vsel %vm800, %v294, 0
      %942 = vmatprep.subr.bf16.mxu0 0
      %943 = vmatpush1.bf16.msra.mxu0 0
      %944 = vmatprep.subr.bf16.mxu0 0
      %945 = vmatpush1.bf16.msra.mxu0 0
      %946 = vmatprep.subr.bf16.mxu0 0
      %947 = vmatpush1.bf16.msra.mxu0 0
      %948 = vmatprep.subr.bf16.mxu0 0
      %949 = vmatpush1.bf16.msra.mxu0 0
      %950 = vmatprep.subr.bf16.mxu0 0
      %951 = vmatpush1.bf16.msra.mxu0 0
      %952 = vmatprep.subr.bf16.mxu0 0
      %953 = vmatpush1.bf16.msra.mxu0 0
      %954 = vmatprep.subr.bf16.mxu0 0
      %955 = vmatpush1.bf16.msra.mxu0 0
      %956 = vmatprep.subr.bf16.mxu0 0
      %957 = vmatpush1.bf16.msra.mxu0 %v940
      %958 = vmatprep.subr.bf16.mxu0 0
      %959 = vmatpush2.bf16.msra.mxu0 0
      %960 = vmatprep.subr.bf16.mxu0 0
      %961 = vmatpush2.bf16.msra.mxu0 0
      %962 = vmatprep.subr.bf16.mxu0 0
      %963 = vmatpush2.bf16.msra.mxu0 0
      %964 = vmatprep.subr.bf16.mxu0 0
      %965 = vmatpush2.bf16.msra.mxu0 0
      %966 = vmatprep.subr.bf16.mxu0 0
      %967 = vmatpush2.bf16.msra.mxu0 0
      %968 = vmatprep.subr.bf16.mxu0 0
      %969 = vmatpush2.bf16.msra.mxu0 0
      %970 = vmatprep.subr.bf16.mxu0 0
      %971 = vmatpush2.bf16.msra.mxu0 0
      %972 = vmatprep.subr.bf16.mxu0 0
      %973 = vmatpush2.bf16.msra.mxu0 0
      %974 = vmatprep.mubr.bf16.mxu0 0
      %975 = vmatmul.mubr.bf16.gmra.mxu0 %v937
      %v976 = vpop.f32.mrf.mxu0
      %v977 = vadd.f32 0.0, %v976
      %v978 = vpop.f32.mrf.mxu0
      %v979 = vpop.f32.mrf.mxu0
      %v980 = vpop.f32.mrf.mxu0
      %981 = vdwg.mxu0
      %v983 = vsel %vm700, %v793, 0
      %v986 = vsel %vm800, %v295, 0
      %988 = vmatprep.subr.bf16.mxu0 0
      %989 = vmatpush1.bf16.msra.mxu0 0
      %990 = vmatprep.subr.bf16.mxu0 0
      %991 = vmatpush1.bf16.msra.mxu0 0
      %992 = vmatprep.subr.bf16.mxu0 0
      %993 = vmatpush1.bf16.msra.mxu0 0
      %994 = vmatprep.subr.bf16.mxu0 0
      %995 = vmatpush1.bf16.msra.mxu0 0
      %996 = vmatprep.subr.bf16.mxu0 0
      %997 = vmatpush1.bf16.msra.mxu0 0
      %998 = vmatprep.subr.bf16.mxu0 0
      %999 = vmatpush1.bf16.msra.mxu0 0
      %1000 = vmatprep.subr.bf16.mxu0 0
      %1001 = vmatpush1.bf16.msra.mxu0 0
      %1002 = vmatprep.subr.bf16.mxu0 0
      %1003 = vmatpush1.bf16.msra.mxu0 %v986
      %1004 = vmatprep.subr.bf16.mxu0 0
      %1005 = vmatpush2.bf16.msra.mxu0 0
      %1006 = vmatprep.subr.bf16.mxu0 0
      %1007 = vmatpush2.bf16.msra.mxu0 0
      %1008 = vmatprep.subr.bf16.mxu0 0
      %1009 = vmatpush2.bf16.msra.mxu0 0
      %1010 = vmatprep.subr.bf16.mxu0 0
      %1011 = vmatpush2.bf16.msra.mxu0 0
      %1012 = vmatprep.subr.bf16.mxu0 0
      %1013 = vmatpush2.bf16.msra.mxu0 0
      %1014 = vmatprep.subr.bf16.mxu0 0
      %1015 = vmatpush2.bf16.msra.mxu0 0
      %1016 = vmatprep.subr.bf16.mxu0 0
      %1017 = vmatpush2.bf16.msra.mxu0 0
      %1018 = vmatprep.subr.bf16.mxu0 0
      %1019 = vmatpush2.bf16.msra.mxu0 0
      %1020 = vmatprep.mubr.bf16.mxu0 0
      %1021 = vmatmul.mubr.bf16.gmra.mxu0 %v983
      %v1022 = vpop.f32.mrf.mxu0
      %v1023 = vadd.f32 0.0, %v1022
      %v1024 = vpop.f32.mrf.mxu0
      %v1025 = vpop.f32.mrf.mxu0
      %v1026 = vpop.f32.mrf.mxu0
      %1027 = vdwg.mxu0
      %v1029 = vsel %vm700, %v794, 0
      %v1032 = vsel %vm800, %v296, 0
      %1034 = vmatprep.subr.bf16.mxu0 0
      %1035 = vmatpush1.bf16.msra.mxu0 0
      %1036 = vmatprep.subr.bf16.mxu0 0
      %1037 = vmatpush1.bf16.msra.mxu0 0
      %1038 = vmatprep.subr.bf16.mxu0 0
      %1039 = vmatpush1.bf16.msra.mxu0 0
      %1040 = vmatprep.subr.bf16.mxu0 0
      %1041 = vmatpush1.bf16.msra.mxu0 0
      %1042 = vmatprep.subr.bf16.mxu0 0
      %1043 = vmatpush1.bf16.msra.mxu0 0
      %1044 = vmatprep.subr.bf16.mxu0 0
      %1045 = vmatpush1.bf16.msra.mxu0 0
      %1046 = vmatprep.subr.bf16.mxu0 0
      %1047 = vmatpush1.bf16.msra.mxu0 0
      %1048 = vmatprep.subr.bf16.mxu0 0
      %1049 = vmatpush1.bf16.msra.mxu0 %v1032
      %1050 = vmatprep.subr.bf16.mxu0 0
      %1051 = vmatpush2.bf16.msra.mxu0 0
      %1052 = vmatprep.subr.bf16.mxu0 0
      %1053 = vmatpush2.bf16.msra.mxu0 0
      %1054 = vmatprep.subr.bf16.mxu0 0
      %1055 = vmatpush2.bf16.msra.mxu0 0
      %1056 = vmatprep.subr.bf16.mxu0 0
      %1057 = vmatpush2.bf16.msra.mxu0 0
      %1058 = vmatprep.subr.bf16.mxu0 0
      %1059 = vmatpush2.bf16.msra.mxu0 0
      %1060 = vmatprep.subr.bf16.mxu0 0
      %1061 = vmatpush2.bf16.msra.mxu0 0
      %1062 = vmatprep.subr.bf16.mxu0 0
      %1063 = vmatpush2.bf16.msra.mxu0 0
      %1064 = vmatprep.subr.bf16.mxu0 0
      %1065 = vmatpush2.bf16.msra.mxu0 0
      %1066 = vmatprep.mubr.bf16.mxu0 0
      %1067 = vmatmul.mubr.bf16.gmra.mxu0 %v1029
      %v1068 = vpop.f32.mrf.mxu0
      %v1069 = vadd.f32 0.0, %v1068
      %v1070 = vpop.f32.mrf.mxu0
      %v1071 = vpop.f32.mrf.mxu0
      %v1072 = vpop.f32.mrf.mxu0
      %1073 = vdwg.mxu0
      %v1075 = vsel %vm700, %v795, 0
      %v1078 = vsel %vm800, %v297, 0
      %1080 = vmatprep.subr.bf16.mxu0 0
      %1081 = vmatpush1.bf16.msra.mxu0 0
      %1082 = vmatprep.subr.bf16.mxu0 0
      %1083 = vmatpush1.bf16.msra.mxu0 0
      %1084 = vmatprep.subr.bf16.mxu0 0
      %1085 = vmatpush1.bf16.msra.mxu0 0
      %1086 = vmatprep.subr.bf16.mxu0 0
      %1087 = vmatpush1.bf16.msra.mxu0 0
      %1088 = vmatprep.subr.bf16.mxu0 0
      %1089 = vmatpush1.bf16.msra.mxu0 0
      %1090 = vmatprep.subr.bf16.mxu0 0
      %1091 = vmatpush1.bf16.msra.mxu0 0
      %1092 = vmatprep.subr.bf16.mxu0 0
      %1093 = vmatpush1.bf16.msra.mxu0 0
      %1094 = vmatprep.subr.bf16.mxu0 0
      %1095 = vmatpush1.bf16.msra.mxu0 %v1078
      %1096 = vmatprep.subr.bf16.mxu0 0
      %1097 = vmatpush2.bf16.msra.mxu0 0
      %1098 = vmatprep.subr.bf16.mxu0 0
      %1099 = vmatpush2.bf16.msra.mxu0 0
      %1100 = vmatprep.subr.bf16.mxu0 0
      %1101 = vmatpush2.bf16.msra.mxu0 0
      %1102 = vmatprep.subr.bf16.mxu0 0
      %1103 = vmatpush2.bf16.msra.mxu0 0
      %1104 = vmatprep.subr.bf16.mxu0 0
      %1105 = vmatpush2.bf16.msra.mxu0 0
      %1106 = vmatprep.subr.bf16.mxu0 0
      %1107 = vmatpush2.bf16.msra.mxu0 0
      %1108 = vmatprep.subr.bf16.mxu0 0
      %1109 = vmatpush2.bf16.msra.mxu0 0
      %1110 = vmatprep.subr.bf16.mxu0 0
      %1111 = vmatpush2.bf16.msra.mxu0 0
      %1112 = vmatprep.mubr.bf16.mxu0 0
      %1113 = vmatmul.mubr.bf16.gmra.mxu0 %v1075
      %v1114 = vpop.f32.mrf.mxu0
      %v1115 = vadd.f32 0.0, %v1114
      %v1116 = vpop.f32.mrf.mxu0
      %v1117 = vpop.f32.mrf.mxu0
      %v1118 = vpop.f32.mrf.mxu0
      %1119 = vdwg.mxu0
      %v1121 = vsel %vm700, %v796, 0
      %v1124 = vsel %vm800, %v298, 0
      %1126 = vmatprep.subr.bf16.mxu0 0
      %1127 = vmatpush1.bf16.msra.mxu0 0
      %1128 = vmatprep.subr.bf16.mxu0 0
      %1129 = vmatpush1.bf16.msra.mxu0 0
      %1130 = vmatprep.subr.bf16.mxu0 0
      %1131 = vmatpush1.bf16.msra.mxu0 0
      %1132 = vmatprep.subr.bf16.mxu0 0
      %1133 = vmatpush1.bf16.msra.mxu0 0
      %1134 = vmatprep.subr.bf16.mxu0 0
      %1135 = vmatpush1.bf16.msra.mxu0 0
      %1136 = vmatprep.subr.bf16.mxu0 0
      %1137 = vmatpush1.bf16.msra.mxu0 0
      %1138 = vmatprep.subr.bf16.mxu0 0
      %1139 = vmatpush1.bf16.msra.mxu0 0
      %1140 = vmatprep.subr.bf16.mxu0 0
      %1141 = vmatpush1.bf16.msra.mxu0 %v1124
      %1142 = vmatprep.subr.bf16.mxu0 0
      %1143 = vmatpush2.bf16.msra.mxu0 0
      %1144 = vmatprep.subr.bf16.mxu0 0
      %1145 = vmatpush2.bf16.msra.mxu0 0
      %1146 = vmatprep.subr.bf16.mxu0 0
      %1147 = vmatpush2.bf16.msra.mxu0 0
      %1148 = vmatprep.subr.bf16.mxu0 0
      %1149 = vmatpush2.bf16.msra.mxu0 0
      %1150 = vmatprep.subr.bf16.mxu0 0
      %1151 = vmatpush2.bf16.msra.mxu0 0
      %1152 = vmatprep.subr.bf16.mxu0 0
      %1153 = vmatpush2.bf16.msra.mxu0 0
      %1154 = vmatprep.subr.bf16.mxu0 0
      %1155 = vmatpush2.bf16.msra.mxu0 0
      %1156 = vmatprep.subr.bf16.mxu0 0
      %1157 = vmatpush2.bf16.msra.mxu0 0
      %1158 = vmatprep.mubr.bf16.mxu0 0
      %1159 = vmatmul.mubr.bf16.gmra.mxu0 %v1121
      %v1160 = vpop.f32.mrf.mxu0
      %v1161 = vadd.f32 0.0, %v1160
      %v1162 = vpop.f32.mrf.mxu0
      %v1163 = vpop.f32.mrf.mxu0
      %v1164 = vpop.f32.mrf.mxu0
      %1165 = vdwg.mxu0
      %1167 = vrot.lane.b32.xlu0 %v885, 16
      %v1168 = vpop.permute.xlu0 %1167
      %1171 = vrot.lane.b32.xlu0 %v931, 32
      %v1172 = vpop.permute.xlu0 %1171
      %1175 = vrot.lane.b32.xlu0 %v977, 48
      %v1176 = vpop.permute.xlu0 %1175
      %1179 = vrot.lane.b32.xlu0 %v1023, 64
      %v1180 = vpop.permute.xlu0 %1179
      %1183 = vrot.lane.b32.xlu0 %v1069, 80
      %v1184 = vpop.permute.xlu0 %1183
      %1187 = vrot.lane.b32.xlu0 %v1115, 96
      %v1188 = vpop.permute.xlu0 %1187
      %1191 = vrot.lane.b32.xlu0 %v1161, 112
      %v1192 = vpop.permute.xlu0 %1191
      %v1194 = vsel %vm299, %v839, %v1168
      %vm1195 = vcmask 261120
      %v1196 = vsel %vm1195, %v1194, %v1172
      %vm1197 = vcmask 392192
      %v1198 = vsel %vm1197, %v1196, %v1176
      %vm1199 = vcmask 523264
      %v1200 = vsel %vm1199, %v1198, %v1180
      %vm1201 = vcmask 654336
      %v1202 = vsel %vm1201, %v1200, %v1184
      %vm1203 = vcmask 785408
      %v1204 = vsel %vm1203, %v1202, %v1188
      %vm1205 = vcmask 916480
      %v1206 = vsel %vm1205, %v1204, %v1192
      %1207 = vst [vmem:[%s249] sm:$0xff] %v1206
      %p1208 = scmp.lt.s32.totalorder %s15, 1
      %s1209 = scalar_select %p1208, %s15, 1
      %s1210 = smul.addr %s1209, 8
      %s1211 = scalar_lea.vmem %s4, %s1210
      // Predicated region
      $region37: #{transformer_forward.32} parent=35 // pred_check
        %p1212 = pneg %p137
      $region38: #{transformer_forward.32} parent=35 // pred_check_branch
        %1214 = sbr.rel (%p1212) target = $region40
      $region39: #{transformer_forward.32} parent=35 // pred_region
        _
      $region40: #{transformer_forward.32} parent=35 // pred_fallthru
        _
    $region36: #{transformer_forward.32} parent=5 // pred_fallthru
      _
    %p1215 = scmp.le.s32.totalorder 2, %s10
    // Predicated region
    $region41: #{transformer_forward.32} parent=5 // pred_check
      %p1216 = pneg %p1215
    $region42: #{transformer_forward.32} parent=5 // pred_check_branch
      %1218 = sbr.rel (%p1216) target = $region44
    $region43: #{transformer_forward.32} parent=5 // pred_region
      %s1219 = ssub.s32 %s10, 2
      // Predicated region
      $region45: #{transformer_forward.32} parent=43 // pred_check
        %p1220 = pneg %p143
      $region46: #{transformer_forward.32} parent=43 // pred_check_branch
        %1222 = sbr.rel (%p1220) target = $region48
      $region47: #{transformer_forward.32} parent=43 // pred_region
        %p1223 = scmp.lt.s32.totalorder %s16, 1
        %s1224 = scalar_select %p1223, %s16, 1
        %s1225 = smul.addr %s1224, 8
        %s1226 = scalar_lea.vmem %s4, %s1225
      $region48: #{transformer_forward.32} parent=43 // pred_fallthru
        _
    $region44: #{transformer_forward.32} parent=5 // pred_fallthru
      _
  $region6: #{transformer_forward.32} parent=0 // loop_footer
    %s14 = sadd.s32 1, %s10
  $region7: #{transformer_forward.32} parent=0 // loop_footer_branch
    %9 = sbr.rel target = $region3
  $region8: #{transformer_forward.32} parent=0 // loop_exit
    _

</llo_original>
